<compile_context>
chip_gen: v7x
topology: tpu7x:2x2x1
jax: 0.10.0
libtpu: 0.0.40
codegen_flags: <defaults>
</compile_context>

<pallas_src>
import functools
import math

import jax
import jax.numpy as jnp
from jax.experimental import pallas as pl
from jax.experimental.pallas import tpu as pltpu


def _layer_norm(x, gamma, beta, eps=1e-5):
    mu = jnp.mean(x, axis=-1, keepdims=True)
    xc = x - mu
    var = jnp.mean(xc * xc, axis=-1, keepdims=True)
    return xc * jax.lax.rsqrt(var + eps) * gamma + beta


def _transformer_stack_kernel(
    x_ref, pe_ref, bias_ref,
    wq_ref, bq_ref, wk_ref, bk_ref, wv_ref, bv_ref,
    wo_ref, bo_ref, w1_ref, b1_ref, w2_ref, b2_ref,
    g1_ref, be1_ref, g2_ref, be2_ref,
    o_ref, *, num_layers, nhead, batch, seq_len):
    """Whole batch + full layer stack fused; all operands resident in VMEM."""
    B, L = batch, seq_len
    BL, D = x_ref.shape                      # [B*L, D] rows ordered (batch, time)
    hd = D // nhead
    scale = 1.0 / math.sqrt(hd)

    def stack_heads(t):
        # [B*L, D] -> [nhead*B*L, hd], rows ordered (head, batch, time).
        return jnp.concatenate([t[:, h * hd:(h + 1) * hd] for h in range(nhead)],
                               axis=0)

    # Positional encoding (dropout = identity in eval mode).
    x = x_ref[...].astype(jnp.float32) + pe_ref[...]

    attn_bias = bias_ref[...]                # [nhead*B*L, nhead*B*L], 0 / -1e30

    for l in range(num_layers):              # static unroll
        # ---------------- multi-head self-attention (head-stacked MXU form) ----------------
        q = (jnp.dot(x, wq_ref[l], preferred_element_type=jnp.float32) + bq_ref[l]) * scale
        k = jnp.dot(x, wk_ref[l], preferred_element_type=jnp.float32) + bk_ref[l]
        v = jnp.dot(x, wv_ref[l], preferred_element_type=jnp.float32) + bv_ref[l]
        qs, ks, vs = stack_heads(q), stack_heads(k), stack_heads(v)   # [S, hd]

        s = jax.lax.dot_general(qs, ks, (((1,), (1,)), ((), ())),
                                preferred_element_type=jnp.float32)   # [S, S]
        s = s + attn_bias                                             # mask before softmax
        s = s - jnp.max(s, axis=-1, keepdims=True)
        p = jnp.exp(s)
        p = p * pl.reciprocal(jnp.sum(p, axis=-1, keepdims=True), approx=True)
        o = jnp.dot(p, vs, preferred_element_type=jnp.float32)        # [S, hd]

        # Un-stack heads back to [B*L, D] (stays in registers; no VMEM scratch).
        attn = jnp.concatenate([o[h * BL:(h + 1) * BL, :] for h in range(nhead)],
                               axis=1)
        sa = jnp.dot(attn, wo_ref[l], preferred_element_type=jnp.float32) + bo_ref[l]
        x = _layer_norm(x + sa, g1_ref[l], be1_ref[l])

        # ---------------- position-wise feed forward ----------------
        h1 = jnp.dot(x, w1_ref[l], preferred_element_type=jnp.float32) + b1_ref[l]
        h1 = jnp.maximum(h1, 0.0)                                     # relu
        ff = jnp.dot(h1, w2_ref[l], preferred_element_type=jnp.float32) + b2_ref[l]
        x = _layer_norm(x + ff, g2_ref[l], be2_ref[l])

    # Lane-dense output slab: out[l, b*D + d] = x[b*L + l, d]  -> [L, B*D] (128 lanes).
    o_ref[...] = jnp.concatenate([x[b * L:(b + 1) * L, :] for b in range(B)],
                                 axis=1).astype(o_ref.dtype)


def _sinusoidal_pe(length, d_model):
    pos = jnp.arange(length, dtype=jnp.float32)[:, None]
    div = jnp.exp(jnp.arange(0, d_model, 2, dtype=jnp.float32)
                  * (-math.log(10000.0) / d_model))
    ang = pos * div[None, :]
    pe = jnp.zeros((length, d_model), jnp.float32)
    pe = pe.at[:, 0::2].set(jnp.sin(ang))
    pe = pe.at[:, 1::2].set(jnp.cos(ang))
    return pe


def pytorch_transformer_block_forward(x, params, *, nhead):
    """x: [L, B, D] (time, batch, d_model).  Returns [L, B, D]."""
    L, B, D = x.shape
    num_layers = params["wq"].shape[0]
    F = params["w1"].shape[2]
    hd = D // nhead
    BL, S = B * L, nhead * B * L

    pe = _sinusoidal_pe(L, D)                                  # [L, D]
    pe_full = jnp.tile(pe, (B, 1))                             # [B*L, D], rows (b, l)
    x_flat = jnp.transpose(x, (1, 0, 2)).reshape(BL, D)        # [B*L, D] glue (tiny)

    # Block-diagonal additive attention bias over (head, batch) groups of length L.
    blk = jnp.arange(S, dtype=jnp.int32) // L
    attn_bias = jnp.where(blk[:, None] == blk[None, :], 0.0, -1e30).astype(jnp.float32)

    kernel = functools.partial(_transformer_stack_kernel,
                               num_layers=num_layers, nhead=nhead,
                               batch=B, seq_len=L)

    operands = (x_flat, pe_full, attn_bias,
                params["wq"], params["bq"], params["wk"], params["bk"],
                params["wv"], params["bv"], params["wo"], params["bo"],
                params["w1"], params["b1"], params["w2"], params["b2"],
                params["g1"], params["be1"], params["g2"], params["be2"])

    def full(arr):
        nd = arr.ndim
        return pl.BlockSpec(arr.shape, lambda i, _z=(0,) * nd: _z)

    in_specs = [full(a) for a in operands]

    flops = num_layers * (
        2 * BL * D * (3 * D)         # q/k/v projections
        + 2 * S * S * hd             # scores
        + 2 * S * S * hd             # p @ v
        + 2 * BL * D * D             # output projection
        + 4 * BL * D * F)            # two FFN matmuls
    cost = pl.CostEstimate(
        flops=int(flops),
        transcendentals=int(num_layers * (S * S + S + 4 * BL)),
        bytes_accessed=int(sum(int(a.size) * a.dtype.itemsize for a in operands)
                           + L * B * D * x.dtype.itemsize))

    out = pl.pallas_call(
        kernel,
        out_shape=jax.ShapeDtypeStruct((L, B * D), x.dtype),
        grid=(1,),
        in_specs=in_specs,
        out_specs=pl.BlockSpec((L, B * D), lambda i: (0, 0)),
        compiler_params=pltpu.CompilerParams(dimension_semantics=("arbitrary",)),
        cost_estimate=cost,
    )(*operands)

    return out.reshape(L, B, D)                # metadata-only reshape back to [L, B, D]


def _reference_forward(x, params, *, nhead):
    """Pure-JAX reference of the same eval-mode forward pass."""
    P = jax.lax.Precision.HIGHEST
    L, B, D = x.shape
    hd = D // nhead
    num_layers = params["wq"].shape[0]
    pe = _sinusoidal_pe(L, D)
    y = jnp.transpose(x + pe[:, None, :], (1, 0, 2))            # [B, L, D]
    for l in range(num_layers):
        q = jnp.einsum("bld,de->ble", y, params["wq"][l], precision=P) + params["bq"][l]
        k = jnp.einsum("bld,de->ble", y, params["wk"][l], precision=P) + params["bk"][l]
        v = jnp.einsum("bld,de->ble", y, params["wv"][l], precision=P) + params["bv"][l]
        q = q.reshape(B, L, nhead, hd)
        k = k.reshape(B, L, nhead, hd)
        v = v.reshape(B, L, nhead, hd)
        s = jnp.einsum("blhd,bmhd->bhlm", q, k, precision=P) / math.sqrt(hd)
        p = jax.nn.softmax(s, axis=-1)
        a = jnp.einsum("bhlm,bmhd->blhd", p, v, precision=P).reshape(B, L, D)
        sa = jnp.einsum("bld,de->ble", a, params["wo"][l], precision=P) + params["bo"][l]
        y = _layer_norm(y + sa, params["g1"][l], params["be1"][l])
        hdn = jnp.maximum(
            jnp.einsum("bld,df->blf", y, params["w1"][l], precision=P) + params["b1"][l], 0.0)
        ff = jnp.einsum("blf,fd->bld", hdn, params["w2"][l], precision=P) + params["b2"][l]
        y = _layer_norm(y + ff, params["g2"][l], params["be2"][l])
    return jnp.transpose(y, (1, 0, 2))


if __name__ == "__main__":
    # Small shapes consistent with the module's forward: x is [L, B, D].
    L, B, D = 16, 2, 64           # seq=16, batch=2, d_model=64
    nhead = 8                     # head_dim = 8
    d_ffn = 128                   # small d_ffn (module default 2048)
    num_layers = 2                # small depth (module default 6)

    key = jax.random.PRNGKey(0)
    ks = jax.random.split(key, 17)

    def u(k, shape, bound):
        return jax.random.uniform(k, shape, minval=-bound, maxval=bound, dtype=jnp.float32)

    sd = 1.0 / math.sqrt(D)
    sf = 1.0 / math.sqrt(d_ffn)
    # Weights correspond to the PyTorch layer parameters, stored pre-transposed
    # ([in, out] instead of PyTorch's [out, in]), stacked over layers, with the
    # in_proj weight/bias pre-split into q/k/v chunks.
    params = {
        "wq":  u(ks[0],  (num_layers, D, D), sd),
        "wk":  u(ks[1],  (num_layers, D, D), sd),
        "wv":  u(ks[2],  (num_layers, D, D), sd),
        "bq":  u(ks[3],  (num_layers, 1, D), 0.02),
        "bk":  u(ks[4],  (num_layers, 1, D), 0.02),
        "bv":  u(ks[5],  (num_layers, 1, D), 0.02),
        "wo":  u(ks[6],  (num_layers, D, D), sd),
        "bo":  u(ks[7],  (num_layers, 1, D), 0.02),
        "w1":  u(ks[8],  (num_layers, D, d_ffn), sd),
        "b1":  u(ks[9],  (num_layers, 1, d_ffn), 0.02),
        "w2":  u(ks[10], (num_layers, d_ffn, D), sf),
        "b2":  u(ks[11], (num_layers, 1, D), 0.02),
        "g1":  1.0 + 0.1 * jax.random.normal(ks[12], (num_layers, 1, D), jnp.float32),
        "be1": 0.1 * jax.random.normal(ks[13], (num_layers, 1, D), jnp.float32),
        "g2":  1.0 + 0.1 * jax.random.normal(ks[14], (num_layers, 1, D), jnp.float32),
        "be2": 0.1 * jax.random.normal(ks[15], (num_layers, 1, D), jnp.float32),
    }
    x = jax.random.normal(ks[16], (L, B, D), dtype=jnp.float32)

    y = pytorch_transformer_block_forward(x, params, nhead=nhead)
    y = jax.block_until_ready(y)
    assert y.shape == (L, B, D), y.shape
    assert bool(jnp.all(jnp.isfinite(y)))

    ref = _reference_forward(x, params, nhead=nhead)
    err = float(jnp.max(jnp.abs(y - ref)))
    assert bool(jnp.allclose(y, ref, atol=2e-2, rtol=2e-2)), err

    print("KERNEL_OK")
</pallas_src>

<mosaic_0001>
module attributes {stable_mosaic.version = 11 : i64} {
  func.func @_transformer_stack_kernel(%arg0: i32, %arg1: memref<32x64xf32, #tpu.memory_space<vmem>>, %arg2: memref<32x64xf32, #tpu.memory_space<vmem>>, %arg3: memref<256x256xf32, #tpu.memory_space<vmem>>, %arg4: memref<2x64x64xf32, #tpu.memory_space<vmem>>, %arg5: memref<2x1x64xf32, #tpu.memory_space<vmem>>, %arg6: memref<2x64x64xf32, #tpu.memory_space<vmem>>, %arg7: memref<2x1x64xf32, #tpu.memory_space<vmem>>, %arg8: memref<2x64x64xf32, #tpu.memory_space<vmem>>, %arg9: memref<2x1x64xf32, #tpu.memory_space<vmem>>, %arg10: memref<2x64x64xf32, #tpu.memory_space<vmem>>, %arg11: memref<2x1x64xf32, #tpu.memory_space<vmem>>, %arg12: memref<2x64x128xf32, #tpu.memory_space<vmem>>, %arg13: memref<2x1x128xf32, #tpu.memory_space<vmem>>, %arg14: memref<2x128x64xf32, #tpu.memory_space<vmem>>, %arg15: memref<2x1x64xf32, #tpu.memory_space<vmem>>, %arg16: memref<2x1x64xf32, #tpu.memory_space<vmem>>, %arg17: memref<2x1x64xf32, #tpu.memory_space<vmem>>, %arg18: memref<2x1x64xf32, #tpu.memory_space<vmem>>, %arg19: memref<2x1x64xf32, #tpu.memory_space<vmem>>, %arg20: memref<16x128xf32, #tpu.memory_space<vmem>>) attributes {dimension_semantics = [#tpu.dimension_semantics<arbitrary>], iteration_bounds = array<i64: 1>, scalar_prefetch = 0 : i64, scratch_operands = 0 : i64, tpu.core_type = #tpu.core_type<tc>, window_params = [{pipeline_mode = #tpu.pipeline_mode<synchronous>, transform_indices = @transform_0, window_bounds = array<i64: 32, 64>}, {pipeline_mode = #tpu.pipeline_mode<synchronous>, transform_indices = @transform_1, window_bounds = array<i64: 32, 64>}, {pipeline_mode = #tpu.pipeline_mode<synchronous>, transform_indices = @transform_2, window_bounds = array<i64: 256, 256>}, {pipeline_mode = #tpu.pipeline_mode<synchronous>, transform_indices = @transform_3, window_bounds = array<i64: 2, 64, 64>}, {pipeline_mode = #tpu.pipeline_mode<synchronous>, transform_indices = @transform_4, window_bounds = array<i64: 2, 1, 64>}, {pipeline_mode = #tpu.pipeline_mode<synchronous>, transform_indices = @transform_5, window_bounds = array<i64: 2, 64, 64>}, {pipeline_mode = #tpu.pipeline_mode<synchronous>, transform_indices = @transform_6, window_bounds = array<i64: 2, 1, 64>}, {pipeline_mode = #tpu.pipeline_mode<synchronous>, transform_indices = @transform_7, window_bounds = array<i64: 2, 64, 64>}, {pipeline_mode = #tpu.pipeline_mode<synchronous>, transform_indices = @transform_8, window_bounds = array<i64: 2, 1, 64>}, {pipeline_mode = #tpu.pipeline_mode<synchronous>, transform_indices = @transform_9, window_bounds = array<i64: 2, 64, 64>}, {pipeline_mode = #tpu.pipeline_mode<synchronous>, transform_indices = @transform_10, window_bounds = array<i64: 2, 1, 64>}, {pipeline_mode = #tpu.pipeline_mode<synchronous>, transform_indices = @transform_11, window_bounds = array<i64: 2, 64, 128>}, {pipeline_mode = #tpu.pipeline_mode<synchronous>, transform_indices = @transform_12, window_bounds = array<i64: 2, 1, 128>}, {pipeline_mode = #tpu.pipeline_mode<synchronous>, transform_indices = @transform_13, window_bounds = array<i64: 2, 128, 64>}, {pipeline_mode = #tpu.pipeline_mode<synchronous>, transform_indices = @transform_14, window_bounds = array<i64: 2, 1, 64>}, {pipeline_mode = #tpu.pipeline_mode<synchronous>, transform_indices = @transform_15, window_bounds = array<i64: 2, 1, 64>}, {pipeline_mode = #tpu.pipeline_mode<synchronous>, transform_indices = @transform_16, window_bounds = array<i64: 2, 1, 64>}, {pipeline_mode = #tpu.pipeline_mode<synchronous>, transform_indices = @transform_17, window_bounds = array<i64: 2, 1, 64>}, {pipeline_mode = #tpu.pipeline_mode<synchronous>, transform_indices = @transform_18, window_bounds = array<i64: 2, 1, 64>}, {pipeline_mode = #tpu.pipeline_mode<synchronous>, transform_indices = @transform_19, window_bounds = array<i64: 16, 128>}]} {
    %c0 = arith.constant 0 : index
    %c0_0 = arith.constant 0 : index
    %0 = vector.load %arg1[%c0, %c0_0] : memref<32x64xf32, #tpu.memory_space<vmem>>, vector<32x64xf32>
    %c0_1 = arith.constant 0 : index
    %c0_2 = arith.constant 0 : index
    %1 = vector.load %arg2[%c0_1, %c0_2] : memref<32x64xf32, #tpu.memory_space<vmem>>, vector<32x64xf32>
    %2 = arith.addf %0, %1 : vector<32x64xf32>
    %c0_3 = arith.constant 0 : index
    %c0_4 = arith.constant 0 : index
    %3 = vector.load %arg3[%c0_3, %c0_4] : memref<256x256xf32, #tpu.memory_space<vmem>>, vector<256x256xf32>
    %c0_5 = arith.constant 0 : index
    %c0_6 = arith.constant 0 : index
    %c0_7 = arith.constant 0 : index
    %4 = vector.load %arg4[%c0_5, %c0_6, %c0_7] : memref<2x64x64xf32, #tpu.memory_space<vmem>>, vector<1x64x64xf32>
    %5 = vector.shape_cast %4 : vector<1x64x64xf32> to vector<64x64xf32>
    %cst = arith.constant dense<0.000000e+00> : vector<32x64xf32>
    %6 = tpu.matmul %2, %5, %cst {dimension_numbers = #tpu.dot_dimension_numbers<[1], [0], [0], [1], [0, 0, 1, 1], [], []>} : vector<32x64xf32>, vector<64x64xf32>, vector<32x64xf32> -> vector<32x64xf32>
    %c0_8 = arith.constant 0 : index
    %c0_9 = arith.constant 0 : index
    %c0_10 = arith.constant 0 : index
    %7 = vector.load %arg5[%c0_8, %c0_9, %c0_10] : memref<2x1x64xf32, #tpu.memory_space<vmem>>, vector<1x1x64xf32>
    %8 = vector.shape_cast %7 : vector<1x1x64xf32> to vector<1x64xf32>
    %9 = vector.broadcast %8 : vector<1x64xf32> to vector<32x64xf32>
    %10 = arith.addf %6, %9 : vector<32x64xf32>
    %cst_11 = arith.constant 0.353553385 : f32
    %11 = vector.broadcast %cst_11 : f32 to vector<32x64xf32>
    %12 = arith.mulf %10, %11 : vector<32x64xf32>
    %c0_12 = arith.constant 0 : index
    %c0_13 = arith.constant 0 : index
    %c0_14 = arith.constant 0 : index
    %13 = vector.load %arg6[%c0_12, %c0_13, %c0_14] : memref<2x64x64xf32, #tpu.memory_space<vmem>>, vector<1x64x64xf32>
    %14 = vector.shape_cast %13 : vector<1x64x64xf32> to vector<64x64xf32>
    %cst_15 = arith.constant dense<0.000000e+00> : vector<32x64xf32>
    %15 = tpu.matmul %2, %14, %cst_15 {dimension_numbers = #tpu.dot_dimension_numbers<[1], [0], [0], [1], [0, 0, 1, 1], [], []>} : vector<32x64xf32>, vector<64x64xf32>, vector<32x64xf32> -> vector<32x64xf32>
    %c0_16 = arith.constant 0 : index
    %c0_17 = arith.constant 0 : index
    %c0_18 = arith.constant 0 : index
    %16 = vector.load %arg7[%c0_16, %c0_17, %c0_18] : memref<2x1x64xf32, #tpu.memory_space<vmem>>, vector<1x1x64xf32>
    %17 = vector.shape_cast %16 : vector<1x1x64xf32> to vector<1x64xf32>
    %18 = vector.broadcast %17 : vector<1x64xf32> to vector<32x64xf32>
    %19 = arith.addf %15, %18 : vector<32x64xf32>
    %c0_19 = arith.constant 0 : index
    %c0_20 = arith.constant 0 : index
    %c0_21 = arith.constant 0 : index
    %20 = vector.load %arg8[%c0_19, %c0_20, %c0_21] : memref<2x64x64xf32, #tpu.memory_space<vmem>>, vector<1x64x64xf32>
    %21 = vector.shape_cast %20 : vector<1x64x64xf32> to vector<64x64xf32>
    %cst_22 = arith.constant dense<0.000000e+00> : vector<32x64xf32>
    %22 = tpu.matmul %2, %21, %cst_22 {dimension_numbers = #tpu.dot_dimension_numbers<[1], [0], [0], [1], [0, 0, 1, 1], [], []>} : vector<32x64xf32>, vector<64x64xf32>, vector<32x64xf32> -> vector<32x64xf32>
    %c0_23 = arith.constant 0 : index
    %c0_24 = arith.constant 0 : index
    %c0_25 = arith.constant 0 : index
    %23 = vector.load %arg9[%c0_23, %c0_24, %c0_25] : memref<2x1x64xf32, #tpu.memory_space<vmem>>, vector<1x1x64xf32>
    %24 = vector.shape_cast %23 : vector<1x1x64xf32> to vector<1x64xf32>
    %25 = vector.broadcast %24 : vector<1x64xf32> to vector<32x64xf32>
    %26 = arith.addf %22, %25 : vector<32x64xf32>
    %27 = vector.extract_strided_slice %12 {offsets = [0, 0], sizes = [32, 8], strides = [1, 1]} : vector<32x64xf32> to vector<32x8xf32>
    %28 = vector.extract_strided_slice %12 {offsets = [0, 8], sizes = [32, 8], strides = [1, 1]} : vector<32x64xf32> to vector<32x8xf32>
    %29 = vector.extract_strided_slice %12 {offsets = [0, 16], sizes = [32, 8], strides = [1, 1]} : vector<32x64xf32> to vector<32x8xf32>
    %30 = vector.extract_strided_slice %12 {offsets = [0, 24], sizes = [32, 8], strides = [1, 1]} : vector<32x64xf32> to vector<32x8xf32>
    %31 = vector.extract_strided_slice %12 {offsets = [0, 32], sizes = [32, 8], strides = [1, 1]} : vector<32x64xf32> to vector<32x8xf32>
    %32 = vector.extract_strided_slice %12 {offsets = [0, 40], sizes = [32, 8], strides = [1, 1]} : vector<32x64xf32> to vector<32x8xf32>
    %33 = vector.extract_strided_slice %12 {offsets = [0, 48], sizes = [32, 8], strides = [1, 1]} : vector<32x64xf32> to vector<32x8xf32>
    %34 = vector.extract_strided_slice %12 {offsets = [0, 56], sizes = [32, 8], strides = [1, 1]} : vector<32x64xf32> to vector<32x8xf32>
    %35 = tpu.concatenate %27, %28, %29, %30, %31, %32, %33, %34 in 0 : vector<32x8xf32>, vector<32x8xf32>, vector<32x8xf32>, vector<32x8xf32>, vector<32x8xf32>, vector<32x8xf32>, vector<32x8xf32>, vector<32x8xf32> -> vector<256x8xf32>
    %36 = vector.extract_strided_slice %19 {offsets = [0, 0], sizes = [32, 8], strides = [1, 1]} : vector<32x64xf32> to vector<32x8xf32>
    %37 = vector.extract_strided_slice %19 {offsets = [0, 8], sizes = [32, 8], strides = [1, 1]} : vector<32x64xf32> to vector<32x8xf32>
    %38 = vector.extract_strided_slice %19 {offsets = [0, 16], sizes = [32, 8], strides = [1, 1]} : vector<32x64xf32> to vector<32x8xf32>
    %39 = vector.extract_strided_slice %19 {offsets = [0, 24], sizes = [32, 8], strides = [1, 1]} : vector<32x64xf32> to vector<32x8xf32>
    %40 = vector.extract_strided_slice %19 {offsets = [0, 32], sizes = [32, 8], strides = [1, 1]} : vector<32x64xf32> to vector<32x8xf32>
    %41 = vector.extract_strided_slice %19 {offsets = [0, 40], sizes = [32, 8], strides = [1, 1]} : vector<32x64xf32> to vector<32x8xf32>
    %42 = vector.extract_strided_slice %19 {offsets = [0, 48], sizes = [32, 8], strides = [1, 1]} : vector<32x64xf32> to vector<32x8xf32>
    %43 = vector.extract_strided_slice %19 {offsets = [0, 56], sizes = [32, 8], strides = [1, 1]} : vector<32x64xf32> to vector<32x8xf32>
    %44 = tpu.concatenate %36, %37, %38, %39, %40, %41, %42, %43 in 0 : vector<32x8xf32>, vector<32x8xf32>, vector<32x8xf32>, vector<32x8xf32>, vector<32x8xf32>, vector<32x8xf32>, vector<32x8xf32>, vector<32x8xf32> -> vector<256x8xf32>
    %45 = vector.extract_strided_slice %26 {offsets = [0, 0], sizes = [32, 8], strides = [1, 1]} : vector<32x64xf32> to vector<32x8xf32>
    %46 = vector.extract_strided_slice %26 {offsets = [0, 8], sizes = [32, 8], strides = [1, 1]} : vector<32x64xf32> to vector<32x8xf32>
    %47 = vector.extract_strided_slice %26 {offsets = [0, 16], sizes = [32, 8], strides = [1, 1]} : vector<32x64xf32> to vector<32x8xf32>
    %48 = vector.extract_strided_slice %26 {offsets = [0, 24], sizes = [32, 8], strides = [1, 1]} : vector<32x64xf32> to vector<32x8xf32>
    %49 = vector.extract_strided_slice %26 {offsets = [0, 32], sizes = [32, 8], strides = [1, 1]} : vector<32x64xf32> to vector<32x8xf32>
    %50 = vector.extract_strided_slice %26 {offsets = [0, 40], sizes = [32, 8], strides = [1, 1]} : vector<32x64xf32> to vector<32x8xf32>
    %51 = vector.extract_strided_slice %26 {offsets = [0, 48], sizes = [32, 8], strides = [1, 1]} : vector<32x64xf32> to vector<32x8xf32>
    %52 = vector.extract_strided_slice %26 {offsets = [0, 56], sizes = [32, 8], strides = [1, 1]} : vector<32x64xf32> to vector<32x8xf32>
    %53 = tpu.concatenate %45, %46, %47, %48, %49, %50, %51, %52 in 0 : vector<32x8xf32>, vector<32x8xf32>, vector<32x8xf32>, vector<32x8xf32>, vector<32x8xf32>, vector<32x8xf32>, vector<32x8xf32>, vector<32x8xf32> -> vector<256x8xf32>
    %cst_26 = arith.constant dense<0.000000e+00> : vector<256x256xf32>
    %54 = tpu.matmul %35, %44, %cst_26 {dimension_numbers = #tpu.dot_dimension_numbers<[1], [1], [0], [0], [0, 0, 1, 0], [], []>} : vector<256x8xf32>, vector<256x8xf32>, vector<256x256xf32> -> vector<256x256xf32>
    %55 = arith.addf %54, %3 : vector<256x256xf32>
    %cst_27 = arith.constant dense<0xFF800000> : vector<256xf32>
    %56 = vector.multi_reduction <maximumf>, %55, %cst_27 [1] : vector<256x256xf32> to vector<256xf32>
    %57 = vector.shape_cast %56 : vector<256xf32> to vector<256x1xf32>
    %58 = vector.broadcast %57 : vector<256x1xf32> to vector<256x256xf32>
    %59 = arith.subf %55, %58 : vector<256x256xf32>
    %60 = math.exp %59 : vector<256x256xf32>
    %cst_28 = arith.constant dense<0.000000e+00> : vector<256xf32>
    %61 = vector.multi_reduction <add>, %60, %cst_28 [1] : vector<256x256xf32> to vector<256xf32>
    %62 = vector.shape_cast %61 : vector<256xf32> to vector<256x1xf32>
    %63 = tpu.reciprocal %62 {approx = true} : vector<256x1xf32> -> vector<256x1xf32>
    %64 = vector.broadcast %63 : vector<256x1xf32> to vector<256x256xf32>
    %65 = arith.mulf %60, %64 : vector<256x256xf32>
    %cst_29 = arith.constant dense<0.000000e+00> : vector<256x8xf32>
    %66 = tpu.matmul %65, %53, %cst_29 {dimension_numbers = #tpu.dot_dimension_numbers<[1], [0], [0], [1], [0, 0, 1, 1], [], []>} : vector<256x256xf32>, vector<256x8xf32>, vector<256x8xf32> -> vector<256x8xf32>
    %67 = vector.extract_strided_slice %66 {offsets = [0, 0], sizes = [32, 8], strides = [1, 1]} : vector<256x8xf32> to vector<32x8xf32>
    %68 = vector.extract_strided_slice %66 {offsets = [32, 0], sizes = [32, 8], strides = [1, 1]} : vector<256x8xf32> to vector<32x8xf32>
    %69 = vector.extract_strided_slice %66 {offsets = [64, 0], sizes = [32, 8], strides = [1, 1]} : vector<256x8xf32> to vector<32x8xf32>
    %70 = vector.extract_strided_slice %66 {offsets = [96, 0], sizes = [32, 8], strides = [1, 1]} : vector<256x8xf32> to vector<32x8xf32>
    %71 = vector.extract_strided_slice %66 {offsets = [128, 0], sizes = [32, 8], strides = [1, 1]} : vector<256x8xf32> to vector<32x8xf32>
    %72 = vector.extract_strided_slice %66 {offsets = [160, 0], sizes = [32, 8], strides = [1, 1]} : vector<256x8xf32> to vector<32x8xf32>
    %73 = vector.extract_strided_slice %66 {offsets = [192, 0], sizes = [32, 8], strides = [1, 1]} : vector<256x8xf32> to vector<32x8xf32>
    %74 = vector.extract_strided_slice %66 {offsets = [224, 0], sizes = [32, 8], strides = [1, 1]} : vector<256x8xf32> to vector<32x8xf32>
    %75 = tpu.concatenate %67, %68, %69, %70, %71, %72, %73, %74 in 1 : vector<32x8xf32>, vector<32x8xf32>, vector<32x8xf32>, vector<32x8xf32>, vector<32x8xf32>, vector<32x8xf32>, vector<32x8xf32>, vector<32x8xf32> -> vector<32x64xf32>
    %c0_30 = arith.constant 0 : index
    %c0_31 = arith.constant 0 : index
    %c0_32 = arith.constant 0 : index
    %76 = vector.load %arg10[%c0_30, %c0_31, %c0_32] : memref<2x64x64xf32, #tpu.memory_space<vmem>>, vector<1x64x64xf32>
    %77 = vector.shape_cast %76 : vector<1x64x64xf32> to vector<64x64xf32>
    %cst_33 = arith.constant dense<0.000000e+00> : vector<32x64xf32>
    %78 = tpu.matmul %75, %77, %cst_33 {dimension_numbers = #tpu.dot_dimension_numbers<[1], [0], [0], [1], [0, 0, 1, 1], [], []>} : vector<32x64xf32>, vector<64x64xf32>, vector<32x64xf32> -> vector<32x64xf32>
    %c0_34 = arith.constant 0 : index
    %c0_35 = arith.constant 0 : index
    %c0_36 = arith.constant 0 : index
    %79 = vector.load %arg11[%c0_34, %c0_35, %c0_36] : memref<2x1x64xf32, #tpu.memory_space<vmem>>, vector<1x1x64xf32>
    %80 = vector.shape_cast %79 : vector<1x1x64xf32> to vector<1x64xf32>
    %81 = vector.broadcast %80 : vector<1x64xf32> to vector<32x64xf32>
    %82 = arith.addf %78, %81 : vector<32x64xf32>
    %83 = arith.addf %2, %82 : vector<32x64xf32>
    %c0_37 = arith.constant 0 : index
    %c0_38 = arith.constant 0 : index
    %c0_39 = arith.constant 0 : index
    %84 = vector.load %arg16[%c0_37, %c0_38, %c0_39] : memref<2x1x64xf32, #tpu.memory_space<vmem>>, vector<1x1x64xf32>
    %85 = vector.shape_cast %84 : vector<1x1x64xf32> to vector<1x64xf32>
    %c0_40 = arith.constant 0 : index
    %c0_41 = arith.constant 0 : index
    %c0_42 = arith.constant 0 : index
    %86 = vector.load %arg17[%c0_40, %c0_41, %c0_42] : memref<2x1x64xf32, #tpu.memory_space<vmem>>, vector<1x1x64xf32>
    %87 = vector.shape_cast %86 : vector<1x1x64xf32> to vector<1x64xf32>
    %cst_43 = arith.constant dense<0.000000e+00> : vector<32xf32>
    %88 = vector.multi_reduction <add>, %83, %cst_43 [1] : vector<32x64xf32> to vector<32xf32>
    %89 = vector.shape_cast %88 : vector<32xf32> to vector<32x1xf32>
    %cst_44 = arith.constant 6.400000e+01 : f32
    %90 = vector.broadcast %cst_44 : f32 to vector<32x1xf32>
    %91 = arith.divf %89, %90 : vector<32x1xf32>
    %92 = vector.broadcast %91 : vector<32x1xf32> to vector<32x64xf32>
    %93 = arith.subf %83, %92 : vector<32x64xf32>
    %94 = arith.mulf %93, %93 : vector<32x64xf32>
    %cst_45 = arith.constant dense<0.000000e+00> : vector<32xf32>
    %95 = vector.multi_reduction <add>, %94, %cst_45 [1] : vector<32x64xf32> to vector<32xf32>
    %96 = vector.shape_cast %95 : vector<32xf32> to vector<32x1xf32>
    %cst_46 = arith.constant 6.400000e+01 : f32
    %97 = vector.broadcast %cst_46 : f32 to vector<32x1xf32>
    %98 = arith.divf %96, %97 : vector<32x1xf32>
    %cst_47 = arith.constant 9.99999974E-6 : f32
    %99 = vector.broadcast %cst_47 : f32 to vector<32x1xf32>
    %100 = arith.addf %98, %99 : vector<32x1xf32>
    %101 = math.rsqrt %100 : vector<32x1xf32>
    %102 = vector.broadcast %101 : vector<32x1xf32> to vector<32x64xf32>
    %103 = arith.mulf %93, %102 : vector<32x64xf32>
    %104 = vector.broadcast %85 : vector<1x64xf32> to vector<32x64xf32>
    %105 = arith.mulf %103, %104 : vector<32x64xf32>
    %106 = vector.broadcast %87 : vector<1x64xf32> to vector<32x64xf32>
    %107 = arith.addf %105, %106 : vector<32x64xf32>
    %c0_48 = arith.constant 0 : index
    %c0_49 = arith.constant 0 : index
    %c0_50 = arith.constant 0 : index
    %108 = vector.load %arg12[%c0_48, %c0_49, %c0_50] : memref<2x64x128xf32, #tpu.memory_space<vmem>>, vector<1x64x128xf32>
    %109 = vector.shape_cast %108 : vector<1x64x128xf32> to vector<64x128xf32>
    %cst_51 = arith.constant dense<0.000000e+00> : vector<32x128xf32>
    %110 = tpu.matmul %107, %109, %cst_51 {dimension_numbers = #tpu.dot_dimension_numbers<[1], [0], [0], [1], [0, 0, 1, 1], [], []>} : vector<32x64xf32>, vector<64x128xf32>, vector<32x128xf32> -> vector<32x128xf32>
    %c0_52 = arith.constant 0 : index
    %c0_53 = arith.constant 0 : index
    %c0_54 = arith.constant 0 : index
    %111 = vector.load %arg13[%c0_52, %c0_53, %c0_54] : memref<2x1x128xf32, #tpu.memory_space<vmem>>, vector<1x1x128xf32>
    %112 = vector.shape_cast %111 : vector<1x1x128xf32> to vector<1x128xf32>
    %113 = vector.broadcast %112 : vector<1x128xf32> to vector<32x128xf32>
    %114 = arith.addf %110, %113 : vector<32x128xf32>
    %cst_55 = arith.constant 0.000000e+00 : f32
    %115 = vector.broadcast %cst_55 : f32 to vector<32x128xf32>
    %116 = arith.maximumf %114, %115 : vector<32x128xf32>
    %c0_56 = arith.constant 0 : index
    %c0_57 = arith.constant 0 : index
    %c0_58 = arith.constant 0 : index
    %117 = vector.load %arg14[%c0_56, %c0_57, %c0_58] : memref<2x128x64xf32, #tpu.memory_space<vmem>>, vector<1x128x64xf32>
    %118 = vector.shape_cast %117 : vector<1x128x64xf32> to vector<128x64xf32>
    %cst_59 = arith.constant dense<0.000000e+00> : vector<32x64xf32>
    %119 = tpu.matmul %116, %118, %cst_59 {dimension_numbers = #tpu.dot_dimension_numbers<[1], [0], [0], [1], [0, 0, 1, 1], [], []>} : vector<32x128xf32>, vector<128x64xf32>, vector<32x64xf32> -> vector<32x64xf32>
    %c0_60 = arith.constant 0 : index
    %c0_61 = arith.constant 0 : index
    %c0_62 = arith.constant 0 : index
    %120 = vector.load %arg15[%c0_60, %c0_61, %c0_62] : memref<2x1x64xf32, #tpu.memory_space<vmem>>, vector<1x1x64xf32>
    %121 = vector.shape_cast %120 : vector<1x1x64xf32> to vector<1x64xf32>
    %122 = vector.broadcast %121 : vector<1x64xf32> to vector<32x64xf32>
    %123 = arith.addf %119, %122 : vector<32x64xf32>
    %124 = arith.addf %107, %123 : vector<32x64xf32>
    %c0_63 = arith.constant 0 : index
    %c0_64 = arith.constant 0 : index
    %c0_65 = arith.constant 0 : index
    %125 = vector.load %arg18[%c0_63, %c0_64, %c0_65] : memref<2x1x64xf32, #tpu.memory_space<vmem>>, vector<1x1x64xf32>
    %126 = vector.shape_cast %125 : vector<1x1x64xf32> to vector<1x64xf32>
    %c0_66 = arith.constant 0 : index
    %c0_67 = arith.constant 0 : index
    %c0_68 = arith.constant 0 : index
    %127 = vector.load %arg19[%c0_66, %c0_67, %c0_68] : memref<2x1x64xf32, #tpu.memory_space<vmem>>, vector<1x1x64xf32>
    %128 = vector.shape_cast %127 : vector<1x1x64xf32> to vector<1x64xf32>
    %cst_69 = arith.constant dense<0.000000e+00> : vector<32xf32>
    %129 = vector.multi_reduction <add>, %124, %cst_69 [1] : vector<32x64xf32> to vector<32xf32>
    %130 = vector.shape_cast %129 : vector<32xf32> to vector<32x1xf32>
    %cst_70 = arith.constant 6.400000e+01 : f32
    %131 = vector.broadcast %cst_70 : f32 to vector<32x1xf32>
    %132 = arith.divf %130, %131 : vector<32x1xf32>
    %133 = vector.broadcast %132 : vector<32x1xf32> to vector<32x64xf32>
    %134 = arith.subf %124, %133 : vector<32x64xf32>
    %135 = arith.mulf %134, %134 : vector<32x64xf32>
    %cst_71 = arith.constant dense<0.000000e+00> : vector<32xf32>
    %136 = vector.multi_reduction <add>, %135, %cst_71 [1] : vector<32x64xf32> to vector<32xf32>
    %137 = vector.shape_cast %136 : vector<32xf32> to vector<32x1xf32>
    %cst_72 = arith.constant 6.400000e+01 : f32
    %138 = vector.broadcast %cst_72 : f32 to vector<32x1xf32>
    %139 = arith.divf %137, %138 : vector<32x1xf32>
    %cst_73 = arith.constant 9.99999974E-6 : f32
    %140 = vector.broadcast %cst_73 : f32 to vector<32x1xf32>
    %141 = arith.addf %139, %140 : vector<32x1xf32>
    %142 = math.rsqrt %141 : vector<32x1xf32>
    %143 = vector.broadcast %142 : vector<32x1xf32> to vector<32x64xf32>
    %144 = arith.mulf %134, %143 : vector<32x64xf32>
    %145 = vector.broadcast %126 : vector<1x64xf32> to vector<32x64xf32>
    %146 = arith.mulf %144, %145 : vector<32x64xf32>
    %147 = vector.broadcast %128 : vector<1x64xf32> to vector<32x64xf32>
    %148 = arith.addf %146, %147 : vector<32x64xf32>
    %c1 = arith.constant 1 : index
    %c0_74 = arith.constant 0 : index
    %c0_75 = arith.constant 0 : index
    %149 = vector.load %arg4[%c1, %c0_74, %c0_75] : memref<2x64x64xf32, #tpu.memory_space<vmem>>, vector<1x64x64xf32>
    %150 = vector.shape_cast %149 : vector<1x64x64xf32> to vector<64x64xf32>
    %cst_76 = arith.constant dense<0.000000e+00> : vector<32x64xf32>
    %151 = tpu.matmul %148, %150, %cst_76 {dimension_numbers = #tpu.dot_dimension_numbers<[1], [0], [0], [1], [0, 0, 1, 1], [], []>} : vector<32x64xf32>, vector<64x64xf32>, vector<32x64xf32> -> vector<32x64xf32>
    %c1_77 = arith.constant 1 : index
    %c0_78 = arith.constant 0 : index
    %c0_79 = arith.constant 0 : index
    %152 = vector.load %arg5[%c1_77, %c0_78, %c0_79] : memref<2x1x64xf32, #tpu.memory_space<vmem>>, vector<1x1x64xf32>
    %153 = vector.shape_cast %152 : vector<1x1x64xf32> to vector<1x64xf32>
    %154 = vector.broadcast %153 : vector<1x64xf32> to vector<32x64xf32>
    %155 = arith.addf %151, %154 : vector<32x64xf32>
    %cst_80 = arith.constant 0.353553385 : f32
    %156 = vector.broadcast %cst_80 : f32 to vector<32x64xf32>
    %157 = arith.mulf %155, %156 : vector<32x64xf32>
    %c1_81 = arith.constant 1 : index
    %c0_82 = arith.constant 0 : index
    %c0_83 = arith.constant 0 : index
    %158 = vector.load %arg6[%c1_81, %c0_82, %c0_83] : memref<2x64x64xf32, #tpu.memory_space<vmem>>, vector<1x64x64xf32>
    %159 = vector.shape_cast %158 : vector<1x64x64xf32> to vector<64x64xf32>
    %cst_84 = arith.constant dense<0.000000e+00> : vector<32x64xf32>
    %160 = tpu.matmul %148, %159, %cst_84 {dimension_numbers = #tpu.dot_dimension_numbers<[1], [0], [0], [1], [0, 0, 1, 1], [], []>} : vector<32x64xf32>, vector<64x64xf32>, vector<32x64xf32> -> vector<32x64xf32>
    %c1_85 = arith.constant 1 : index
    %c0_86 = arith.constant 0 : index
    %c0_87 = arith.constant 0 : index
    %161 = vector.load %arg7[%c1_85, %c0_86, %c0_87] : memref<2x1x64xf32, #tpu.memory_space<vmem>>, vector<1x1x64xf32>
    %162 = vector.shape_cast %161 : vector<1x1x64xf32> to vector<1x64xf32>
    %163 = vector.broadcast %162 : vector<1x64xf32> to vector<32x64xf32>
    %164 = arith.addf %160, %163 : vector<32x64xf32>
    %c1_88 = arith.constant 1 : index
    %c0_89 = arith.constant 0 : index
    %c0_90 = arith.constant 0 : index
    %165 = vector.load %arg8[%c1_88, %c0_89, %c0_90] : memref<2x64x64xf32, #tpu.memory_space<vmem>>, vector<1x64x64xf32>
    %166 = vector.shape_cast %165 : vector<1x64x64xf32> to vector<64x64xf32>
    %cst_91 = arith.constant dense<0.000000e+00> : vector<32x64xf32>
    %167 = tpu.matmul %148, %166, %cst_91 {dimension_numbers = #tpu.dot_dimension_numbers<[1], [0], [0], [1], [0, 0, 1, 1], [], []>} : vector<32x64xf32>, vector<64x64xf32>, vector<32x64xf32> -> vector<32x64xf32>
    %c1_92 = arith.constant 1 : index
    %c0_93 = arith.constant 0 : index
    %c0_94 = arith.constant 0 : index
    %168 = vector.load %arg9[%c1_92, %c0_93, %c0_94] : memref<2x1x64xf32, #tpu.memory_space<vmem>>, vector<1x1x64xf32>
    %169 = vector.shape_cast %168 : vector<1x1x64xf32> to vector<1x64xf32>
    %170 = vector.broadcast %169 : vector<1x64xf32> to vector<32x64xf32>
    %171 = arith.addf %167, %170 : vector<32x64xf32>
    %172 = vector.extract_strided_slice %157 {offsets = [0, 0], sizes = [32, 8], strides = [1, 1]} : vector<32x64xf32> to vector<32x8xf32>
    %173 = vector.extract_strided_slice %157 {offsets = [0, 8], sizes = [32, 8], strides = [1, 1]} : vector<32x64xf32> to vector<32x8xf32>
    %174 = vector.extract_strided_slice %157 {offsets = [0, 16], sizes = [32, 8], strides = [1, 1]} : vector<32x64xf32> to vector<32x8xf32>
    %175 = vector.extract_strided_slice %157 {offsets = [0, 24], sizes = [32, 8], strides = [1, 1]} : vector<32x64xf32> to vector<32x8xf32>
    %176 = vector.extract_strided_slice %157 {offsets = [0, 32], sizes = [32, 8], strides = [1, 1]} : vector<32x64xf32> to vector<32x8xf32>
    %177 = vector.extract_strided_slice %157 {offsets = [0, 40], sizes = [32, 8], strides = [1, 1]} : vector<32x64xf32> to vector<32x8xf32>
    %178 = vector.extract_strided_slice %157 {offsets = [0, 48], sizes = [32, 8], strides = [1, 1]} : vector<32x64xf32> to vector<32x8xf32>
    %179 = vector.extract_strided_slice %157 {offsets = [0, 56], sizes = [32, 8], strides = [1, 1]} : vector<32x64xf32> to vector<32x8xf32>
    %180 = tpu.concatenate %172, %173, %174, %175, %176, %177, %178, %179 in 0 : vector<32x8xf32>, vector<32x8xf32>, vector<32x8xf32>, vector<32x8xf32>, vector<32x8xf32>, vector<32x8xf32>, vector<32x8xf32>, vector<32x8xf32> -> vector<256x8xf32>
    %181 = vector.extract_strided_slice %164 {offsets = [0, 0], sizes = [32, 8], strides = [1, 1]} : vector<32x64xf32> to vector<32x8xf32>
    %182 = vector.extract_strided_slice %164 {offsets = [0, 8], sizes = [32, 8], strides = [1, 1]} : vector<32x64xf32> to vector<32x8xf32>
    %183 = vector.extract_strided_slice %164 {offsets = [0, 16], sizes = [32, 8], strides = [1, 1]} : vector<32x64xf32> to vector<32x8xf32>
    %184 = vector.extract_strided_slice %164 {offsets = [0, 24], sizes = [32, 8], strides = [1, 1]} : vector<32x64xf32> to vector<32x8xf32>
    %185 = vector.extract_strided_slice %164 {offsets = [0, 32], sizes = [32, 8], strides = [1, 1]} : vector<32x64xf32> to vector<32x8xf32>
    %186 = vector.extract_strided_slice %164 {offsets = [0, 40], sizes = [32, 8], strides = [1, 1]} : vector<32x64xf32> to vector<32x8xf32>
    %187 = vector.extract_strided_slice %164 {offsets = [0, 48], sizes = [32, 8], strides = [1, 1]} : vector<32x64xf32> to vector<32x8xf32>
    %188 = vector.extract_strided_slice %164 {offsets = [0, 56], sizes = [32, 8], strides = [1, 1]} : vector<32x64xf32> to vector<32x8xf32>
    %189 = tpu.concatenate %181, %182, %183, %184, %185, %186, %187, %188 in 0 : vector<32x8xf32>, vector<32x8xf32>, vector<32x8xf32>, vector<32x8xf32>, vector<32x8xf32>, vector<32x8xf32>, vector<32x8xf32>, vector<32x8xf32> -> vector<256x8xf32>
    %190 = vector.extract_strided_slice %171 {offsets = [0, 0], sizes = [32, 8], strides = [1, 1]} : vector<32x64xf32> to vector<32x8xf32>
    %191 = vector.extract_strided_slice %171 {offsets = [0, 8], sizes = [32, 8], strides = [1, 1]} : vector<32x64xf32> to vector<32x8xf32>
    %192 = vector.extract_strided_slice %171 {offsets = [0, 16], sizes = [32, 8], strides = [1, 1]} : vector<32x64xf32> to vector<32x8xf32>
    %193 = vector.extract_strided_slice %171 {offsets = [0, 24], sizes = [32, 8], strides = [1, 1]} : vector<32x64xf32> to vector<32x8xf32>
    %194 = vector.extract_strided_slice %171 {offsets = [0, 32], sizes = [32, 8], strides = [1, 1]} : vector<32x64xf32> to vector<32x8xf32>
    %195 = vector.extract_strided_slice %171 {offsets = [0, 40], sizes = [32, 8], strides = [1, 1]} : vector<32x64xf32> to vector<32x8xf32>
    %196 = vector.extract_strided_slice %171 {offsets = [0, 48], sizes = [32, 8], strides = [1, 1]} : vector<32x64xf32> to vector<32x8xf32>
    %197 = vector.extract_strided_slice %171 {offsets = [0, 56], sizes = [32, 8], strides = [1, 1]} : vector<32x64xf32> to vector<32x8xf32>
    %198 = tpu.concatenate %190, %191, %192, %193, %194, %195, %196, %197 in 0 : vector<32x8xf32>, vector<32x8xf32>, vector<32x8xf32>, vector<32x8xf32>, vector<32x8xf32>, vector<32x8xf32>, vector<32x8xf32>, vector<32x8xf32> -> vector<256x8xf32>
    %cst_95 = arith.constant dense<0.000000e+00> : vector<256x256xf32>
    %199 = tpu.matmul %180, %189, %cst_95 {dimension_numbers = #tpu.dot_dimension_numbers<[1], [1], [0], [0], [0, 0, 1, 0], [], []>} : vector<256x8xf32>, vector<256x8xf32>, vector<256x256xf32> -> vector<256x256xf32>
    %200 = arith.addf %199, %3 : vector<256x256xf32>
    %cst_96 = arith.constant dense<0xFF800000> : vector<256xf32>
    %201 = vector.multi_reduction <maximumf>, %200, %cst_96 [1] : vector<256x256xf32> to vector<256xf32>
    %202 = vector.shape_cast %201 : vector<256xf32> to vector<256x1xf32>
    %203 = vector.broadcast %202 : vector<256x1xf32> to vector<256x256xf32>
    %204 = arith.subf %200, %203 : vector<256x256xf32>
    %205 = math.exp %204 : vector<256x256xf32>
    %cst_97 = arith.constant dense<0.000000e+00> : vector<256xf32>
    %206 = vector.multi_reduction <add>, %205, %cst_97 [1] : vector<256x256xf32> to vector<256xf32>
    %207 = vector.shape_cast %206 : vector<256xf32> to vector<256x1xf32>
    %208 = tpu.reciprocal %207 {approx = true} : vector<256x1xf32> -> vector<256x1xf32>
    %209 = vector.broadcast %208 : vector<256x1xf32> to vector<256x256xf32>
    %210 = arith.mulf %205, %209 : vector<256x256xf32>
    %cst_98 = arith.constant dense<0.000000e+00> : vector<256x8xf32>
    %211 = tpu.matmul %210, %198, %cst_98 {dimension_numbers = #tpu.dot_dimension_numbers<[1], [0], [0], [1], [0, 0, 1, 1], [], []>} : vector<256x256xf32>, vector<256x8xf32>, vector<256x8xf32> -> vector<256x8xf32>
    %212 = vector.extract_strided_slice %211 {offsets = [0, 0], sizes = [32, 8], strides = [1, 1]} : vector<256x8xf32> to vector<32x8xf32>
    %213 = vector.extract_strided_slice %211 {offsets = [32, 0], sizes = [32, 8], strides = [1, 1]} : vector<256x8xf32> to vector<32x8xf32>
    %214 = vector.extract_strided_slice %211 {offsets = [64, 0], sizes = [32, 8], strides = [1, 1]} : vector<256x8xf32> to vector<32x8xf32>
    %215 = vector.extract_strided_slice %211 {offsets = [96, 0], sizes = [32, 8], strides = [1, 1]} : vector<256x8xf32> to vector<32x8xf32>
    %216 = vector.extract_strided_slice %211 {offsets = [128, 0], sizes = [32, 8], strides = [1, 1]} : vector<256x8xf32> to vector<32x8xf32>
    %217 = vector.extract_strided_slice %211 {offsets = [160, 0], sizes = [32, 8], strides = [1, 1]} : vector<256x8xf32> to vector<32x8xf32>
    %218 = vector.extract_strided_slice %211 {offsets = [192, 0], sizes = [32, 8], strides = [1, 1]} : vector<256x8xf32> to vector<32x8xf32>
    %219 = vector.extract_strided_slice %211 {offsets = [224, 0], sizes = [32, 8], strides = [1, 1]} : vector<256x8xf32> to vector<32x8xf32>
    %220 = tpu.concatenate %212, %213, %214, %215, %216, %217, %218, %219 in 1 : vector<32x8xf32>, vector<32x8xf32>, vector<32x8xf32>, vector<32x8xf32>, vector<32x8xf32>, vector<32x8xf32>, vector<32x8xf32>, vector<32x8xf32> -> vector<32x64xf32>
    %c1_99 = arith.constant 1 : index
    %c0_100 = arith.constant 0 : index
    %c0_101 = arith.constant 0 : index
    %221 = vector.load %arg10[%c1_99, %c0_100, %c0_101] : memref<2x64x64xf32, #tpu.memory_space<vmem>>, vector<1x64x64xf32>
    %222 = vector.shape_cast %221 : vector<1x64x64xf32> to vector<64x64xf32>
    %cst_102 = arith.constant dense<0.000000e+00> : vector<32x64xf32>
    %223 = tpu.matmul %220, %222, %cst_102 {dimension_numbers = #tpu.dot_dimension_numbers<[1], [0], [0], [1], [0, 0, 1, 1], [], []>} : vector<32x64xf32>, vector<64x64xf32>, vector<32x64xf32> -> vector<32x64xf32>
    %c1_103 = arith.constant 1 : index
    %c0_104 = arith.constant 0 : index
    %c0_105 = arith.constant 0 : index
    %224 = vector.load %arg11[%c1_103, %c0_104, %c0_105] : memref<2x1x64xf32, #tpu.memory_space<vmem>>, vector<1x1x64xf32>
    %225 = vector.shape_cast %224 : vector<1x1x64xf32> to vector<1x64xf32>
    %226 = vector.broadcast %225 : vector<1x64xf32> to vector<32x64xf32>
    %227 = arith.addf %223, %226 : vector<32x64xf32>
    %228 = arith.addf %148, %227 : vector<32x64xf32>
    %c1_106 = arith.constant 1 : index
    %c0_107 = arith.constant 0 : index
    %c0_108 = arith.constant 0 : index
    %229 = vector.load %arg16[%c1_106, %c0_107, %c0_108] : memref<2x1x64xf32, #tpu.memory_space<vmem>>, vector<1x1x64xf32>
    %230 = vector.shape_cast %229 : vector<1x1x64xf32> to vector<1x64xf32>
    %c1_109 = arith.constant 1 : index
    %c0_110 = arith.constant 0 : index
    %c0_111 = arith.constant 0 : index
    %231 = vector.load %arg17[%c1_109, %c0_110, %c0_111] : memref<2x1x64xf32, #tpu.memory_space<vmem>>, vector<1x1x64xf32>
    %232 = vector.shape_cast %231 : vector<1x1x64xf32> to vector<1x64xf32>
    %cst_112 = arith.constant dense<0.000000e+00> : vector<32xf32>
    %233 = vector.multi_reduction <add>, %228, %cst_112 [1] : vector<32x64xf32> to vector<32xf32>
    %234 = vector.shape_cast %233 : vector<32xf32> to vector<32x1xf32>
    %cst_113 = arith.constant 6.400000e+01 : f32
    %235 = vector.broadcast %cst_113 : f32 to vector<32x1xf32>
    %236 = arith.divf %234, %235 : vector<32x1xf32>
    %237 = vector.broadcast %236 : vector<32x1xf32> to vector<32x64xf32>
    %238 = arith.subf %228, %237 : vector<32x64xf32>
    %239 = arith.mulf %238, %238 : vector<32x64xf32>
    %cst_114 = arith.constant dense<0.000000e+00> : vector<32xf32>
    %240 = vector.multi_reduction <add>, %239, %cst_114 [1] : vector<32x64xf32> to vector<32xf32>
    %241 = vector.shape_cast %240 : vector<32xf32> to vector<32x1xf32>
    %cst_115 = arith.constant 6.400000e+01 : f32
    %242 = vector.broadcast %cst_115 : f32 to vector<32x1xf32>
    %243 = arith.divf %241, %242 : vector<32x1xf32>
    %cst_116 = arith.constant 9.99999974E-6 : f32
    %244 = vector.broadcast %cst_116 : f32 to vector<32x1xf32>
    %245 = arith.addf %243, %244 : vector<32x1xf32>
    %246 = math.rsqrt %245 : vector<32x1xf32>
    %247 = vector.broadcast %246 : vector<32x1xf32> to vector<32x64xf32>
    %248 = arith.mulf %238, %247 : vector<32x64xf32>
    %249 = vector.broadcast %230 : vector<1x64xf32> to vector<32x64xf32>
    %250 = arith.mulf %248, %249 : vector<32x64xf32>
    %251 = vector.broadcast %232 : vector<1x64xf32> to vector<32x64xf32>
    %252 = arith.addf %250, %251 : vector<32x64xf32>
    %c1_117 = arith.constant 1 : index
    %c0_118 = arith.constant 0 : index
    %c0_119 = arith.constant 0 : index
    %253 = vector.load %arg12[%c1_117, %c0_118, %c0_119] : memref<2x64x128xf32, #tpu.memory_space<vmem>>, vector<1x64x128xf32>
    %254 = vector.shape_cast %253 : vector<1x64x128xf32> to vector<64x128xf32>
    %cst_120 = arith.constant dense<0.000000e+00> : vector<32x128xf32>
    %255 = tpu.matmul %252, %254, %cst_120 {dimension_numbers = #tpu.dot_dimension_numbers<[1], [0], [0], [1], [0, 0, 1, 1], [], []>} : vector<32x64xf32>, vector<64x128xf32>, vector<32x128xf32> -> vector<32x128xf32>
    %c1_121 = arith.constant 1 : index
    %c0_122 = arith.constant 0 : index
    %c0_123 = arith.constant 0 : index
    %256 = vector.load %arg13[%c1_121, %c0_122, %c0_123] : memref<2x1x128xf32, #tpu.memory_space<vmem>>, vector<1x1x128xf32>
    %257 = vector.shape_cast %256 : vector<1x1x128xf32> to vector<1x128xf32>
    %258 = vector.broadcast %257 : vector<1x128xf32> to vector<32x128xf32>
    %259 = arith.addf %255, %258 : vector<32x128xf32>
    %cst_124 = arith.constant 0.000000e+00 : f32
    %260 = vector.broadcast %cst_124 : f32 to vector<32x128xf32>
    %261 = arith.maximumf %259, %260 : vector<32x128xf32>
    %c1_125 = arith.constant 1 : index
    %c0_126 = arith.constant 0 : index
    %c0_127 = arith.constant 0 : index
    %262 = vector.load %arg14[%c1_125, %c0_126, %c0_127] : memref<2x128x64xf32, #tpu.memory_space<vmem>>, vector<1x128x64xf32>
    %263 = vector.shape_cast %262 : vector<1x128x64xf32> to vector<128x64xf32>
    %cst_128 = arith.constant dense<0.000000e+00> : vector<32x64xf32>
    %264 = tpu.matmul %261, %263, %cst_128 {dimension_numbers = #tpu.dot_dimension_numbers<[1], [0], [0], [1], [0, 0, 1, 1], [], []>} : vector<32x128xf32>, vector<128x64xf32>, vector<32x64xf32> -> vector<32x64xf32>
    %c1_129 = arith.constant 1 : index
    %c0_130 = arith.constant 0 : index
    %c0_131 = arith.constant 0 : index
    %265 = vector.load %arg15[%c1_129, %c0_130, %c0_131] : memref<2x1x64xf32, #tpu.memory_space<vmem>>, vector<1x1x64xf32>
    %266 = vector.shape_cast %265 : vector<1x1x64xf32> to vector<1x64xf32>
    %267 = vector.broadcast %266 : vector<1x64xf32> to vector<32x64xf32>
    %268 = arith.addf %264, %267 : vector<32x64xf32>
    %269 = arith.addf %252, %268 : vector<32x64xf32>
    %c1_132 = arith.constant 1 : index
    %c0_133 = arith.constant 0 : index
    %c0_134 = arith.constant 0 : index
    %270 = vector.load %arg18[%c1_132, %c0_133, %c0_134] : memref<2x1x64xf32, #tpu.memory_space<vmem>>, vector<1x1x64xf32>
    %271 = vector.shape_cast %270 : vector<1x1x64xf32> to vector<1x64xf32>
    %c1_135 = arith.constant 1 : index
    %c0_136 = arith.constant 0 : index
    %c0_137 = arith.constant 0 : index
    %272 = vector.load %arg19[%c1_135, %c0_136, %c0_137] : memref<2x1x64xf32, #tpu.memory_space<vmem>>, vector<1x1x64xf32>
    %273 = vector.shape_cast %272 : vector<1x1x64xf32> to vector<1x64xf32>
    %cst_138 = arith.constant dense<0.000000e+00> : vector<32xf32>
    %274 = vector.multi_reduction <add>, %269, %cst_138 [1] : vector<32x64xf32> to vector<32xf32>
    %275 = vector.shape_cast %274 : vector<32xf32> to vector<32x1xf32>
    %cst_139 = arith.constant 6.400000e+01 : f32
    %276 = vector.broadcast %cst_139 : f32 to vector<32x1xf32>
    %277 = arith.divf %275, %276 : vector<32x1xf32>
    %278 = vector.broadcast %277 : vector<32x1xf32> to vector<32x64xf32>
    %279 = arith.subf %269, %278 : vector<32x64xf32>
    %280 = arith.mulf %279, %279 : vector<32x64xf32>
    %cst_140 = arith.constant dense<0.000000e+00> : vector<32xf32>
    %281 = vector.multi_reduction <add>, %280, %cst_140 [1] : vector<32x64xf32> to vector<32xf32>
    %282 = vector.shape_cast %281 : vector<32xf32> to vector<32x1xf32>
    %cst_141 = arith.constant 6.400000e+01 : f32
    %283 = vector.broadcast %cst_141 : f32 to vector<32x1xf32>
    %284 = arith.divf %282, %283 : vector<32x1xf32>
    %cst_142 = arith.constant 9.99999974E-6 : f32
    %285 = vector.broadcast %cst_142 : f32 to vector<32x1xf32>
    %286 = arith.addf %284, %285 : vector<32x1xf32>
    %287 = math.rsqrt %286 : vector<32x1xf32>
    %288 = vector.broadcast %287 : vector<32x1xf32> to vector<32x64xf32>
    %289 = arith.mulf %279, %288 : vector<32x64xf32>
    %290 = vector.broadcast %271 : vector<1x64xf32> to vector<32x64xf32>
    %291 = arith.mulf %289, %290 : vector<32x64xf32>
    %292 = vector.broadcast %273 : vector<1x64xf32> to vector<32x64xf32>
    %293 = arith.addf %291, %292 : vector<32x64xf32>
    %294 = vector.extract_strided_slice %293 {offsets = [0, 0], sizes = [16, 64], strides = [1, 1]} : vector<32x64xf32> to vector<16x64xf32>
    %295 = vector.extract_strided_slice %293 {offsets = [16, 0], sizes = [16, 64], strides = [1, 1]} : vector<32x64xf32> to vector<16x64xf32>
    %296 = tpu.concatenate %294, %295 in 1 : vector<16x64xf32>, vector<16x64xf32> -> vector<16x128xf32>
    %c0_143 = arith.constant 0 : index
    %c0_144 = arith.constant 0 : index
    %297 = vector.load %arg20[%c0_143, %c0_144] : memref<16x128xf32, #tpu.memory_space<vmem>>, vector<16x128xf32>
    tpu.vector_store %arg20[%c0_143, %c0_144], %296 {strides = array<i32>} : memref<16x128xf32, #tpu.memory_space<vmem>>, vector<16x128xf32>,
    return
  }
  func.func @transform_0(%arg0: i32) -> (i32, i32) {
    %c0_i32 = arith.constant 0 : i32
    %c0_i32_0 = arith.constant 0 : i32
    %c0_i32_1 = arith.constant 0 : i32
    return %c0_i32, %c0_i32_0 : i32, i32
  }
  func.func @transform_1(%arg0: i32) -> (i32, i32) {
    %c0_i32 = arith.constant 0 : i32
    %c0_i32_0 = arith.constant 0 : i32
    %c0_i32_1 = arith.constant 0 : i32
    return %c0_i32, %c0_i32_0 : i32, i32
  }
  func.func @transform_2(%arg0: i32) -> (i32, i32) {
    %c0_i32 = arith.constant 0 : i32
    %c0_i32_0 = arith.constant 0 : i32
    %c0_i32_1 = arith.constant 0 : i32
    return %c0_i32, %c0_i32_0 : i32, i32
  }
  func.func @transform_3(%arg0: i32) -> (i32, i32, i32) {
    %c0_i32 = arith.constant 0 : i32
    %c0_i32_0 = arith.constant 0 : i32
    %c0_i32_1 = arith.constant 0 : i32
    %c0_i32_2 = arith.constant 0 : i32
    return %c0_i32, %c0_i32_0, %c0_i32_1 : i32, i32, i32
  }
  func.func @transform_4(%arg0: i32) -> (i32, i32, i32) {
    %c0_i32 = arith.constant 0 : i32
    %c0_i32_0 = arith.constant 0 : i32
    %c0_i32_1 = arith.constant 0 : i32
    %c0_i32_2 = arith.constant 0 : i32
    return %c0_i32, %c0_i32_0, %c0_i32_1 : i32, i32, i32
  }
  func.func @transform_5(%arg0: i32) -> (i32, i32, i32) {
    %c0_i32 = arith.constant 0 : i32
    %c0_i32_0 = arith.constant 0 : i32
    %c0_i32_1 = arith.constant 0 : i32
    %c0_i32_2 = arith.constant 0 : i32
    return %c0_i32, %c0_i32_0, %c0_i32_1 : i32, i32, i32
  }
  func.func @transform_6(%arg0: i32) -> (i32, i32, i32) {
    %c0_i32 = arith.constant 0 : i32
    %c0_i32_0 = arith.constant 0 : i32
    %c0_i32_1 = arith.constant 0 : i32
    %c0_i32_2 = arith.constant 0 : i32
    return %c0_i32, %c0_i32_0, %c0_i32_1 : i32, i32, i32
  }
  func.func @transform_7(%arg0: i32) -> (i32, i32, i32) {
    %c0_i32 = arith.constant 0 : i32
    %c0_i32_0 = arith.constant 0 : i32
    %c0_i32_1 = arith.constant 0 : i32
    %c0_i32_2 = arith.constant 0 : i32
    return %c0_i32, %c0_i32_0, %c0_i32_1 : i32, i32, i32
  }
  func.func @transform_8(%arg0: i32) -> (i32, i32, i32) {
    %c0_i32 = arith.constant 0 : i32
    %c0_i32_0 = arith.constant 0 : i32
    %c0_i32_1 = arith.constant 0 : i32
    %c0_i32_2 = arith.constant 0 : i32
    return %c0_i32, %c0_i32_0, %c0_i32_1 : i32, i32, i32
  }
  func.func @transform_9(%arg0: i32) -> (i32, i32, i32) {
    %c0_i32 = arith.constant 0 : i32
    %c0_i32_0 = arith.constant 0 : i32
    %c0_i32_1 = arith.constant 0 : i32
    %c0_i32_2 = arith.constant 0 : i32
    return %c0_i32, %c0_i32_0, %c0_i32_1 : i32, i32, i32
  }
  func.func @transform_10(%arg0: i32) -> (i32, i32, i32) {
    %c0_i32 = arith.constant 0 : i32
    %c0_i32_0 = arith.constant 0 : i32
    %c0_i32_1 = arith.constant 0 : i32
    %c0_i32_2 = arith.constant 0 : i32
    return %c0_i32, %c0_i32_0, %c0_i32_1 : i32, i32, i32
  }
  func.func @transform_11(%arg0: i32) -> (i32, i32, i32) {
    %c0_i32 = arith.constant 0 : i32
    %c0_i32_0 = arith.constant 0 : i32
    %c0_i32_1 = arith.constant 0 : i32
    %c0_i32_2 = arith.constant 0 : i32
    return %c0_i32, %c0_i32_0, %c0_i32_1 : i32, i32, i32
  }
  func.func @transform_12(%arg0: i32) -> (i32, i32, i32) {
    %c0_i32 = arith.constant 0 : i32
    %c0_i32_0 = arith.constant 0 : i32
    %c0_i32_1 = arith.constant 0 : i32
    %c0_i32_2 = arith.constant 0 : i32
    return %c0_i32, %c0_i32_0, %c0_i32_1 : i32, i32, i32
  }
  func.func @transform_13(%arg0: i32) -> (i32, i32, i32) {
    %c0_i32 = arith.constant 0 : i32
    %c0_i32_0 = arith.constant 0 : i32
    %c0_i32_1 = arith.constant 0 : i32
    %c0_i32_2 = arith.constant 0 : i32
    return %c0_i32, %c0_i32_0, %c0_i32_1 : i32, i32, i32
  }
  func.func @transform_14(%arg0: i32) -> (i32, i32, i32) {
    %c0_i32 = arith.constant 0 : i32
    %c0_i32_0 = arith.constant 0 : i32
    %c0_i32_1 = arith.constant 0 : i32
    %c0_i32_2 = arith.constant 0 : i32
    return %c0_i32, %c0_i32_0, %c0_i32_1 : i32, i32, i32
  }
  func.func @transform_15(%arg0: i32) -> (i32, i32, i32) {
    %c0_i32 = arith.constant 0 : i32
    %c0_i32_0 = arith.constant 0 : i32
    %c0_i32_1 = arith.constant 0 : i32
    %c0_i32_2 = arith.constant 0 : i32
    return %c0_i32, %c0_i32_0, %c0_i32_1 : i32, i32, i32
  }
  func.func @transform_16(%arg0: i32) -> (i32, i32, i32) {
    %c0_i32 = arith.constant 0 : i32
    %c0_i32_0 = arith.constant 0 : i32
    %c0_i32_1 = arith.constant 0 : i32
    %c0_i32_2 = arith.constant 0 : i32
    return %c0_i32, %c0_i32_0, %c0_i32_1 : i32, i32, i32
  }
  func.func @transform_17(%arg0: i32) -> (i32, i32, i32) {
    %c0_i32 = arith.constant 0 : i32
    %c0_i32_0 = arith.constant 0 : i32
    %c0_i32_1 = arith.constant 0 : i32
    %c0_i32_2 = arith.constant 0 : i32
    return %c0_i32, %c0_i32_0, %c0_i32_1 : i32, i32, i32
  }
  func.func @transform_18(%arg0: i32) -> (i32, i32, i32) {
    %c0_i32 = arith.constant 0 : i32
    %c0_i32_0 = arith.constant 0 : i32
    %c0_i32_1 = arith.constant 0 : i32
    %c0_i32_2 = arith.constant 0 : i32
    return %c0_i32, %c0_i32_0, %c0_i32_1 : i32, i32, i32
  }
  func.func @transform_19(%arg0: i32) -> (i32, i32) {
    %c0_i32 = arith.constant 0 : i32
    %c0_i32_0 = arith.constant 0 : i32
    %c0_i32_1 = arith.constant 0 : i32
    return %c0_i32, %c0_i32_0 : i32, i32
  }
}

</mosaic_0001>

<llo_original>
// kernel: tpu_custom_call.1
$region0: #{tpu_custom_call.1}
  #allocation0 [shape = 'u32[]', space=smem, size = 0x4, offset = 0x4, fixed_abs, tag = 'smem constant byte address 0x4 - core index']
  #allocation1 [shape = 'u32[144,128]{1,0:T(1,128)}', space=vmem, size = 0x12000, scoped, tag = 'internal scratch']
  %s0 = inlined_call_operand.hbm [shape: f32[32,64], index: 0, kind: input, shape index: {}]
  %s1 = inlined_call_operand.hbm [shape: f32[32,64], index: 1, kind: input, shape index: {}]
  %s2 = inlined_call_operand.hbm [shape: f32[256,256], index: 2, kind: input, shape index: {}]
  %s3 = inlined_call_operand.vmem [shape: f32[2,64,64], index: 3, kind: input, shape index: {}]
  %s4 = inlined_call_operand.vmem [shape: f32[2,1,64], index: 4, kind: input, shape index: {}]
  %s5 = inlined_call_operand.vmem [shape: f32[2,64,64], index: 5, kind: input, shape index: {}]
  %s6 = inlined_call_operand.vmem [shape: f32[2,1,64], index: 6, kind: input, shape index: {}]
  %s7 = inlined_call_operand.vmem [shape: f32[2,64,64], index: 7, kind: input, shape index: {}]
  %s8 = inlined_call_operand.vmem [shape: f32[2,1,64], index: 8, kind: input, shape index: {}]
  %s9 = inlined_call_operand.hbm [shape: f32[2,64,64], index: 9, kind: input, shape index: {}]
  %s10 = inlined_call_operand.vmem [shape: f32[2,1,64], index: 10, kind: input, shape index: {}]
  %s11 = inlined_call_operand.hbm [shape: f32[2,64,128], index: 11, kind: input, shape index: {}]
  %s12 = inlined_call_operand.vmem [shape: f32[2,1,128], index: 12, kind: input, shape index: {}]
  %s13 = inlined_call_operand.vmem [shape: f32[2,128,64], index: 13, kind: input, shape index: {}]
  %s14 = inlined_call_operand.vmem [shape: f32[2,1,64], index: 14, kind: input, shape index: {}]
  %s15 = inlined_call_operand.vmem [shape: f32[2,1,64], index: 15, kind: input, shape index: {}]
  %s16 = inlined_call_operand.vmem [shape: f32[2,1,64], index: 16, kind: input, shape index: {}]
  %s17 = inlined_call_operand.vmem [shape: f32[2,1,64], index: 17, kind: input, shape index: {}]
  %s18 = inlined_call_operand.vmem [shape: f32[2,1,64], index: 18, kind: input, shape index: {}]
  %s19 = inlined_call_operand.hbm [shape: f32[16,128], index: 19, kind: output, shape index: {}]
  %s20 = sld [smem:[#allocation0]]
  $region106: #{tpu_custom_call.1} parent=0
    _
  %s22 = ssub.s32 1, %s20
  %s23 = scalar_select 0, %s22, %s20
  $region1: #{tpu_custom_call.1} parent=0
    #allocation2 [shape = 'u8[16384]{0}', space=vmem, size = 0x4000, scoped, tag = 'input window, operand 0, single buffered']
    #allocation3 [shape = 's32[1]{0}', space=sflag, size = 0x4, scoped, tag = 'scoped memory for tpu_custom_call.1']
    #allocation4 [shape = 's32[1]{0}', space=sflag, size = 0x4, scoped, tag = 'scoped memory for tpu_custom_call.1']
    #allocation5 [shape = 'u8[16384]{0}', space=vmem, size = 0x4000, scoped, tag = 'input window, operand 1, single buffered']
    #allocation6 [shape = 's32[1]{0}', space=sflag, size = 0x4, scoped, tag = 'scoped memory for tpu_custom_call.1']
    #allocation7 [shape = 'u8[262144]{0}', space=vmem, size = 0x40000, scoped, tag = 'input window, operand 2, single buffered']
    #allocation8 [shape = 'u8[65536]{0}', space=vmem, size = 0x10000, scoped, tag = 'input window, operand 9, single buffered']
    #allocation9 [shape = 's32[1]{0}', space=sflag, size = 0x4, scoped, tag = 'scoped memory for tpu_custom_call.1']
    #allocation10 [shape = 'u8[65536]{0}', space=vmem, size = 0x10000, scoped, tag = 'input window, operand 11, single buffered']
    #allocation11 [shape = 'u8[8192]{0}', space=vmem, size = 0x2000, scoped, tag = 'output window, operand 0, single buffered']
    %24 = vsyncpa [#allocation3], 0
    %25 = vsyncpa [#allocation6], 0
    %26 = vsyncpa [#allocation9], 0
    %27 = vsyncpa [#allocation4], 0
    // Predicated region
    $region2: #{tpu_custom_call.1} parent=1 // pred_check
      _
    $region3: #{tpu_custom_call.1} parent=1 // pred_check_branch
      %29 = sbr.rel (0) target = $region5
    $region4: #{tpu_custom_call.1} parent=1 // pred_region
      %s31 = ssub.s32 512, 512
      %32 = vsyncadd [#allocation3], %s31
      %s33 = sshll.u32 [#allocation2], 4
      %s34 = int_to_ptr.vmem [resolvable:$true] %s33
      %39 = dma.hbm_to_vmem [thread:$0]  %s0, 512, %s34, [#allocation3], 128, 128, 8
    $region5: #{tpu_custom_call.1} parent=1 // pred_fallthru
      _
    // Predicated region
    $region6: #{tpu_custom_call.1} parent=1 // pred_check
      _
    $region7: #{tpu_custom_call.1} parent=1 // pred_check_branch
      %41 = sbr.rel (0) target = $region9
    $region8: #{tpu_custom_call.1} parent=1 // pred_region
      %s43 = ssub.s32 512, 512
      %44 = vsyncadd [#allocation6], %s43
      %s45 = sshll.u32 [#allocation5], 4
      %s46 = int_to_ptr.vmem [resolvable:$true] %s45
      %51 = dma.hbm_to_vmem [thread:$0]  %s1, 512, %s46, [#allocation6], 128, 128, 8
    $region9: #{tpu_custom_call.1} parent=1 // pred_fallthru
      _
    // Predicated region
    $region10: #{tpu_custom_call.1} parent=1 // pred_check
      _
    $region11: #{tpu_custom_call.1} parent=1 // pred_check_branch
      %53 = sbr.rel (0) target = $region13
    $region12: #{tpu_custom_call.1} parent=1 // pred_region
      %s55 = ssub.s32 8192, 8192
      %56 = vsyncadd [#allocation6], %s55
      %s57 = sshll.u32 [#allocation7], 4
      %s58 = int_to_ptr.vmem [resolvable:$true] %s57
      %63 = dma.hbm_to_vmem [thread:$0]  %s2, 8192, %s58, [#allocation6], 256, 256, 16
    $region13: #{tpu_custom_call.1} parent=1 // pred_fallthru
      _
    // Predicated region
    $region14: #{tpu_custom_call.1} parent=1 // pred_check
      _
    $region15: #{tpu_custom_call.1} parent=1 // pred_check_branch
      %65 = sbr.rel (0) target = $region17
    $region16: #{tpu_custom_call.1} parent=1 // pred_region
      _
    $region17: #{tpu_custom_call.1} parent=1 // pred_fallthru
      _
    // Predicated region
    $region18: #{tpu_custom_call.1} parent=1 // pred_check
      _
    $region19: #{tpu_custom_call.1} parent=1 // pred_check_branch
      %67 = sbr.rel (0) target = $region21
    $region20: #{tpu_custom_call.1} parent=1 // pred_region
      _
    $region21: #{tpu_custom_call.1} parent=1 // pred_fallthru
      _
    // Predicated region
    $region22: #{tpu_custom_call.1} parent=1 // pred_check
      _
    $region23: #{tpu_custom_call.1} parent=1 // pred_check_branch
      %69 = sbr.rel (0) target = $region25
    $region24: #{tpu_custom_call.1} parent=1 // pred_region
      _
    $region25: #{tpu_custom_call.1} parent=1 // pred_fallthru
      _
    // Predicated region
    $region26: #{tpu_custom_call.1} parent=1 // pred_check
      _
    $region27: #{tpu_custom_call.1} parent=1 // pred_check_branch
      %71 = sbr.rel (0) target = $region29
    $region28: #{tpu_custom_call.1} parent=1 // pred_region
      _
    $region29: #{tpu_custom_call.1} parent=1 // pred_fallthru
      _
    // Predicated region
    $region30: #{tpu_custom_call.1} parent=1 // pred_check
      _
    $region31: #{tpu_custom_call.1} parent=1 // pred_check_branch
      %73 = sbr.rel (0) target = $region33
    $region32: #{tpu_custom_call.1} parent=1 // pred_region
      _
    $region33: #{tpu_custom_call.1} parent=1 // pred_fallthru
      _
    // Predicated region
    $region34: #{tpu_custom_call.1} parent=1 // pred_check
      _
    $region35: #{tpu_custom_call.1} parent=1 // pred_check_branch
      %75 = sbr.rel (0) target = $region37
    $region36: #{tpu_custom_call.1} parent=1 // pred_region
      _
    $region37: #{tpu_custom_call.1} parent=1 // pred_fallthru
      _
    // Predicated region
    $region38: #{tpu_custom_call.1} parent=1 // pred_check
      _
    $region39: #{tpu_custom_call.1} parent=1 // pred_check_branch
      %77 = sbr.rel (0) target = $region41
    $region40: #{tpu_custom_call.1} parent=1 // pred_region
      %s79 = ssub.s32 2048, 2048
      %80 = vsyncadd [#allocation9], %s79
      %s81 = sshll.u32 [#allocation8], 4
      %s82 = int_to_ptr.vmem [resolvable:$true] %s81
      %87 = dma.hbm_to_vmem [thread:$0]  %s9, 2048, %s82, [#allocation9], 128, 128, 8
    $region41: #{tpu_custom_call.1} parent=1 // pred_fallthru
      _
    // Predicated region
    $region42: #{tpu_custom_call.1} parent=1 // pred_check
      _
    $region43: #{tpu_custom_call.1} parent=1 // pred_check_branch
      %89 = sbr.rel (0) target = $region45
    $region44: #{tpu_custom_call.1} parent=1 // pred_region
      _
    $region45: #{tpu_custom_call.1} parent=1 // pred_fallthru
      _
    // Predicated region
    $region46: #{tpu_custom_call.1} parent=1 // pred_check
      _
    $region47: #{tpu_custom_call.1} parent=1 // pred_check_branch
      %91 = sbr.rel (0) target = $region49
    $region48: #{tpu_custom_call.1} parent=1 // pred_region
      %s93 = ssub.s32 2048, 2048
      %94 = vsyncadd [#allocation9], %s93
      %s95 = sshll.u32 [#allocation10], 4
      %s96 = int_to_ptr.vmem [resolvable:$true] %s95
      %101 = dma.hbm_to_vmem [thread:$0]  %s11, 2048, %s96, [#allocation9], 128, 128, 8
    $region49: #{tpu_custom_call.1} parent=1 // pred_fallthru
      _
    // Predicated region
    $region50: #{tpu_custom_call.1} parent=1 // pred_check
      _
    $region51: #{tpu_custom_call.1} parent=1 // pred_check_branch
      %103 = sbr.rel (0) target = $region53
    $region52: #{tpu_custom_call.1} parent=1 // pred_region
      _
    $region53: #{tpu_custom_call.1} parent=1 // pred_fallthru
      _
    // Predicated region
    $region54: #{tpu_custom_call.1} parent=1 // pred_check
      _
    $region55: #{tpu_custom_call.1} parent=1 // pred_check_branch
      %105 = sbr.rel (0) target = $region57
    $region56: #{tpu_custom_call.1} parent=1 // pred_region
      _
    $region57: #{tpu_custom_call.1} parent=1 // pred_fallthru
      _
    // Predicated region
    $region58: #{tpu_custom_call.1} parent=1 // pred_check
      _
    $region59: #{tpu_custom_call.1} parent=1 // pred_check_branch
      %107 = sbr.rel (0) target = $region61
    $region60: #{tpu_custom_call.1} parent=1 // pred_region
      _
    $region61: #{tpu_custom_call.1} parent=1 // pred_fallthru
      _
    // Predicated region
    $region62: #{tpu_custom_call.1} parent=1 // pred_check
      _
    $region63: #{tpu_custom_call.1} parent=1 // pred_check_branch
      %109 = sbr.rel (0) target = $region65
    $region64: #{tpu_custom_call.1} parent=1 // pred_region
      _
    $region65: #{tpu_custom_call.1} parent=1 // pred_fallthru
      _
    // Predicated region
    $region66: #{tpu_custom_call.1} parent=1 // pred_check
      _
    $region67: #{tpu_custom_call.1} parent=1 // pred_check_branch
      %111 = sbr.rel (0) target = $region69
    $region68: #{tpu_custom_call.1} parent=1 // pred_region
      _
    $region69: #{tpu_custom_call.1} parent=1 // pred_fallthru
      _
    // Predicated region
    $region70: #{tpu_custom_call.1} parent=1 // pred_check
      _
    $region71: #{tpu_custom_call.1} parent=1 // pred_check_branch
      %113 = sbr.rel (0) target = $region73
    $region72: #{tpu_custom_call.1} parent=1 // pred_region
      _
    $region73: #{tpu_custom_call.1} parent=1 // pred_fallthru
      _
    // Predicated region
    $region74: #{tpu_custom_call.1} parent=1 // pred_check
      _
    $region75: #{tpu_custom_call.1} parent=1 // pred_check_branch
      %115 = sbr.rel (0) target = $region77
    $region76: #{tpu_custom_call.1} parent=1 // pred_region
      _
    $region77: #{tpu_custom_call.1} parent=1 // pred_fallthru
      _
    // Predicated region
    $region78: #{tpu_custom_call.1} parent=1 // pred_check
      _
    $region79: #{tpu_custom_call.1} parent=1 // pred_check_branch
      %117 = sbr.rel (0) target = $region81
    $region80: #{tpu_custom_call.1} parent=1 // pred_region
      %118 = dma.done [#allocation3], 512
    $region81: #{tpu_custom_call.1} parent=1 // pred_fallthru
      _
    // Predicated region
    $region82: #{tpu_custom_call.1} parent=1 // pred_check
      _
    $region83: #{tpu_custom_call.1} parent=1 // pred_check_branch
      %120 = sbr.rel (0) target = $region85
    $region84: #{tpu_custom_call.1} parent=1 // pred_region
      %121 = dma.done [#allocation6], 512
    $region85: #{tpu_custom_call.1} parent=1 // pred_fallthru
      _
    // Predicated region
    $region86: #{tpu_custom_call.1} parent=1 // pred_check
      _
    $region87: #{tpu_custom_call.1} parent=1 // pred_check_branch
      %123 = sbr.rel (0) target = $region89
    $region88: #{tpu_custom_call.1} parent=1 // pred_region
      %124 = dma.done [#allocation6], 8192
    $region89: #{tpu_custom_call.1} parent=1 // pred_fallthru
      _
    // Predicated region
    $region90: #{tpu_custom_call.1} parent=1 // pred_check
      _
    $region91: #{tpu_custom_call.1} parent=1 // pred_check_branch
      %126 = sbr.rel (0) target = $region93
    $region92: #{tpu_custom_call.1} parent=1 // pred_region
      %127 = dma.done [#allocation9], 2048
    $region93: #{tpu_custom_call.1} parent=1 // pred_fallthru
      _
    // Predicated region
    $region94: #{tpu_custom_call.1} parent=1 // pred_check
      _
    $region95: #{tpu_custom_call.1} parent=1 // pred_check_branch
      %129 = sbr.rel (0) target = $region97
    $region96: #{tpu_custom_call.1} parent=1 // pred_region
      %130 = dma.done [#allocation9], 2048
    $region97: #{tpu_custom_call.1} parent=1 // pred_fallthru
      _
    %v131 = vld [vmem:[#allocation2] sm:$0xff]
    %v132 = vld [vmem:[#allocation2 + $0x8] sm:$0xff]
    %v133 = vld [vmem:[#allocation2 + $0x10] sm:$0xff]
    %v134 = vld [vmem:[#allocation2 + $0x18] sm:$0xff]
    %v135 = vld [vmem:[#allocation5] sm:$0xff]
    %v136 = vld [vmem:[#allocation5 + $0x8] sm:$0xff]
    %v137 = vld [vmem:[#allocation5 + $0x10] sm:$0xff]
    %v138 = vld [vmem:[#allocation5 + $0x18] sm:$0xff]
    %v139 = vadd.f32 %v131, %v135
    %v140 = vadd.f32 %v132, %v136
    %v141 = vadd.f32 %v133, %v137
    %v142 = vadd.f32 %v134, %v138
    %v143 = vld [vmem:[#allocation7] sm:$0xff]
    %v144 = vld [vmem:[#allocation7 + $0x8] sm:$0xff]
    %v145 = vld [vmem:[#allocation7 + $0x10] sm:$0xff]
    %v146 = vld [vmem:[#allocation7 + $0x18] sm:$0xff]
    %v147 = vld [vmem:[#allocation7 + $0x20] sm:$0xff]
    %v148 = vld [vmem:[#allocation7 + $0x28] sm:$0xff]
    %v149 = vld [vmem:[#allocation7 + $0x30] sm:$0xff]
    %v150 = vld [vmem:[#allocation7 + $0x38] sm:$0xff]
    %v151 = vld [vmem:[#allocation7 + $0x40] sm:$0xff]
    %v152 = vld [vmem:[#allocation7 + $0x48] sm:$0xff]
    %v153 = vld [vmem:[#allocation7 + $0x50] sm:$0xff]
    %v154 = vld [vmem:[#allocation7 + $0x58] sm:$0xff]
    %v155 = vld [vmem:[#allocation7 + $0x60] sm:$0xff]
    %v156 = vld [vmem:[#allocation7 + $0x68] sm:$0xff]
    %v157 = vld [vmem:[#allocation7 + $0x70] sm:$0xff]
    %v158 = vld [vmem:[#allocation7 + $0x78] sm:$0xff]
    %v159 = vld [vmem:[#allocation7 + $0x80] sm:$0xff]
    %v160 = vld [vmem:[#allocation7 + $0x88] sm:$0xff]
    %v161 = vld [vmem:[#allocation7 + $0x90] sm:$0xff]
    %v162 = vld [vmem:[#allocation7 + $0x98] sm:$0xff]
    %v163 = vld [vmem:[#allocation7 + $0xa0] sm:$0xff]
    %v164 = vld [vmem:[#allocation7 + $0xa8] sm:$0xff]
    %v165 = vld [vmem:[#allocation7 + $0xb0] sm:$0xff]
    %v166 = vld [vmem:[#allocation7 + $0xb8] sm:$0xff]
    %v167 = vld [vmem:[#allocation7 + $0xc0] sm:$0xff]
    %v168 = vld [vmem:[#allocation7 + $0xc8] sm:$0xff]
    %v169 = vld [vmem:[#allocation7 + $0xd0] sm:$0xff]
    %v170 = vld [vmem:[#allocation7 + $0xd8] sm:$0xff]
    %v171 = vld [vmem:[#allocation7 + $0xe0] sm:$0xff]
    %v172 = vld [vmem:[#allocation7 + $0xe8] sm:$0xff]
    %v173 = vld [vmem:[#allocation7 + $0xf0] sm:$0xff]
    %v174 = vld [vmem:[#allocation7 + $0xf8] sm:$0xff]
    %v175 = vld [vmem:[#allocation7 + $0x100] sm:$0xff]
    %v176 = vld [vmem:[#allocation7 + $0x108] sm:$0xff]
    %v177 = vld [vmem:[#allocation7 + $0x110] sm:$0xff]
    %v178 = vld [vmem:[#allocation7 + $0x118] sm:$0xff]
    %v179 = vld [vmem:[#allocation7 + $0x120] sm:$0xff]
    %v180 = vld [vmem:[#allocation7 + $0x128] sm:$0xff]
    %v181 = vld [vmem:[#allocation7 + $0x130] sm:$0xff]
    %v182 = vld [vmem:[#allocation7 + $0x138] sm:$0xff]
    %v183 = vld [vmem:[#allocation7 + $0x140] sm:$0xff]
    %v184 = vld [vmem:[#allocation7 + $0x148] sm:$0xff]
    %v185 = vld [vmem:[#allocation7 + $0x150] sm:$0xff]
    %v186 = vld [vmem:[#allocation7 + $0x158] sm:$0xff]
    %v187 = vld [vmem:[#allocation7 + $0x160] sm:$0xff]
    %v188 = vld [vmem:[#allocation7 + $0x168] sm:$0xff]
    %v189 = vld [vmem:[#allocation7 + $0x170] sm:$0xff]
    %v190 = vld [vmem:[#allocation7 + $0x178] sm:$0xff]
    %v191 = vld [vmem:[#allocation7 + $0x180] sm:$0xff]
    %v192 = vld [vmem:[#allocation7 + $0x188] sm:$0xff]
    %v193 = vld [vmem:[#allocation7 + $0x190] sm:$0xff]
    %v194 = vld [vmem:[#allocation7 + $0x198] sm:$0xff]
    %v195 = vld [vmem:[#allocation7 + $0x1a0] sm:$0xff]
    %v196 = vld [vmem:[#allocation7 + $0x1a8] sm:$0xff]
    %v197 = vld [vmem:[#allocation7 + $0x1b0] sm:$0xff]
    %v198 = vld [vmem:[#allocation7 + $0x1b8] sm:$0xff]
    %v199 = vld [vmem:[#allocation7 + $0x1c0] sm:$0xff]
    %v200 = vld [vmem:[#allocation7 + $0x1c8] sm:$0xff]
    %v201 = vld [vmem:[#allocation7 + $0x1d0] sm:$0xff]
    %v202 = vld [vmem:[#allocation7 + $0x1d8] sm:$0xff]
    %v203 = vld [vmem:[#allocation7 + $0x1e0] sm:$0xff]
    %v204 = vld [vmem:[#allocation7 + $0x1e8] sm:$0xff]
    %v205 = vld [vmem:[#allocation7 + $0x1f0] sm:$0xff]
    %v206 = vld [vmem:[#allocation7 + $0x1f8] sm:$0xff]
    %v207 = vld [vmem:[%s3] sm:$0xff]
    %v208 = vld [vmem:[%s3 + $0x8] sm:$0xff]
    %v209 = vld [vmem:[%s3 + $0x10] sm:$0xff]
    %v210 = vld [vmem:[%s3 + $0x18] sm:$0xff]
    %v211 = vld [vmem:[%s3 + $0x20] sm:$0xff]
    %v212 = vld [vmem:[%s3 + $0x28] sm:$0xff]
    %v213 = vld [vmem:[%s3 + $0x30] sm:$0xff]
    %v214 = vld [vmem:[%s3 + $0x38] sm:$0xff]
    %v215 = vld [vmem:[%s4] sm:$0x1]
    %v217 = vlaneseq
    %v218 = vshrl.u32 %v217, 7
    %v219 = vsub.s32 0, %v218
    %v220 = vrot.slane %v215, %v219
    %vm222 = vcmask 523264
    %v224 = vsel %vm222, %v139, 0
    %v227 = vsel %vm222, %v140, 0
    %v230 = vsel %vm222, %v141, 0
    %v233 = vsel %vm222, %v142, 0
    %235 = vmatprep.subr.mxu0 0.0
    %236 = vmatpush1.msra.mxu0 %v207
    %237 = vmatprep.subr.mxu0 0.0
    %238 = vmatpush1.msra.mxu0 %v208
    %239 = vmatprep.subr.mxu0 0.0
    %240 = vmatpush1.msra.mxu0 %v209
    %241 = vmatprep.subr.mxu0 0.0
    %242 = vmatpush1.msra.mxu0 %v210
    %243 = vmatprep.subr.mxu0 0.0
    %244 = vmatpush1.msra.mxu0 %v211
    %245 = vmatprep.subr.mxu0 0.0
    %246 = vmatpush1.msra.mxu0 %v212
    %247 = vmatprep.subr.mxu0 0.0
    %248 = vmatpush1.msra.mxu0 %v213
    %249 = vmatprep.subr.mxu0 0.0
    %250 = vmatpush1.msra.mxu0 %v214
    %251 = vmatprep.subr.mxu0 0.0
    %252 = vmatpush1.msra.mxu0 0.0
    %253 = vmatprep.subr.mxu0 0.0
    %254 = vmatpush1.msra.mxu0 0.0
    %255 = vmatprep.subr.mxu0 0.0
    %256 = vmatpush1.msra.mxu0 0.0
    %257 = vmatprep.subr.mxu0 0.0
    %258 = vmatpush1.msra.mxu0 0.0
    %259 = vmatprep.subr.mxu0 0.0
    %260 = vmatpush1.msra.mxu0 0.0
    %261 = vmatprep.subr.mxu0 0.0
    %262 = vmatpush1.msra.mxu0 0.0
    %263 = vmatprep.subr.mxu0 0.0
    %264 = vmatpush1.msra.mxu0 0.0
    %265 = vmatprep.subr.mxu0 0.0
    %266 = vmatpush1.msra.mxu0 0.0
    %267 = vmatprep.subr.mxu0 0.0
    %268 = vmatpush1.msra.mxu0 0.0
    %269 = vmatprep.subr.mxu0 0.0
    %270 = vmatpush1.msra.mxu0 0.0
    %271 = vmatprep.subr.mxu0 0.0
    %272 = vmatpush1.msra.mxu0 0.0
    %273 = vmatprep.subr.mxu0 0.0
    %274 = vmatpush1.msra.mxu0 0.0
    %275 = vmatprep.subr.mxu0 0.0
    %276 = vmatpush1.msra.mxu0 0.0
    %277 = vmatprep.subr.mxu0 0.0
    %278 = vmatpush1.msra.mxu0 0.0
    %279 = vmatprep.subr.mxu0 0.0
    %280 = vmatpush1.msra.mxu0 0.0
    %281 = vmatprep.subr.mxu0 0.0
    %282 = vmatpush1.msra.mxu0 0.0
    %283 = vmatprep.subr.mxu0 0.0
    %284 = vmatpush1.msra.mxu0 0.0
    %285 = vmatprep.subr.mxu0 0.0
    %286 = vmatpush1.msra.mxu0 0.0
    %287 = vmatprep.subr.mxu0 0.0
    %288 = vmatpush1.msra.mxu0 0.0
    %289 = vmatprep.subr.mxu0 0.0
    %290 = vmatpush1.msra.mxu0 0.0
    %291 = vmatprep.subr.mxu0 0.0
    %292 = vmatpush1.msra.mxu0 0.0
    %293 = vmatprep.subr.mxu0 0.0
    %294 = vmatpush1.msra.mxu0 0.0
    %295 = vmatprep.subr.mxu0 0.0
    %296 = vmatpush1.msra.mxu0 0.0
    %297 = vmatprep.subr.mxu0 0.0
    %298 = vmatpush1.msra.mxu0 0.0
    %299 = vmatprep.mubr.f32.mxu0 0.0
    %300 = vmatmul.mubr.f32.gmra.mrb[0].mxu0 %v224
    %v301 = vpop.f32.mrb[0].mxu0
    %v302 = vadd.f32 %v220, %v301
    %v303 = vpop.f32.mrb[0].mxu0
    %304 = vmatprep.mubr.f32.mxu0 0.0
    %305 = vmatmul.mubr.f32.gmra.mrb[0].mxu0 %v227
    %v306 = vpop.f32.mrb[0].mxu0
    %v307 = vadd.f32 %v220, %v306
    %v308 = vpop.f32.mrb[0].mxu0
    %309 = vmatprep.mubr.f32.mxu0 0.0
    %310 = vmatmul.mubr.f32.gmra.mrb[0].mxu0 %v230
    %v311 = vpop.f32.mrb[0].mxu0
    %v312 = vadd.f32 %v220, %v311
    %v313 = vpop.f32.mrb[0].mxu0
    %314 = vmatprep.mubr.f32.mxu0 0.0
    %315 = vmatmul.mubr.f32.gmra.mrb[0].mxu0 %v233
    %v316 = vpop.f32.mrb[0].mxu0
    %v317 = vadd.f32 %v220, %v316
    %v318 = vpop.f32.mrb[0].mxu0
    %319 = vdwg.mxu0
    %v320 = vmul.f32 %v302, 0.35355338
    %v321 = vmul.f32 %v307, 0.35355338
    %v322 = vmul.f32 %v312, 0.35355338
    %v323 = vmul.f32 %v317, 0.35355338
    %v324 = vld [vmem:[%s5] sm:$0xff]
    %v325 = vld [vmem:[%s5 + $0x8] sm:$0xff]
    %v326 = vld [vmem:[%s5 + $0x10] sm:$0xff]
    %v327 = vld [vmem:[%s5 + $0x18] sm:$0xff]
    %v328 = vld [vmem:[%s5 + $0x20] sm:$0xff]
    %v329 = vld [vmem:[%s5 + $0x28] sm:$0xff]
    %v330 = vld [vmem:[%s5 + $0x30] sm:$0xff]
    %v331 = vld [vmem:[%s5 + $0x38] sm:$0xff]
    %v332 = vld [vmem:[%s6] sm:$0x1]
    %v334 = vlaneseq
    %v335 = vshrl.u32 %v334, 7
    %v336 = vsub.s32 0, %v335
    %v337 = vrot.slane %v332, %v336
    %339 = vmatprep.subr.mxu0 0.0
    %340 = vmatpush1.msra.mxu0 %v324
    %341 = vmatprep.subr.mxu0 0.0
    %342 = vmatpush1.msra.mxu0 %v325
    %343 = vmatprep.subr.mxu0 0.0
    %344 = vmatpush1.msra.mxu0 %v326
    %345 = vmatprep.subr.mxu0 0.0
    %346 = vmatpush1.msra.mxu0 %v327
    %347 = vmatprep.subr.mxu0 0.0
    %348 = vmatpush1.msra.mxu0 %v328
    %349 = vmatprep.subr.mxu0 0.0
    %350 = vmatpush1.msra.mxu0 %v329
    %351 = vmatprep.subr.mxu0 0.0
    %352 = vmatpush1.msra.mxu0 %v330
    %353 = vmatprep.subr.mxu0 0.0
    %354 = vmatpush1.msra.mxu0 %v331
    %355 = vmatprep.subr.mxu0 0.0
    %356 = vmatpush1.msra.mxu0 0.0
    %357 = vmatprep.subr.mxu0 0.0
    %358 = vmatpush1.msra.mxu0 0.0
    %359 = vmatprep.subr.mxu0 0.0
    %360 = vmatpush1.msra.mxu0 0.0
    %361 = vmatprep.subr.mxu0 0.0
    %362 = vmatpush1.msra.mxu0 0.0
    %363 = vmatprep.subr.mxu0 0.0
    %364 = vmatpush1.msra.mxu0 0.0
    %365 = vmatprep.subr.mxu0 0.0
    %366 = vmatpush1.msra.mxu0 0.0
    %367 = vmatprep.subr.mxu0 0.0
    %368 = vmatpush1.msra.mxu0 0.0
    %369 = vmatprep.subr.mxu0 0.0
    %370 = vmatpush1.msra.mxu0 0.0
    %371 = vmatprep.subr.mxu0 0.0
    %372 = vmatpush1.msra.mxu0 0.0
    %373 = vmatprep.subr.mxu0 0.0
    %374 = vmatpush1.msra.mxu0 0.0
    %375 = vmatprep.subr.mxu0 0.0
    %376 = vmatpush1.msra.mxu0 0.0
    %377 = vmatprep.subr.mxu0 0.0
    %378 = vmatpush1.msra.mxu0 0.0
    %379 = vmatprep.subr.mxu0 0.0
    %380 = vmatpush1.msra.mxu0 0.0
    %381 = vmatprep.subr.mxu0 0.0
    %382 = vmatpush1.msra.mxu0 0.0
    %383 = vmatprep.subr.mxu0 0.0
    %384 = vmatpush1.msra.mxu0 0.0
    %385 = vmatprep.subr.mxu0 0.0
    %386 = vmatpush1.msra.mxu0 0.0
    %387 = vmatprep.subr.mxu0 0.0
    %388 = vmatpush1.msra.mxu0 0.0
    %389 = vmatprep.subr.mxu0 0.0
    %390 = vmatpush1.msra.mxu0 0.0
    %391 = vmatprep.subr.mxu0 0.0
    %392 = vmatpush1.msra.mxu0 0.0
    %393 = vmatprep.subr.mxu0 0.0
    %394 = vmatpush1.msra.mxu0 0.0
    %395 = vmatprep.subr.mxu0 0.0
    %396 = vmatpush1.msra.mxu0 0.0
    %397 = vmatprep.subr.mxu0 0.0
    %398 = vmatpush1.msra.mxu0 0.0
    %399 = vmatprep.subr.mxu0 0.0
    %400 = vmatpush1.msra.mxu0 0.0
    %401 = vmatprep.subr.mxu0 0.0
    %402 = vmatpush1.msra.mxu0 0.0
    %403 = vmatprep.mubr.f32.mxu0 0.0
    %404 = vmatmul.mubr.f32.gmra.mrb[0].mxu0 %v224
    %v405 = vpop.f32.mrb[0].mxu0
    %v406 = vadd.f32 %v337, %v405
    %v407 = vpop.f32.mrb[0].mxu0
    %408 = vmatprep.mubr.f32.mxu0 0.0
    %409 = vmatmul.mubr.f32.gmra.mrb[0].mxu0 %v227
    %v410 = vpop.f32.mrb[0].mxu0
    %v411 = vadd.f32 %v337, %v410
    %v412 = vpop.f32.mrb[0].mxu0
    %413 = vmatprep.mubr.f32.mxu0 0.0
    %414 = vmatmul.mubr.f32.gmra.mrb[0].mxu0 %v230
    %v415 = vpop.f32.mrb[0].mxu0
    %v416 = vadd.f32 %v337, %v415
    %v417 = vpop.f32.mrb[0].mxu0
    %418 = vmatprep.mubr.f32.mxu0 0.0
    %419 = vmatmul.mubr.f32.gmra.mrb[0].mxu0 %v233
    %v420 = vpop.f32.mrb[0].mxu0
    %v421 = vadd.f32 %v337, %v420
    %v422 = vpop.f32.mrb[0].mxu0
    %423 = vdwg.mxu0
    %v424 = vld [vmem:[%s7] sm:$0xff]
    %v425 = vld [vmem:[%s7 + $0x8] sm:$0xff]
    %v426 = vld [vmem:[%s7 + $0x10] sm:$0xff]
    %v427 = vld [vmem:[%s7 + $0x18] sm:$0xff]
    %v428 = vld [vmem:[%s7 + $0x20] sm:$0xff]
    %v429 = vld [vmem:[%s7 + $0x28] sm:$0xff]
    %v430 = vld [vmem:[%s7 + $0x30] sm:$0xff]
    %v431 = vld [vmem:[%s7 + $0x38] sm:$0xff]
    %v432 = vld [vmem:[%s8] sm:$0x1]
    %v434 = vlaneseq
    %v435 = vshrl.u32 %v434, 7
    %v436 = vsub.s32 0, %v435
    %v437 = vrot.slane %v432, %v436
    %439 = vmatprep.subr.mxu0 0.0
    %440 = vmatpush1.msra.mxu0 %v424
    %441 = vmatprep.subr.mxu0 0.0
    %442 = vmatpush1.msra.mxu0 %v425
    %443 = vmatprep.subr.mxu0 0.0
    %444 = vmatpush1.msra.mxu0 %v426
    %445 = vmatprep.subr.mxu0 0.0
    %446 = vmatpush1.msra.mxu0 %v427
    %447 = vmatprep.subr.mxu0 0.0
    %448 = vmatpush1.msra.mxu0 %v428
    %449 = vmatprep.subr.mxu0 0.0
    %450 = vmatpush1.msra.mxu0 %v429
    %451 = vmatprep.subr.mxu0 0.0
    %452 = vmatpush1.msra.mxu0 %v430
    %453 = vmatprep.subr.mxu0 0.0
    %454 = vmatpush1.msra.mxu0 %v431
    %455 = vmatprep.subr.mxu0 0.0
    %456 = vmatpush1.msra.mxu0 0.0
    %457 = vmatprep.subr.mxu0 0.0
    %458 = vmatpush1.msra.mxu0 0.0
    %459 = vmatprep.subr.mxu0 0.0
    %460 = vmatpush1.msra.mxu0 0.0
    %461 = vmatprep.subr.mxu0 0.0
    %462 = vmatpush1.msra.mxu0 0.0
    %463 = vmatprep.subr.mxu0 0.0
    %464 = vmatpush1.msra.mxu0 0.0
    %465 = vmatprep.subr.mxu0 0.0
    %466 = vmatpush1.msra.mxu0 0.0
    %467 = vmatprep.subr.mxu0 0.0
    %468 = vmatpush1.msra.mxu0 0.0
    %469 = vmatprep.subr.mxu0 0.0
    %470 = vmatpush1.msra.mxu0 0.0
    %471 = vmatprep.subr.mxu0 0.0
    %472 = vmatpush1.msra.mxu0 0.0
    %473 = vmatprep.subr.mxu0 0.0
    %474 = vmatpush1.msra.mxu0 0.0
    %475 = vmatprep.subr.mxu0 0.0
    %476 = vmatpush1.msra.mxu0 0.0
    %477 = vmatprep.subr.mxu0 0.0
    %478 = vmatpush1.msra.mxu0 0.0
    %479 = vmatprep.subr.mxu0 0.0
    %480 = vmatpush1.msra.mxu0 0.0
    %481 = vmatprep.subr.mxu0 0.0
    %482 = vmatpush1.msra.mxu0 0.0
    %483 = vmatprep.subr.mxu0 0.0
    %484 = vmatpush1.msra.mxu0 0.0
    %485 = vmatprep.subr.mxu0 0.0
    %486 = vmatpush1.msra.mxu0 0.0
    %487 = vmatprep.subr.mxu0 0.0
    %488 = vmatpush1.msra.mxu0 0.0
    %489 = vmatprep.subr.mxu0 0.0
    %490 = vmatpush1.msra.mxu0 0.0
    %491 = vmatprep.subr.mxu0 0.0
    %492 = vmatpush1.msra.mxu0 0.0
    %493 = vmatprep.subr.mxu0 0.0
    %494 = vmatpush1.msra.mxu0 0.0
    %495 = vmatprep.subr.mxu0 0.0
    %496 = vmatpush1.msra.mxu0 0.0
    %497 = vmatprep.subr.mxu0 0.0
    %498 = vmatpush1.msra.mxu0 0.0
    %499 = vmatprep.subr.mxu0 0.0
    %500 = vmatpush1.msra.mxu0 0.0
    %501 = vmatprep.subr.mxu0 0.0
    %502 = vmatpush1.msra.mxu0 0.0
    %503 = vmatprep.mubr.f32.mxu0 0.0
    %504 = vmatmul.mubr.f32.gmra.mrb[0].mxu0 %v224
    %v505 = vpop.f32.mrb[0].mxu0
    %v506 = vadd.f32 %v437, %v505
    %v507 = vpop.f32.mrb[0].mxu0
    %508 = vmatprep.mubr.f32.mxu0 0.0
    %509 = vmatmul.mubr.f32.gmra.mrb[0].mxu0 %v227
    %v510 = vpop.f32.mrb[0].mxu0
    %v511 = vadd.f32 %v437, %v510
    %v512 = vpop.f32.mrb[0].mxu0
    %513 = vmatprep.mubr.f32.mxu0 0.0
    %514 = vmatmul.mubr.f32.gmra.mrb[0].mxu0 %v230
    %v515 = vpop.f32.mrb[0].mxu0
    %v516 = vadd.f32 %v437, %v515
    %v517 = vpop.f32.mrb[0].mxu0
    %518 = vmatprep.mubr.f32.mxu0 0.0
    %519 = vmatmul.mubr.f32.gmra.mrb[0].mxu0 %v233
    %v520 = vpop.f32.mrb[0].mxu0
    %v521 = vadd.f32 %v437, %v520
    %v522 = vpop.f32.mrb[0].mxu0
    %523 = vdwg.mxu0
    %528 = vrot.lane.b32.xlu0 %v320, 120
    %v529 = vpop.permute.xlu0 %528
    %530 = vrot.lane.b32.xlu0 %v321, 120
    %v531 = vpop.permute.xlu0 %530
    %532 = vrot.lane.b32.xlu0 %v322, 120
    %v533 = vpop.permute.xlu0 %532
    %534 = vrot.lane.b32.xlu0 %v323, 120
    %v535 = vpop.permute.xlu0 %534
    %536 = vrot.lane.b32.xlu0 %v320, 112
    %v537 = vpop.permute.xlu0 %536
    %538 = vrot.lane.b32.xlu0 %v321, 112
    %v539 = vpop.permute.xlu0 %538
    %540 = vrot.lane.b32.xlu0 %v322, 112
    %v541 = vpop.permute.xlu0 %540
    %542 = vrot.lane.b32.xlu0 %v323, 112
    %v543 = vpop.permute.xlu0 %542
    %544 = vrot.lane.b32.xlu0 %v320, 104
    %v545 = vpop.permute.xlu0 %544
    %546 = vrot.lane.b32.xlu0 %v321, 104
    %v547 = vpop.permute.xlu0 %546
    %548 = vrot.lane.b32.xlu0 %v322, 104
    %v549 = vpop.permute.xlu0 %548
    %550 = vrot.lane.b32.xlu0 %v323, 104
    %v551 = vpop.permute.xlu0 %550
    %552 = vrot.lane.b32.xlu0 %v320, 96
    %v553 = vpop.permute.xlu0 %552
    %554 = vrot.lane.b32.xlu0 %v321, 96
    %v555 = vpop.permute.xlu0 %554
    %556 = vrot.lane.b32.xlu0 %v322, 96
    %v557 = vpop.permute.xlu0 %556
    %558 = vrot.lane.b32.xlu0 %v323, 96
    %v559 = vpop.permute.xlu0 %558
    %560 = vrot.lane.b32.xlu0 %v320, 88
    %v561 = vpop.permute.xlu0 %560
    %562 = vrot.lane.b32.xlu0 %v321, 88
    %v563 = vpop.permute.xlu0 %562
    %564 = vrot.lane.b32.xlu0 %v322, 88
    %v565 = vpop.permute.xlu0 %564
    %566 = vrot.lane.b32.xlu0 %v323, 88
    %v567 = vpop.permute.xlu0 %566
    %568 = vrot.lane.b32.xlu0 %v320, 80
    %v569 = vpop.permute.xlu0 %568
    %570 = vrot.lane.b32.xlu0 %v321, 80
    %v571 = vpop.permute.xlu0 %570
    %572 = vrot.lane.b32.xlu0 %v322, 80
    %v573 = vpop.permute.xlu0 %572
    %574 = vrot.lane.b32.xlu0 %v323, 80
    %v575 = vpop.permute.xlu0 %574
    %576 = vrot.lane.b32.xlu0 %v320, 72
    %v577 = vpop.permute.xlu0 %576
    %578 = vrot.lane.b32.xlu0 %v321, 72
    %v579 = vpop.permute.xlu0 %578
    %580 = vrot.lane.b32.xlu0 %v322, 72
    %v581 = vpop.permute.xlu0 %580
    %582 = vrot.lane.b32.xlu0 %v323, 72
    %v583 = vpop.permute.xlu0 %582
    %588 = vrot.lane.b32.xlu0 %v406, 120
    %v589 = vpop.permute.xlu0 %588
    %590 = vrot.lane.b32.xlu0 %v411, 120
    %v591 = vpop.permute.xlu0 %590
    %592 = vrot.lane.b32.xlu0 %v416, 120
    %v593 = vpop.permute.xlu0 %592
    %594 = vrot.lane.b32.xlu0 %v421, 120
    %v595 = vpop.permute.xlu0 %594
    %596 = vrot.lane.b32.xlu0 %v406, 112
    %v597 = vpop.permute.xlu0 %596
    %598 = vrot.lane.b32.xlu0 %v411, 112
    %v599 = vpop.permute.xlu0 %598
    %600 = vrot.lane.b32.xlu0 %v416, 112
    %v601 = vpop.permute.xlu0 %600
    %602 = vrot.lane.b32.xlu0 %v421, 112
    %v603 = vpop.permute.xlu0 %602
    %604 = vrot.lane.b32.xlu0 %v406, 104
    %v605 = vpop.permute.xlu0 %604
    %606 = vrot.lane.b32.xlu0 %v411, 104
    %v607 = vpop.permute.xlu0 %606
    %608 = vrot.lane.b32.xlu0 %v416, 104
    %v609 = vpop.permute.xlu0 %608
    %610 = vrot.lane.b32.xlu0 %v421, 104
    %v611 = vpop.permute.xlu0 %610
    %612 = vrot.lane.b32.xlu0 %v406, 96
    %v613 = vpop.permute.xlu0 %612
    %614 = vrot.lane.b32.xlu0 %v411, 96
    %v615 = vpop.permute.xlu0 %614
    %616 = vrot.lane.b32.xlu0 %v416, 96
    %v617 = vpop.permute.xlu0 %616
    %618 = vrot.lane.b32.xlu0 %v421, 96
    %v619 = vpop.permute.xlu0 %618
    %620 = vrot.lane.b32.xlu0 %v406, 88
    %v621 = vpop.permute.xlu0 %620
    %622 = vrot.lane.b32.xlu0 %v411, 88
    %v623 = vpop.permute.xlu0 %622
    %624 = vrot.lane.b32.xlu0 %v416, 88
    %v625 = vpop.permute.xlu0 %624
    %626 = vrot.lane.b32.xlu0 %v421, 88
    %v627 = vpop.permute.xlu0 %626
    %628 = vrot.lane.b32.xlu0 %v406, 80
    %v629 = vpop.permute.xlu0 %628
    %630 = vrot.lane.b32.xlu0 %v411, 80
    %v631 = vpop.permute.xlu0 %630
    %632 = vrot.lane.b32.xlu0 %v416, 80
    %v633 = vpop.permute.xlu0 %632
    %634 = vrot.lane.b32.xlu0 %v421, 80
    %v635 = vpop.permute.xlu0 %634
    %636 = vrot.lane.b32.xlu0 %v406, 72
    %v637 = vpop.permute.xlu0 %636
    %638 = vrot.lane.b32.xlu0 %v411, 72
    %v639 = vpop.permute.xlu0 %638
    %640 = vrot.lane.b32.xlu0 %v416, 72
    %v641 = vpop.permute.xlu0 %640
    %642 = vrot.lane.b32.xlu0 %v421, 72
    %v643 = vpop.permute.xlu0 %642
    %648 = vrot.lane.b32.xlu0 %v506, 120
    %v649 = vpop.permute.xlu0 %648
    %650 = vrot.lane.b32.xlu0 %v511, 120
    %v651 = vpop.permute.xlu0 %650
    %652 = vrot.lane.b32.xlu0 %v516, 120
    %v653 = vpop.permute.xlu0 %652
    %654 = vrot.lane.b32.xlu0 %v521, 120
    %v655 = vpop.permute.xlu0 %654
    %660 = vrot.lane.b32.xlu0 %v506, 112
    %v661 = vpop.permute.xlu0 %660
    %662 = vrot.lane.b32.xlu0 %v511, 112
    %v663 = vpop.permute.xlu0 %662
    %664 = vrot.lane.b32.xlu0 %v516, 112
    %v665 = vpop.permute.xlu0 %664
    %666 = vrot.lane.b32.xlu0 %v521, 112
    %v667 = vpop.permute.xlu0 %666
    %672 = vrot.lane.b32.xlu0 %v506, 104
    %v673 = vpop.permute.xlu0 %672
    %674 = vrot.lane.b32.xlu0 %v511, 104
    %v675 = vpop.permute.xlu0 %674
    %676 = vrot.lane.b32.xlu0 %v516, 104
    %v677 = vpop.permute.xlu0 %676
    %678 = vrot.lane.b32.xlu0 %v521, 104
    %v679 = vpop.permute.xlu0 %678
    %684 = vrot.lane.b32.xlu0 %v506, 96
    %v685 = vpop.permute.xlu0 %684
    %686 = vrot.lane.b32.xlu0 %v511, 96
    %v687 = vpop.permute.xlu0 %686
    %688 = vrot.lane.b32.xlu0 %v516, 96
    %v689 = vpop.permute.xlu0 %688
    %690 = vrot.lane.b32.xlu0 %v521, 96
    %v691 = vpop.permute.xlu0 %690
    %696 = vrot.lane.b32.xlu0 %v506, 88
    %v697 = vpop.permute.xlu0 %696
    %698 = vrot.lane.b32.xlu0 %v511, 88
    %v699 = vpop.permute.xlu0 %698
    %700 = vrot.lane.b32.xlu0 %v516, 88
    %v701 = vpop.permute.xlu0 %700
    %702 = vrot.lane.b32.xlu0 %v521, 88
    %v703 = vpop.permute.xlu0 %702
    %708 = vrot.lane.b32.xlu0 %v506, 80
    %v709 = vpop.permute.xlu0 %708
    %710 = vrot.lane.b32.xlu0 %v511, 80
    %v711 = vpop.permute.xlu0 %710
    %712 = vrot.lane.b32.xlu0 %v516, 80
    %v713 = vpop.permute.xlu0 %712
    %714 = vrot.lane.b32.xlu0 %v521, 80
    %v715 = vpop.permute.xlu0 %714
    %720 = vrot.lane.b32.xlu0 %v506, 72
    %v721 = vpop.permute.xlu0 %720
    %722 = vrot.lane.b32.xlu0 %v511, 72
    %v723 = vpop.permute.xlu0 %722
    %724 = vrot.lane.b32.xlu0 %v516, 72
    %v725 = vpop.permute.xlu0 %724
    %726 = vrot.lane.b32.xlu0 %v521, 72
    %v727 = vpop.permute.xlu0 %726
    %vm732 = vcmask 64512
    %v733 = vsel %vm732, %v320, 0
    %v735 = vsel %vm732, %v321, 0
    %v737 = vsel %vm732, %v322, 0
    %v739 = vsel %vm732, %v323, 0
    %v741 = vsel %vm732, %v529, 0
    %v743 = vsel %vm732, %v531, 0
    %v745 = vsel %vm732, %v533, 0
    %v747 = vsel %vm732, %v535, 0
    %v749 = vsel %vm732, %v537, 0
    %v751 = vsel %vm732, %v539, 0
    %v753 = vsel %vm732, %v541, 0
    %v755 = vsel %vm732, %v543, 0
    %v757 = vsel %vm732, %v545, 0
    %v759 = vsel %vm732, %v547, 0
    %v761 = vsel %vm732, %v549, 0
    %v763 = vsel %vm732, %v551, 0
    %v765 = vsel %vm732, %v553, 0
    %v767 = vsel %vm732, %v555, 0
    %v769 = vsel %vm732, %v557, 0
    %v771 = vsel %vm732, %v559, 0
    %v773 = vsel %vm732, %v561, 0
    %v775 = vsel %vm732, %v563, 0
    %v777 = vsel %vm732, %v565, 0
    %v779 = vsel %vm732, %v567, 0
    %v781 = vsel %vm732, %v569, 0
    %v783 = vsel %vm732, %v571, 0
    %v785 = vsel %vm732, %v573, 0
    %v787 = vsel %vm732, %v575, 0
    %v789 = vsel %vm732, %v577, 0
    %v791 = vsel %vm732, %v579, 0
    %v793 = vsel %vm732, %v581, 0
    %v795 = vsel %vm732, %v583, 0
    %v797 = vsel %vm732, %v406, 0
    %v799 = vsel %vm732, %v411, 0
    %v801 = vsel %vm732, %v416, 0
    %v803 = vsel %vm732, %v421, 0
    %v805 = vsel %vm732, %v589, 0
    %v807 = vsel %vm732, %v591, 0
    %v809 = vsel %vm732, %v593, 0
    %v811 = vsel %vm732, %v595, 0
    %v813 = vsel %vm732, %v597, 0
    %v815 = vsel %vm732, %v599, 0
    %v817 = vsel %vm732, %v601, 0
    %v819 = vsel %vm732, %v603, 0
    %v821 = vsel %vm732, %v605, 0
    %v823 = vsel %vm732, %v607, 0
    %v825 = vsel %vm732, %v609, 0
    %v827 = vsel %vm732, %v611, 0
    %v829 = vsel %vm732, %v613, 0
    %v831 = vsel %vm732, %v615, 0
    %v833 = vsel %vm732, %v617, 0
    %v835 = vsel %vm732, %v619, 0
    %v837 = vsel %vm732, %v621, 0
    %v839 = vsel %vm732, %v623, 0
    %v841 = vsel %vm732, %v625, 0
    %v843 = vsel %vm732, %v627, 0
    %v845 = vsel %vm732, %v629, 0
    %v847 = vsel %vm732, %v631, 0
    %v849 = vsel %vm732, %v633, 0
    %v851 = vsel %vm732, %v635, 0
    %v853 = vsel %vm732, %v637, 0
    %v855 = vsel %vm732, %v639, 0
    %v857 = vsel %vm732, %v641, 0
    %v859 = vsel %vm732, %v643, 0
    %861 = vmatprep.subr.mxu0 0.0
    %862 = vmatpush1.xpose.msra.mxu0 %v797
    %863 = vmatprep.subr.mxu0 0.0
    %864 = vmatpush1.xpose.msra.mxu0 %v799
    %865 = vmatprep.subr.mxu0 0.0
    %866 = vmatpush1.xpose.msra.mxu0 %v801
    %867 = vmatprep.subr.mxu0 0.0
    %868 = vmatpush1.xpose.msra.mxu0 %v803
    %869 = vmatprep.subr.mxu0 0.0
    %870 = vmatpush1.xpose.msra.mxu0 %v805
    %871 = vmatprep.subr.mxu0 0.0
    %872 = vmatpush1.xpose.msra.mxu0 %v807
    %873 = vmatprep.subr.mxu0 0.0
    %874 = vmatpush1.xpose.msra.mxu0 %v809
    %875 = vmatprep.subr.mxu0 0.0
    %876 = vmatpush1.xpose.msra.mxu0 %v811
    %877 = vmatprep.subr.mxu0 0.0
    %878 = vmatpush1.xpose.msra.mxu0 %v813
    %879 = vmatprep.subr.mxu0 0.0
    %880 = vmatpush1.xpose.msra.mxu0 %v815
    %881 = vmatprep.subr.mxu0 0.0
    %882 = vmatpush1.xpose.msra.mxu0 %v817
    %883 = vmatprep.subr.mxu0 0.0
    %884 = vmatpush1.xpose.msra.mxu0 %v819
    %885 = vmatprep.subr.mxu0 0.0
    %886 = vmatpush1.xpose.msra.mxu0 %v821
    %887 = vmatprep.subr.mxu0 0.0
    %888 = vmatpush1.xpose.msra.mxu0 %v823
    %889 = vmatprep.subr.mxu0 0.0
    %890 = vmatpush1.xpose.msra.mxu0 %v825
    %891 = vmatprep.subr.mxu0 0.0
    %892 = vmatpush1.xpose.msra.mxu0 %v827
    %893 = vmatprep.subr.mxu0 0.0
    %894 = vmatpush1.xpose.msra.mxu0 %v829
    %895 = vmatprep.subr.mxu0 0.0
    %896 = vmatpush1.xpose.msra.mxu0 %v831
    %897 = vmatprep.subr.mxu0 0.0
    %898 = vmatpush1.xpose.msra.mxu0 %v833
    %899 = vmatprep.subr.mxu0 0.0
    %900 = vmatpush1.xpose.msra.mxu0 %v835
    %901 = vmatprep.subr.mxu0 0.0
    %902 = vmatpush1.xpose.msra.mxu0 %v837
    %903 = vmatprep.subr.mxu0 0.0
    %904 = vmatpush1.xpose.msra.mxu0 %v839
    %905 = vmatprep.subr.mxu0 0.0
    %906 = vmatpush1.xpose.msra.mxu0 %v841
    %907 = vmatprep.subr.mxu0 0.0
    %908 = vmatpush1.xpose.msra.mxu0 %v843
    %909 = vmatprep.subr.mxu0 0.0
    %910 = vmatpush1.xpose.msra.mxu0 %v845
    %911 = vmatprep.subr.mxu0 0.0
    %912 = vmatpush1.xpose.msra.mxu0 %v847
    %913 = vmatprep.subr.mxu0 0.0
    %914 = vmatpush1.xpose.msra.mxu0 %v849
    %915 = vmatprep.subr.mxu0 0.0
    %916 = vmatpush1.xpose.msra.mxu0 %v851
    %917 = vmatprep.subr.mxu0 0.0
    %918 = vmatpush1.xpose.msra.mxu0 %v853
    %919 = vmatprep.subr.mxu0 0.0
    %920 = vmatpush1.xpose.msra.mxu0 %v855
    %921 = vmatprep.subr.mxu0 0.0
    %922 = vmatpush1.xpose.msra.mxu0 %v857
    %923 = vmatprep.subr.mxu0 0.0
    %924 = vmatpush1.xpose.msra.mxu0 %v859
    %925 = vmatprep.mubr.f32.mxu0 0.0
    %926 = vmatmul.mubr.f32.gmra.mrb[0].mxu0 %v733
    %v927 = vpop.f32.mrb[0].mxu0
    %v928 = vadd.f32 %v143, %v927
    %v929 = vpop.f32.mrb[0].mxu0
    %v930 = vadd.f32 %v144, %v929
    %931 = vmatprep.mubr.f32.mxu0 0.0
    %932 = vmatmul.mubr.f32.gmra.mrb[0].mxu0 %v735
    %v933 = vpop.f32.mrb[0].mxu0
    %v934 = vadd.f32 %v145, %v933
    %v935 = vpop.f32.mrb[0].mxu0
    %v936 = vadd.f32 %v146, %v935
    %937 = vmatprep.mubr.f32.mxu0 0.0
    %938 = vmatmul.mubr.f32.gmra.mrb[0].mxu0 %v737
    %v939 = vpop.f32.mrb[0].mxu0
    %v940 = vadd.f32 %v147, %v939
    %v941 = vpop.f32.mrb[0].mxu0
    %v942 = vadd.f32 %v148, %v941
    %943 = vmatprep.mubr.f32.mxu0 0.0
    %944 = vmatmul.mubr.f32.gmra.mrb[0].mxu0 %v739
    %v945 = vpop.f32.mrb[0].mxu0
    %v946 = vadd.f32 %v149, %v945
    %v947 = vpop.f32.mrb[0].mxu0
    %v948 = vadd.f32 %v150, %v947
    %949 = vmatprep.mubr.f32.mxu0 0.0
    %950 = vmatmul.mubr.f32.gmra.mrb[0].mxu0 %v741
    %v951 = vpop.f32.mrb[0].mxu0
    %v952 = vadd.f32 %v151, %v951
    %v953 = vpop.f32.mrb[0].mxu0
    %v954 = vadd.f32 %v152, %v953
    %955 = vmatprep.mubr.f32.mxu0 0.0
    %956 = vmatmul.mubr.f32.gmra.mrb[0].mxu0 %v743
    %v957 = vpop.f32.mrb[0].mxu0
    %v958 = vadd.f32 %v153, %v957
    %v959 = vpop.f32.mrb[0].mxu0
    %v960 = vadd.f32 %v154, %v959
    %961 = vmatprep.mubr.f32.mxu0 0.0
    %962 = vmatmul.mubr.f32.gmra.mrb[0].mxu0 %v745
    %v963 = vpop.f32.mrb[0].mxu0
    %v964 = vadd.f32 %v155, %v963
    %v965 = vpop.f32.mrb[0].mxu0
    %v966 = vadd.f32 %v156, %v965
    %967 = vmatprep.mubr.f32.mxu0 0.0
    %968 = vmatmul.mubr.f32.gmra.mrb[0].mxu0 %v747
    %v969 = vpop.f32.mrb[0].mxu0
    %v970 = vadd.f32 %v157, %v969
    %v971 = vpop.f32.mrb[0].mxu0
    %v972 = vadd.f32 %v158, %v971
    %973 = vmatprep.mubr.f32.mxu0 0.0
    %974 = vmatmul.mubr.f32.gmra.mrb[0].mxu0 %v749
    %v975 = vpop.f32.mrb[0].mxu0
    %v976 = vadd.f32 %v159, %v975
    %v977 = vpop.f32.mrb[0].mxu0
    %v978 = vadd.f32 %v160, %v977
    %979 = vmatprep.mubr.f32.mxu0 0.0
    %980 = vmatmul.mubr.f32.gmra.mrb[0].mxu0 %v751
    %v981 = vpop.f32.mrb[0].mxu0
    %v982 = vadd.f32 %v161, %v981
    %v983 = vpop.f32.mrb[0].mxu0
    %v984 = vadd.f32 %v162, %v983
    %985 = vmatprep.mubr.f32.mxu0 0.0
    %986 = vmatmul.mubr.f32.gmra.mrb[0].mxu0 %v753
    %v987 = vpop.f32.mrb[0].mxu0
    %v988 = vadd.f32 %v163, %v987
    %v989 = vpop.f32.mrb[0].mxu0
    %v990 = vadd.f32 %v164, %v989
    %991 = vmatprep.mubr.f32.mxu0 0.0
    %992 = vmatmul.mubr.f32.gmra.mrb[0].mxu0 %v755
    %v993 = vpop.f32.mrb[0].mxu0
    %v994 = vadd.f32 %v165, %v993
    %v995 = vpop.f32.mrb[0].mxu0
    %v996 = vadd.f32 %v166, %v995
    %997 = vmatprep.mubr.f32.mxu0 0.0
    %998 = vmatmul.mubr.f32.gmra.mrb[0].mxu0 %v757
    %v999 = vpop.f32.mrb[0].mxu0
    %v1000 = vadd.f32 %v167, %v999
    %v1001 = vpop.f32.mrb[0].mxu0
    %v1002 = vadd.f32 %v168, %v1001
    %1003 = vmatprep.mubr.f32.mxu0 0.0
    %1004 = vmatmul.mubr.f32.gmra.mrb[0].mxu0 %v759
    %v1005 = vpop.f32.mrb[0].mxu0
    %v1006 = vadd.f32 %v169, %v1005
    %v1007 = vpop.f32.mrb[0].mxu0
    %v1008 = vadd.f32 %v170, %v1007
    %1009 = vmatprep.mubr.f32.mxu0 0.0
    %1010 = vmatmul.mubr.f32.gmra.mrb[0].mxu0 %v761
    %v1011 = vpop.f32.mrb[0].mxu0
    %v1012 = vadd.f32 %v171, %v1011
    %v1013 = vpop.f32.mrb[0].mxu0
    %v1014 = vadd.f32 %v172, %v1013
    %1015 = vmatprep.mubr.f32.mxu0 0.0
    %1016 = vmatmul.mubr.f32.gmra.mrb[0].mxu0 %v763
    %v1017 = vpop.f32.mrb[0].mxu0
    %v1018 = vadd.f32 %v173, %v1017
    %v1019 = vpop.f32.mrb[0].mxu0
    %v1020 = vadd.f32 %v174, %v1019
    %1021 = vmatprep.mubr.f32.mxu0 0.0
    %1022 = vmatmul.mubr.f32.gmra.mrb[0].mxu0 %v765
    %v1023 = vpop.f32.mrb[0].mxu0
    %v1024 = vadd.f32 %v175, %v1023
    %v1025 = vpop.f32.mrb[0].mxu0
    %v1026 = vadd.f32 %v176, %v1025
    %1027 = vmatprep.mubr.f32.mxu0 0.0
    %1028 = vmatmul.mubr.f32.gmra.mrb[0].mxu0 %v767
    %v1029 = vpop.f32.mrb[0].mxu0
    %v1030 = vadd.f32 %v177, %v1029
    %v1031 = vpop.f32.mrb[0].mxu0
    %v1032 = vadd.f32 %v178, %v1031
    %1033 = vmatprep.mubr.f32.mxu0 0.0
    %1034 = vmatmul.mubr.f32.gmra.mrb[0].mxu0 %v769
    %v1035 = vpop.f32.mrb[0].mxu0
    %v1036 = vadd.f32 %v179, %v1035
    %v1037 = vpop.f32.mrb[0].mxu0
    %v1038 = vadd.f32 %v180, %v1037
    %1039 = vmatprep.mubr.f32.mxu0 0.0
    %1040 = vmatmul.mubr.f32.gmra.mrb[0].mxu0 %v771
    %v1041 = vpop.f32.mrb[0].mxu0
    %v1042 = vadd.f32 %v181, %v1041
    %v1043 = vpop.f32.mrb[0].mxu0
    %v1044 = vadd.f32 %v182, %v1043
    %1045 = vmatprep.mubr.f32.mxu0 0.0
    %1046 = vmatmul.mubr.f32.gmra.mrb[0].mxu0 %v773
    %v1047 = vpop.f32.mrb[0].mxu0
    %v1048 = vadd.f32 %v183, %v1047
    %v1049 = vpop.f32.mrb[0].mxu0
    %v1050 = vadd.f32 %v184, %v1049
    %1051 = vmatprep.mubr.f32.mxu0 0.0
    %1052 = vmatmul.mubr.f32.gmra.mrb[0].mxu0 %v775
    %v1053 = vpop.f32.mrb[0].mxu0
    %v1054 = vadd.f32 %v185, %v1053
    %v1055 = vpop.f32.mrb[0].mxu0
    %v1056 = vadd.f32 %v186, %v1055
    %1057 = vmatprep.mubr.f32.mxu0 0.0
    %1058 = vmatmul.mubr.f32.gmra.mrb[0].mxu0 %v777
    %v1059 = vpop.f32.mrb[0].mxu0
    %v1060 = vadd.f32 %v187, %v1059
    %v1061 = vpop.f32.mrb[0].mxu0
    %v1062 = vadd.f32 %v188, %v1061
    %1063 = vmatprep.mubr.f32.mxu0 0.0
    %1064 = vmatmul.mubr.f32.gmra.mrb[0].mxu0 %v779
    %v1065 = vpop.f32.mrb[0].mxu0
    %v1066 = vadd.f32 %v189, %v1065
    %v1067 = vpop.f32.mrb[0].mxu0
    %v1068 = vadd.f32 %v190, %v1067
    %1069 = vmatprep.mubr.f32.mxu0 0.0
    %1070 = vmatmul.mubr.f32.gmra.mrb[0].mxu0 %v781
    %v1071 = vpop.f32.mrb[0].mxu0
    %v1072 = vadd.f32 %v191, %v1071
    %v1073 = vpop.f32.mrb[0].mxu0
    %v1074 = vadd.f32 %v192, %v1073
    %1075 = vmatprep.mubr.f32.mxu0 0.0
    %1076 = vmatmul.mubr.f32.gmra.mrb[0].mxu0 %v783
    %v1077 = vpop.f32.mrb[0].mxu0
    %v1078 = vadd.f32 %v193, %v1077
    %v1079 = vpop.f32.mrb[0].mxu0
    %v1080 = vadd.f32 %v194, %v1079
    %1081 = vmatprep.mubr.f32.mxu0 0.0
    %1082 = vmatmul.mubr.f32.gmra.mrb[0].mxu0 %v785
    %v1083 = vpop.f32.mrb[0].mxu0
    %v1084 = vadd.f32 %v195, %v1083
    %v1085 = vpop.f32.mrb[0].mxu0
    %v1086 = vadd.f32 %v196, %v1085
    %1087 = vmatprep.mubr.f32.mxu0 0.0
    %1088 = vmatmul.mubr.f32.gmra.mrb[0].mxu0 %v787
    %v1089 = vpop.f32.mrb[0].mxu0
    %v1090 = vadd.f32 %v197, %v1089
    %v1091 = vpop.f32.mrb[0].mxu0
    %v1092 = vadd.f32 %v198, %v1091
    %1093 = vmatprep.mubr.f32.mxu0 0.0
    %1094 = vmatmul.mubr.f32.gmra.mrb[0].mxu0 %v789
    %v1095 = vpop.f32.mrb[0].mxu0
    %v1096 = vadd.f32 %v199, %v1095
    %v1097 = vpop.f32.mrb[0].mxu0
    %v1098 = vadd.f32 %v200, %v1097
    %1099 = vmatprep.mubr.f32.mxu0 0.0
    %1100 = vmatmul.mubr.f32.gmra.mrb[0].mxu0 %v791
    %v1101 = vpop.f32.mrb[0].mxu0
    %v1102 = vadd.f32 %v201, %v1101
    %v1103 = vpop.f32.mrb[0].mxu0
    %v1104 = vadd.f32 %v202, %v1103
    %1105 = vmatprep.mubr.f32.mxu0 0.0
    %1106 = vmatmul.mubr.f32.gmra.mrb[0].mxu0 %v793
    %v1107 = vpop.f32.mrb[0].mxu0
    %v1108 = vadd.f32 %v203, %v1107
    %v1109 = vpop.f32.mrb[0].mxu0
    %v1110 = vadd.f32 %v204, %v1109
    %1111 = vmatprep.mubr.f32.mxu0 0.0
    %1112 = vmatmul.mubr.f32.gmra.mrb[0].mxu0 %v795
    %v1113 = vpop.f32.mrb[0].mxu0
    %v1114 = vadd.f32 %v205, %v1113
    %v1115 = vpop.f32.mrb[0].mxu0
    %v1116 = vadd.f32 %v206, %v1115
    %1117 = vdwg.mxu0
    %v1118 = vmax.f32 %v928, %v930
    %1119 = vmax.xlane.f32.xlu0 %v1118
    %v1120 = vpop.xlane.xlu0 %1119
    %v1121 = vmax.f32 %v934, %v936
    %1122 = vmax.xlane.f32.xlu0 %v1121
    %v1123 = vpop.xlane.xlu0 %1122
    %v1124 = vmax.f32 %v940, %v942
    %1125 = vmax.xlane.f32.xlu0 %v1124
    %v1126 = vpop.xlane.xlu0 %1125
    %v1127 = vmax.f32 %v946, %v948
    %1128 = vmax.xlane.f32.xlu0 %v1127
    %v1129 = vpop.xlane.xlu0 %1128
    %v1130 = vmax.f32 %v952, %v954
    %1131 = vmax.xlane.f32.xlu0 %v1130
    %v1132 = vpop.xlane.xlu0 %1131
    %v1133 = vmax.f32 %v958, %v960
    %1134 = vmax.xlane.f32.xlu0 %v1133
    %v1135 = vpop.xlane.xlu0 %1134
    %v1136 = vmax.f32 %v964, %v966
    %1137 = vmax.xlane.f32.xlu0 %v1136
    %v1138 = vpop.xlane.xlu0 %1137
    %v1139 = vmax.f32 %v970, %v972
    %1140 = vmax.xlane.f32.xlu0 %v1139
    %v1141 = vpop.xlane.xlu0 %1140
    %v1142 = vmax.f32 %v976, %v978
    %1143 = vmax.xlane.f32.xlu0 %v1142
    %v1144 = vpop.xlane.xlu0 %1143
    %v1145 = vmax.f32 %v982, %v984
    %1146 = vmax.xlane.f32.xlu0 %v1145
    %v1147 = vpop.xlane.xlu0 %1146
    %v1148 = vmax.f32 %v988, %v990
    %1149 = vmax.xlane.f32.xlu0 %v1148
    %v1150 = vpop.xlane.xlu0 %1149
    %v1151 = vmax.f32 %v994, %v996
    %1152 = vmax.xlane.f32.xlu0 %v1151
    %v1153 = vpop.xlane.xlu0 %1152
    %v1154 = vmax.f32 %v1000, %v1002
    %1155 = vmax.xlane.f32.xlu0 %v1154
    %v1156 = vpop.xlane.xlu0 %1155
    %v1157 = vmax.f32 %v1006, %v1008
    %1158 = vmax.xlane.f32.xlu0 %v1157
    %v1159 = vpop.xlane.xlu0 %1158
    %v1160 = vmax.f32 %v1012, %v1014
    %1161 = vmax.xlane.f32.xlu0 %v1160
    %v1162 = vpop.xlane.xlu0 %1161
    %v1163 = vmax.f32 %v1018, %v1020
    %1164 = vmax.xlane.f32.xlu0 %v1163
    %v1165 = vpop.xlane.xlu0 %1164
    %v1166 = vmax.f32 %v1024, %v1026
    %1167 = vmax.xlane.f32.xlu0 %v1166
    %v1168 = vpop.xlane.xlu0 %1167
    %v1169 = vmax.f32 %v1030, %v1032
    %1170 = vmax.xlane.f32.xlu0 %v1169
    %v1171 = vpop.xlane.xlu0 %1170
    %v1172 = vmax.f32 %v1036, %v1038
    %1173 = vmax.xlane.f32.xlu0 %v1172
    %v1174 = vpop.xlane.xlu0 %1173
    %v1175 = vmax.f32 %v1042, %v1044
    %1176 = vmax.xlane.f32.xlu0 %v1175
    %v1177 = vpop.xlane.xlu0 %1176
    %v1178 = vmax.f32 %v1048, %v1050
    %1179 = vmax.xlane.f32.xlu0 %v1178
    %v1180 = vpop.xlane.xlu0 %1179
    %v1181 = vmax.f32 %v1054, %v1056
    %1182 = vmax.xlane.f32.xlu0 %v1181
    %v1183 = vpop.xlane.xlu0 %1182
    %v1184 = vmax.f32 %v1060, %v1062
    %1185 = vmax.xlane.f32.xlu0 %v1184
    %v1186 = vpop.xlane.xlu0 %1185
    %v1187 = vmax.f32 %v1066, %v1068
    %1188 = vmax.xlane.f32.xlu0 %v1187
    %v1189 = vpop.xlane.xlu0 %1188
    %v1190 = vmax.f32 %v1072, %v1074
    %1191 = vmax.xlane.f32.xlu0 %v1190
    %v1192 = vpop.xlane.xlu0 %1191
    %v1193 = vmax.f32 %v1078, %v1080
    %1194 = vmax.xlane.f32.xlu0 %v1193
    %v1195 = vpop.xlane.xlu0 %1194
    %v1196 = vmax.f32 %v1084, %v1086
    %1197 = vmax.xlane.f32.xlu0 %v1196
    %v1198 = vpop.xlane.xlu0 %1197
    %v1199 = vmax.f32 %v1090, %v1092
    %1200 = vmax.xlane.f32.xlu0 %v1199
    %v1201 = vpop.xlane.xlu0 %1200
    %v1202 = vmax.f32 %v1096, %v1098
    %1203 = vmax.xlane.f32.xlu0 %v1202
    %v1204 = vpop.xlane.xlu0 %1203
    %v1205 = vmax.f32 %v1102, %v1104
    %1206 = vmax.xlane.f32.xlu0 %v1205
    %v1207 = vpop.xlane.xlu0 %1206
    %v1208 = vmax.f32 %v1108, %v1110
    %1209 = vmax.xlane.f32.xlu0 %v1208
    %v1210 = vpop.xlane.xlu0 %1209
    %v1211 = vmax.f32 %v1114, %v1116
    %1212 = vmax.xlane.f32.xlu0 %v1211
    %v1213 = vpop.xlane.xlu0 %1212
    %v1214 = vsub.f32 %v928, %v1120
    %v1215 = vsub.f32 %v930, %v1120
    %v1216 = vsub.f32 %v934, %v1123
    %v1217 = vsub.f32 %v936, %v1123
    %v1218 = vsub.f32 %v940, %v1126
    %v1219 = vsub.f32 %v942, %v1126
    %v1220 = vsub.f32 %v946, %v1129
    %v1221 = vsub.f32 %v948, %v1129
    %v1222 = vsub.f32 %v952, %v1132
    %v1223 = vsub.f32 %v954, %v1132
    %v1224 = vsub.f32 %v958, %v1135
    %v1225 = vsub.f32 %v960, %v1135
    %v1226 = vsub.f32 %v964, %v1138
    %v1227 = vsub.f32 %v966, %v1138
    %v1228 = vsub.f32 %v970, %v1141
    %v1229 = vsub.f32 %v972, %v1141
    %v1230 = vsub.f32 %v976, %v1144
    %v1231 = vsub.f32 %v978, %v1144
    %v1232 = vsub.f32 %v982, %v1147
    %v1233 = vsub.f32 %v984, %v1147
    %v1234 = vsub.f32 %v988, %v1150
    %v1235 = vsub.f32 %v990, %v1150
    %v1236 = vsub.f32 %v994, %v1153
    %v1237 = vsub.f32 %v996, %v1153
    %v1238 = vsub.f32 %v1000, %v1156
    %v1239 = vsub.f32 %v1002, %v1156
    %v1240 = vsub.f32 %v1006, %v1159
    %v1241 = vsub.f32 %v1008, %v1159
    %v1242 = vsub.f32 %v1012, %v1162
    %v1243 = vsub.f32 %v1014, %v1162
    %v1244 = vsub.f32 %v1018, %v1165
    %v1245 = vsub.f32 %v1020, %v1165
    %v1246 = vsub.f32 %v1024, %v1168
    %v1247 = vsub.f32 %v1026, %v1168
    %v1248 = vsub.f32 %v1030, %v1171
    %v1249 = vsub.f32 %v1032, %v1171
    %v1250 = vsub.f32 %v1036, %v1174
    %v1251 = vsub.f32 %v1038, %v1174
    %v1252 = vsub.f32 %v1042, %v1177
    %v1253 = vsub.f32 %v1044, %v1177
    %v1254 = vsub.f32 %v1048, %v1180
    %v1255 = vsub.f32 %v1050, %v1180
    %v1256 = vsub.f32 %v1054, %v1183
    %v1257 = vsub.f32 %v1056, %v1183
    %v1258 = vsub.f32 %v1060, %v1186
    %v1259 = vsub.f32 %v1062, %v1186
    %v1260 = vsub.f32 %v1066, %v1189
    %v1261 = vsub.f32 %v1068, %v1189
    %v1262 = vsub.f32 %v1072, %v1192
    %v1263 = vsub.f32 %v1074, %v1192
    %v1264 = vsub.f32 %v1078, %v1195
    %v1265 = vsub.f32 %v1080, %v1195
    %v1266 = vsub.f32 %v1084, %v1198
    %v1267 = vsub.f32 %v1086, %v1198
    %v1268 = vsub.f32 %v1090, %v1201
    %v1269 = vsub.f32 %v1092, %v1201
    %v1270 = vsub.f32 %v1096, %v1204
    %v1271 = vsub.f32 %v1098, %v1204
    %v1272 = vsub.f32 %v1102, %v1207
    %v1273 = vsub.f32 %v1104, %v1207
    %v1274 = vsub.f32 %v1108, %v1210
    %v1275 = vsub.f32 %v1110, %v1210
    %v1276 = vsub.f32 %v1114, %v1213
    %v1277 = vsub.f32 %v1116, %v1213
    %v1278 = vmul.f32 %v1214, 1.442695
    %v1279 = vpow.pop %v1278
    %v1280 = vmul.f32 %v1215, 1.442695
    %v1281 = vpow.pop %v1280
    %v1282 = vmul.f32 %v1216, 1.442695
    %v1283 = vpow.pop %v1282
    %v1284 = vmul.f32 %v1217, 1.442695
    %v1285 = vpow.pop %v1284
    %v1286 = vmul.f32 %v1218, 1.442695
    %v1287 = vpow.pop %v1286
    %v1288 = vmul.f32 %v1219, 1.442695
    %v1289 = vpow.pop %v1288
    %v1290 = vmul.f32 %v1220, 1.442695
    %v1291 = vpow.pop %v1290
    %v1292 = vmul.f32 %v1221, 1.442695
    %v1293 = vpow.pop %v1292
    %v1294 = vmul.f32 %v1222, 1.442695
    %v1295 = vpow.pop %v1294
    %v1296 = vmul.f32 %v1223, 1.442695
    %v1297 = vpow.pop %v1296
    %v1298 = vmul.f32 %v1224, 1.442695
    %v1299 = vpow.pop %v1298
    %v1300 = vmul.f32 %v1225, 1.442695
    %v1301 = vpow.pop %v1300
    %v1302 = vmul.f32 %v1226, 1.442695
    %v1303 = vpow.pop %v1302
    %v1304 = vmul.f32 %v1227, 1.442695
    %v1305 = vpow.pop %v1304
    %v1306 = vmul.f32 %v1228, 1.442695
    %v1307 = vpow.pop %v1306
    %v1308 = vmul.f32 %v1229, 1.442695
    %v1309 = vpow.pop %v1308
    %v1310 = vmul.f32 %v1230, 1.442695
    %v1311 = vpow.pop %v1310
    %v1312 = vmul.f32 %v1231, 1.442695
    %v1313 = vpow.pop %v1312
    %v1314 = vmul.f32 %v1232, 1.442695
    %v1315 = vpow.pop %v1314
    %v1316 = vmul.f32 %v1233, 1.442695
    %v1317 = vpow.pop %v1316
    %v1318 = vmul.f32 %v1234, 1.442695
    %v1319 = vpow.pop %v1318
    %v1320 = vmul.f32 %v1235, 1.442695
    %v1321 = vpow.pop %v1320
    %v1322 = vmul.f32 %v1236, 1.442695
    %v1323 = vpow.pop %v1322
    %v1324 = vmul.f32 %v1237, 1.442695
    %v1325 = vpow.pop %v1324
    %v1326 = vmul.f32 %v1238, 1.442695
    %v1327 = vpow.pop %v1326
    %v1328 = vmul.f32 %v1239, 1.442695
    %v1329 = vpow.pop %v1328
    %v1330 = vmul.f32 %v1240, 1.442695
    %v1331 = vpow.pop %v1330
    %v1332 = vmul.f32 %v1241, 1.442695
    %v1333 = vpow.pop %v1332
    %v1334 = vmul.f32 %v1242, 1.442695
    %v1335 = vpow.pop %v1334
    %v1336 = vmul.f32 %v1243, 1.442695
    %v1337 = vpow.pop %v1336
    %v1338 = vmul.f32 %v1244, 1.442695
    %v1339 = vpow.pop %v1338
    %v1340 = vmul.f32 %v1245, 1.442695
    %v1341 = vpow.pop %v1340
    %v1342 = vmul.f32 %v1246, 1.442695
    %v1343 = vpow.pop %v1342
    %v1344 = vmul.f32 %v1247, 1.442695
    %v1345 = vpow.pop %v1344
    %v1346 = vmul.f32 %v1248, 1.442695
    %v1347 = vpow.pop %v1346
    %v1348 = vmul.f32 %v1249, 1.442695
    %v1349 = vpow.pop %v1348
    %v1350 = vmul.f32 %v1250, 1.442695
    %v1351 = vpow.pop %v1350
    %v1352 = vmul.f32 %v1251, 1.442695
    %v1353 = vpow.pop %v1352
    %v1354 = vmul.f32 %v1252, 1.442695
    %v1355 = vpow.pop %v1354
    %v1356 = vmul.f32 %v1253, 1.442695
    %v1357 = vpow.pop %v1356
    %v1358 = vmul.f32 %v1254, 1.442695
    %v1359 = vpow.pop %v1358
    %v1360 = vmul.f32 %v1255, 1.442695
    %v1361 = vpow.pop %v1360
    %v1362 = vmul.f32 %v1256, 1.442695
    %v1363 = vpow.pop %v1362
    %v1364 = vmul.f32 %v1257, 1.442695
    %v1365 = vpow.pop %v1364
    %v1366 = vmul.f32 %v1258, 1.442695
    %v1367 = vpow.pop %v1366
    %v1368 = vmul.f32 %v1259, 1.442695
    %v1369 = vpow.pop %v1368
    %v1370 = vmul.f32 %v1260, 1.442695
    %v1371 = vpow.pop %v1370
    %v1372 = vmul.f32 %v1261, 1.442695
    %v1373 = vpow.pop %v1372
    %v1374 = vmul.f32 %v1262, 1.442695
    %v1375 = vpow.pop %v1374
    %v1376 = vmul.f32 %v1263, 1.442695
    %v1377 = vpow.pop %v1376
    %v1378 = vmul.f32 %v1264, 1.442695
    %v1379 = vpow.pop %v1378
    %v1380 = vmul.f32 %v1265, 1.442695
    %v1381 = vpow.pop %v1380
    %v1382 = vmul.f32 %v1266, 1.442695
    %v1383 = vpow.pop %v1382
    %v1384 = vmul.f32 %v1267, 1.442695
    %v1385 = vpow.pop %v1384
    %v1386 = vmul.f32 %v1268, 1.442695
    %v1387 = vpow.pop %v1386
    %v1388 = vmul.f32 %v1269, 1.442695
    %v1389 = vpow.pop %v1388
    %v1390 = vmul.f32 %v1270, 1.442695
    %v1391 = vpow.pop %v1390
    %v1392 = vmul.f32 %v1271, 1.442695
    %v1393 = vpow.pop %v1392
    %v1394 = vmul.f32 %v1272, 1.442695
    %v1395 = vpow.pop %v1394
    %v1396 = vmul.f32 %v1273, 1.442695
    %v1397 = vpow.pop %v1396
    %v1398 = vmul.f32 %v1274, 1.442695
    %v1399 = vpow.pop %v1398
    %v1400 = vmul.f32 %v1275, 1.442695
    %v1401 = vpow.pop %v1400
    %v1402 = vmul.f32 %v1276, 1.442695
    %v1403 = vpow.pop %v1402
    %v1404 = vmul.f32 %v1277, 1.442695
    %v1405 = vpow.pop %v1404
    %v1406 = vadd.f32 %v1279, %v1281
    %1407 = vadd.xlane.f32.xlu0 %v1406
    %v1408 = vpop.xlane.xlu0 %1407
    %v1409 = vadd.f32 %v1283, %v1285
    %1410 = vadd.xlane.f32.xlu0 %v1409
    %v1411 = vpop.xlane.xlu0 %1410
    %v1412 = vadd.f32 %v1287, %v1289
    %1413 = vadd.xlane.f32.xlu0 %v1412
    %v1414 = vpop.xlane.xlu0 %1413
    %v1415 = vadd.f32 %v1291, %v1293
    %1416 = vadd.xlane.f32.xlu0 %v1415
    %v1417 = vpop.xlane.xlu0 %1416
    %v1418 = vadd.f32 %v1295, %v1297
    %1419 = vadd.xlane.f32.xlu0 %v1418
    %v1420 = vpop.xlane.xlu0 %1419
    %v1421 = vadd.f32 %v1299, %v1301
    %1422 = vadd.xlane.f32.xlu0 %v1421
    %v1423 = vpop.xlane.xlu0 %1422
    %v1424 = vadd.f32 %v1303, %v1305
    %1425 = vadd.xlane.f32.xlu0 %v1424
    %v1426 = vpop.xlane.xlu0 %1425
    %v1427 = vadd.f32 %v1307, %v1309
    %1428 = vadd.xlane.f32.xlu0 %v1427
    %v1429 = vpop.xlane.xlu0 %1428
    %v1430 = vadd.f32 %v1311, %v1313
    %1431 = vadd.xlane.f32.xlu0 %v1430
    %v1432 = vpop.xlane.xlu0 %1431
    %v1433 = vadd.f32 %v1315, %v1317
    %1434 = vadd.xlane.f32.xlu0 %v1433
    %v1435 = vpop.xlane.xlu0 %1434
    %v1436 = vadd.f32 %v1319, %v1321
    %1437 = vadd.xlane.f32.xlu0 %v1436
    %v1438 = vpop.xlane.xlu0 %1437
    %v1439 = vadd.f32 %v1323, %v1325
    %1440 = vadd.xlane.f32.xlu0 %v1439
    %v1441 = vpop.xlane.xlu0 %1440
    %v1442 = vadd.f32 %v1327, %v1329
    %1443 = vadd.xlane.f32.xlu0 %v1442
    %v1444 = vpop.xlane.xlu0 %1443
    %v1445 = vadd.f32 %v1331, %v1333
    %1446 = vadd.xlane.f32.xlu0 %v1445
    %v1447 = vpop.xlane.xlu0 %1446
    %v1448 = vadd.f32 %v1335, %v1337
    %1449 = vadd.xlane.f32.xlu0 %v1448
    %v1450 = vpop.xlane.xlu0 %1449
    %v1451 = vadd.f32 %v1339, %v1341
    %1452 = vadd.xlane.f32.xlu0 %v1451
    %v1453 = vpop.xlane.xlu0 %1452
    %v1454 = vadd.f32 %v1343, %v1345
    %1455 = vadd.xlane.f32.xlu0 %v1454
    %v1456 = vpop.xlane.xlu0 %1455
    %v1457 = vadd.f32 %v1347, %v1349
    %1458 = vadd.xlane.f32.xlu0 %v1457
    %v1459 = vpop.xlane.xlu0 %1458
    %v1460 = vadd.f32 %v1351, %v1353
    %1461 = vadd.xlane.f32.xlu0 %v1460
    %v1462 = vpop.xlane.xlu0 %1461
    %v1463 = vadd.f32 %v1355, %v1357
    %1464 = vadd.xlane.f32.xlu0 %v1463
    %v1465 = vpop.xlane.xlu0 %1464
    %v1466 = vadd.f32 %v1359, %v1361
    %1467 = vadd.xlane.f32.xlu0 %v1466
    %v1468 = vpop.xlane.xlu0 %1467
    %v1469 = vadd.f32 %v1363, %v1365
    %1470 = vadd.xlane.f32.xlu0 %v1469
    %v1471 = vpop.xlane.xlu0 %1470
    %v1472 = vadd.f32 %v1367, %v1369
    %1473 = vadd.xlane.f32.xlu0 %v1472
    %v1474 = vpop.xlane.xlu0 %1473
    %v1475 = vadd.f32 %v1371, %v1373
    %1476 = vadd.xlane.f32.xlu0 %v1475
    %v1477 = vpop.xlane.xlu0 %1476
    %v1478 = vadd.f32 %v1375, %v1377
    %1479 = vadd.xlane.f32.xlu0 %v1478
    %v1480 = vpop.xlane.xlu0 %1479
    %v1481 = vadd.f32 %v1379, %v1381
    %1482 = vadd.xlane.f32.xlu0 %v1481
    %v1483 = vpop.xlane.xlu0 %1482
    %v1484 = vadd.f32 %v1383, %v1385
    %1485 = vadd.xlane.f32.xlu0 %v1484
    %v1486 = vpop.xlane.xlu0 %1485
    %v1487 = vadd.f32 %v1387, %v1389
    %1488 = vadd.xlane.f32.xlu0 %v1487
    %v1489 = vpop.xlane.xlu0 %1488
    %v1490 = vadd.f32 %v1391, %v1393
    %1491 = vadd.xlane.f32.xlu0 %v1490
    %v1492 = vpop.xlane.xlu0 %1491
    %v1493 = vadd.f32 %v1395, %v1397
    %1494 = vadd.xlane.f32.xlu0 %v1493
    %v1495 = vpop.xlane.xlu0 %1494
    %v1496 = vadd.f32 %v1399, %v1401
    %1497 = vadd.xlane.f32.xlu0 %v1496
    %v1498 = vpop.xlane.xlu0 %1497
    %v1499 = vadd.f32 %v1403, %v1405
    %1500 = vadd.xlane.f32.xlu0 %v1499
    %v1501 = vpop.xlane.xlu0 %1500
    %v1502 = vrcp.pop %v1408
    %v1503 = vrcp.pop %v1411
    %v1504 = vrcp.pop %v1414
    %v1505 = vrcp.pop %v1417
    %v1506 = vrcp.pop %v1420
    %v1507 = vrcp.pop %v1423
    %v1508 = vrcp.pop %v1426
    %v1509 = vrcp.pop %v1429
    %v1510 = vrcp.pop %v1432
    %v1511 = vrcp.pop %v1435
    %v1512 = vrcp.pop %v1438
    %v1513 = vrcp.pop %v1441
    %v1514 = vrcp.pop %v1444
    %v1515 = vrcp.pop %v1447
    %v1516 = vrcp.pop %v1450
    %v1517 = vrcp.pop %v1453
    %v1518 = vrcp.pop %v1456
    %v1519 = vrcp.pop %v1459
    %v1520 = vrcp.pop %v1462
    %v1521 = vrcp.pop %v1465
    %v1522 = vrcp.pop %v1468
    %v1523 = vrcp.pop %v1471
    %v1524 = vrcp.pop %v1474
    %v1525 = vrcp.pop %v1477
    %v1526 = vrcp.pop %v1480
    %v1527 = vrcp.pop %v1483
    %v1528 = vrcp.pop %v1486
    %v1529 = vrcp.pop %v1489
    %v1530 = vrcp.pop %v1492
    %v1531 = vrcp.pop %v1495
    %v1532 = vrcp.pop %v1498
    %v1533 = vrcp.pop %v1501
    %v1534 = vmul.f32 %v1279, %v1502
    %v1535 = vmul.f32 %v1281, %v1502
    %v1536 = vmul.f32 %v1283, %v1503
    %v1537 = vmul.f32 %v1285, %v1503
    %v1538 = vmul.f32 %v1287, %v1504
    %v1539 = vmul.f32 %v1289, %v1504
    %v1540 = vmul.f32 %v1291, %v1505
    %v1541 = vmul.f32 %v1293, %v1505
    %v1542 = vmul.f32 %v1295, %v1506
    %v1543 = vmul.f32 %v1297, %v1506
    %v1544 = vmul.f32 %v1299, %v1507
    %v1545 = vmul.f32 %v1301, %v1507
    %v1546 = vmul.f32 %v1303, %v1508
    %v1547 = vmul.f32 %v1305, %v1508
    %v1548 = vmul.f32 %v1307, %v1509
    %v1549 = vmul.f32 %v1309, %v1509
    %v1550 = vmul.f32 %v1311, %v1510
    %v1551 = vmul.f32 %v1313, %v1510
    %v1552 = vmul.f32 %v1315, %v1511
    %v1553 = vmul.f32 %v1317, %v1511
    %v1554 = vmul.f32 %v1319, %v1512
    %v1555 = vmul.f32 %v1321, %v1512
    %v1556 = vmul.f32 %v1323, %v1513
    %v1557 = vmul.f32 %v1325, %v1513
    %v1558 = vmul.f32 %v1327, %v1514
    %v1559 = vmul.f32 %v1329, %v1514
    %v1560 = vmul.f32 %v1331, %v1515
    %v1561 = vmul.f32 %v1333, %v1515
    %v1562 = vmul.f32 %v1335, %v1516
    %v1563 = vmul.f32 %v1337, %v1516
    %v1564 = vmul.f32 %v1339, %v1517
    %v1565 = vmul.f32 %v1341, %v1517
    %v1566 = vmul.f32 %v1343, %v1518
    %v1567 = vmul.f32 %v1345, %v1518
    %v1568 = vmul.f32 %v1347, %v1519
    %v1569 = vmul.f32 %v1349, %v1519
    %v1570 = vmul.f32 %v1351, %v1520
    %v1571 = vmul.f32 %v1353, %v1520
    %v1572 = vmul.f32 %v1355, %v1521
    %v1573 = vmul.f32 %v1357, %v1521
    %v1574 = vmul.f32 %v1359, %v1522
    %v1575 = vmul.f32 %v1361, %v1522
    %v1576 = vmul.f32 %v1363, %v1523
    %v1577 = vmul.f32 %v1365, %v1523
    %v1578 = vmul.f32 %v1367, %v1524
    %v1579 = vmul.f32 %v1369, %v1524
    %v1580 = vmul.f32 %v1371, %v1525
    %v1581 = vmul.f32 %v1373, %v1525
    %v1582 = vmul.f32 %v1375, %v1526
    %v1583 = vmul.f32 %v1377, %v1526
    %v1584 = vmul.f32 %v1379, %v1527
    %v1585 = vmul.f32 %v1381, %v1527
    %v1586 = vmul.f32 %v1383, %v1528
    %v1587 = vmul.f32 %v1385, %v1528
    %v1588 = vmul.f32 %v1387, %v1529
    %v1589 = vmul.f32 %v1389, %v1529
    %v1590 = vmul.f32 %v1391, %v1530
    %v1591 = vmul.f32 %v1393, %v1530
    %v1592 = vmul.f32 %v1395, %v1531
    %v1593 = vmul.f32 %v1397, %v1531
    %v1594 = vmul.f32 %v1399, %v1532
    %v1595 = vmul.f32 %v1401, %v1532
    %v1596 = vmul.f32 %v1403, %v1533
    %v1597 = vmul.f32 %v1405, %v1533
    %1598 = vmatprep.subr.mxu0 0.0
    %1599 = vmatpush1.msra.mxu0 %v506
    %1600 = vmatprep.subr.mxu0 0.0
    %1601 = vmatpush1.msra.mxu0 %v511
    %1602 = vmatprep.subr.mxu0 0.0
    %1603 = vmatpush1.msra.mxu0 %v516
    %1604 = vmatprep.subr.mxu0 0.0
    %1605 = vmatpush1.msra.mxu0 %v521
    %1606 = vmatprep.subr.mxu0 0.0
    %1607 = vmatpush1.msra.mxu0 %v649
    %1608 = vmatprep.subr.mxu0 0.0
    %1609 = vmatpush1.msra.mxu0 %v651
    %1610 = vmatprep.subr.mxu0 0.0
    %1611 = vmatpush1.msra.mxu0 %v653
    %1612 = vmatprep.subr.mxu0 0.0
    %1613 = vmatpush1.msra.mxu0 %v655
    %1614 = vmatprep.subr.mxu0 0.0
    %1615 = vmatpush1.msra.mxu0 %v661
    %1616 = vmatprep.subr.mxu0 0.0
    %1617 = vmatpush1.msra.mxu0 %v663
    %1618 = vmatprep.subr.mxu0 0.0
    %1619 = vmatpush1.msra.mxu0 %v665
    %1620 = vmatprep.subr.mxu0 0.0
    %1621 = vmatpush1.msra.mxu0 %v667
    %1622 = vmatprep.subr.mxu0 0.0
    %1623 = vmatpush1.msra.mxu0 %v673
    %1624 = vmatprep.subr.mxu0 0.0
    %1625 = vmatpush1.msra.mxu0 %v675
    %1626 = vmatprep.subr.mxu0 0.0
    %1627 = vmatpush1.msra.mxu0 %v677
    %1628 = vmatprep.subr.mxu0 0.0
    %1629 = vmatpush1.msra.mxu0 %v679
    %1630 = vmatprep.subr.mxu0 0.0
    %1631 = vmatpush1.msra.mxu0 %v685
    %1632 = vmatprep.subr.mxu0 0.0
    %1633 = vmatpush1.msra.mxu0 %v687
    %1634 = vmatprep.subr.mxu0 0.0
    %1635 = vmatpush1.msra.mxu0 %v689
    %1636 = vmatprep.subr.mxu0 0.0
    %1637 = vmatpush1.msra.mxu0 %v691
    %1638 = vmatprep.subr.mxu0 0.0
    %1639 = vmatpush1.msra.mxu0 %v697
    %1640 = vmatprep.subr.mxu0 0.0
    %1641 = vmatpush1.msra.mxu0 %v699
    %1642 = vmatprep.subr.mxu0 0.0
    %1643 = vmatpush1.msra.mxu0 %v701
    %1644 = vmatprep.subr.mxu0 0.0
    %1645 = vmatpush1.msra.mxu0 %v703
    %1646 = vmatprep.subr.mxu0 0.0
    %1647 = vmatpush1.msra.mxu0 %v709
    %1648 = vmatprep.subr.mxu0 0.0
    %1649 = vmatpush1.msra.mxu0 %v711
    %1650 = vmatprep.subr.mxu0 0.0
    %1651 = vmatpush1.msra.mxu0 %v713
    %1652 = vmatprep.subr.mxu0 0.0
    %1653 = vmatpush1.msra.mxu0 %v715
    %1654 = vmatprep.subr.mxu0 0.0
    %1655 = vmatpush1.msra.mxu0 %v721
    %1656 = vmatprep.subr.mxu0 0.0
    %1657 = vmatpush1.msra.mxu0 %v723
    %1658 = vmatprep.subr.mxu0 0.0
    %1659 = vmatpush1.msra.mxu0 %v725
    %1660 = vmatprep.subr.mxu0 0.0
    %1661 = vmatpush1.msra.mxu0 %v727
    %1662 = vmatprep.mubr.f32.mxu0 %v1535
    %1663 = vmatmul.mubr.f32.gmra.mrb[0].mxu0 %v1534
    %v1664 = vpop.f32.mrb[0].mxu0
    %v1665 = vadd.f32 0.0, %v1664
    %v1666 = vpop.f32.mrb[0].mxu0
    %1667 = vmatprep.mubr.f32.mxu0 %v1537
    %1668 = vmatmul.mubr.f32.gmra.mrb[0].mxu0 %v1536
    %v1669 = vpop.f32.mrb[0].mxu0
    %v1670 = vadd.f32 0.0, %v1669
    %v1671 = vpop.f32.mrb[0].mxu0
    %1672 = vmatprep.mubr.f32.mxu0 %v1539
    %1673 = vmatmul.mubr.f32.gmra.mrb[0].mxu0 %v1538
    %v1674 = vpop.f32.mrb[0].mxu0
    %v1675 = vadd.f32 0.0, %v1674
    %v1676 = vpop.f32.mrb[0].mxu0
    %1677 = vmatprep.mubr.f32.mxu0 %v1541
    %1678 = vmatmul.mubr.f32.gmra.mrb[0].mxu0 %v1540
    %v1679 = vpop.f32.mrb[0].mxu0
    %v1680 = vadd.f32 0.0, %v1679
    %v1681 = vpop.f32.mrb[0].mxu0
    %1682 = vmatprep.mubr.f32.mxu0 %v1543
    %1683 = vmatmul.mubr.f32.gmra.mrb[0].mxu0 %v1542
    %v1684 = vpop.f32.mrb[0].mxu0
    %v1685 = vadd.f32 0.0, %v1684
    %v1686 = vpop.f32.mrb[0].mxu0
    %1687 = vmatprep.mubr.f32.mxu0 %v1545
    %1688 = vmatmul.mubr.f32.gmra.mrb[0].mxu0 %v1544
    %v1689 = vpop.f32.mrb[0].mxu0
    %v1690 = vadd.f32 0.0, %v1689
    %v1691 = vpop.f32.mrb[0].mxu0
    %1692 = vmatprep.mubr.f32.mxu0 %v1547
    %1693 = vmatmul.mubr.f32.gmra.mrb[0].mxu0 %v1546
    %v1694 = vpop.f32.mrb[0].mxu0
    %v1695 = vadd.f32 0.0, %v1694
    %v1696 = vpop.f32.mrb[0].mxu0
    %1697 = vmatprep.mubr.f32.mxu0 %v1549
    %1698 = vmatmul.mubr.f32.gmra.mrb[0].mxu0 %v1548
    %v1699 = vpop.f32.mrb[0].mxu0
    %v1700 = vadd.f32 0.0, %v1699
    %v1701 = vpop.f32.mrb[0].mxu0
    %1702 = vmatprep.mubr.f32.mxu0 %v1551
    %1703 = vmatmul.mubr.f32.gmra.mrb[0].mxu0 %v1550
    %v1704 = vpop.f32.mrb[0].mxu0
    %v1705 = vadd.f32 0.0, %v1704
    %v1706 = vpop.f32.mrb[0].mxu0
    %1707 = vmatprep.mubr.f32.mxu0 %v1553
    %1708 = vmatmul.mubr.f32.gmra.mrb[0].mxu0 %v1552
    %v1709 = vpop.f32.mrb[0].mxu0
    %v1710 = vadd.f32 0.0, %v1709
    %v1711 = vpop.f32.mrb[0].mxu0
    %1712 = vmatprep.mubr.f32.mxu0 %v1555
    %1713 = vmatmul.mubr.f32.gmra.mrb[0].mxu0 %v1554
    %v1714 = vpop.f32.mrb[0].mxu0
    %v1715 = vadd.f32 0.0, %v1714
    %v1716 = vpop.f32.mrb[0].mxu0
    %1717 = vmatprep.mubr.f32.mxu0 %v1557
    %1718 = vmatmul.mubr.f32.gmra.mrb[0].mxu0 %v1556
    %v1719 = vpop.f32.mrb[0].mxu0
    %v1720 = vadd.f32 0.0, %v1719
    %v1721 = vpop.f32.mrb[0].mxu0
    %1722 = vmatprep.mubr.f32.mxu0 %v1559
    %1723 = vmatmul.mubr.f32.gmra.mrb[0].mxu0 %v1558
    %v1724 = vpop.f32.mrb[0].mxu0
    %v1725 = vadd.f32 0.0, %v1724
    %v1726 = vpop.f32.mrb[0].mxu0
    %1727 = vmatprep.mubr.f32.mxu0 %v1561
    %1728 = vmatmul.mubr.f32.gmra.mrb[0].mxu0 %v1560
    %v1729 = vpop.f32.mrb[0].mxu0
    %v1730 = vadd.f32 0.0, %v1729
    %v1731 = vpop.f32.mrb[0].mxu0
    %1732 = vmatprep.mubr.f32.mxu0 %v1563
    %1733 = vmatmul.mubr.f32.gmra.mrb[0].mxu0 %v1562
    %v1734 = vpop.f32.mrb[0].mxu0
    %v1735 = vadd.f32 0.0, %v1734
    %v1736 = vpop.f32.mrb[0].mxu0
    %1737 = vmatprep.mubr.f32.mxu0 %v1565
    %1738 = vmatmul.mubr.f32.gmra.mrb[0].mxu0 %v1564
    %v1739 = vpop.f32.mrb[0].mxu0
    %v1740 = vadd.f32 0.0, %v1739
    %v1741 = vpop.f32.mrb[0].mxu0
    %1742 = vmatprep.mubr.f32.mxu0 %v1567
    %1743 = vmatmul.mubr.f32.gmra.mrb[0].mxu0 %v1566
    %v1744 = vpop.f32.mrb[0].mxu0
    %v1745 = vadd.f32 0.0, %v1744
    %v1746 = vpop.f32.mrb[0].mxu0
    %1747 = vmatprep.mubr.f32.mxu0 %v1569
    %1748 = vmatmul.mubr.f32.gmra.mrb[0].mxu0 %v1568
    %v1749 = vpop.f32.mrb[0].mxu0
    %v1750 = vadd.f32 0.0, %v1749
    %v1751 = vpop.f32.mrb[0].mxu0
    %1752 = vmatprep.mubr.f32.mxu0 %v1571
    %1753 = vmatmul.mubr.f32.gmra.mrb[0].mxu0 %v1570
    %v1754 = vpop.f32.mrb[0].mxu0
    %v1755 = vadd.f32 0.0, %v1754
    %v1756 = vpop.f32.mrb[0].mxu0
    %1757 = vmatprep.mubr.f32.mxu0 %v1573
    %1758 = vmatmul.mubr.f32.gmra.mrb[0].mxu0 %v1572
    %v1759 = vpop.f32.mrb[0].mxu0
    %v1760 = vadd.f32 0.0, %v1759
    %v1761 = vpop.f32.mrb[0].mxu0
    %1762 = vmatprep.mubr.f32.mxu0 %v1575
    %1763 = vmatmul.mubr.f32.gmra.mrb[0].mxu0 %v1574
    %v1764 = vpop.f32.mrb[0].mxu0
    %v1765 = vadd.f32 0.0, %v1764
    %v1766 = vpop.f32.mrb[0].mxu0
    %1767 = vmatprep.mubr.f32.mxu0 %v1577
    %1768 = vmatmul.mubr.f32.gmra.mrb[0].mxu0 %v1576
    %v1769 = vpop.f32.mrb[0].mxu0
    %v1770 = vadd.f32 0.0, %v1769
    %v1771 = vpop.f32.mrb[0].mxu0
    %1772 = vmatprep.mubr.f32.mxu0 %v1579
    %1773 = vmatmul.mubr.f32.gmra.mrb[0].mxu0 %v1578
    %v1774 = vpop.f32.mrb[0].mxu0
    %v1775 = vadd.f32 0.0, %v1774
    %v1776 = vpop.f32.mrb[0].mxu0
    %1777 = vmatprep.mubr.f32.mxu0 %v1581
    %1778 = vmatmul.mubr.f32.gmra.mrb[0].mxu0 %v1580
    %v1779 = vpop.f32.mrb[0].mxu0
    %v1780 = vadd.f32 0.0, %v1779
    %v1781 = vpop.f32.mrb[0].mxu0
    %1782 = vmatprep.mubr.f32.mxu0 %v1583
    %1783 = vmatmul.mubr.f32.gmra.mrb[0].mxu0 %v1582
    %v1784 = vpop.f32.mrb[0].mxu0
    %v1785 = vadd.f32 0.0, %v1784
    %v1786 = vpop.f32.mrb[0].mxu0
    %1787 = vmatprep.mubr.f32.mxu0 %v1585
    %1788 = vmatmul.mubr.f32.gmra.mrb[0].mxu0 %v1584
    %v1789 = vpop.f32.mrb[0].mxu0
    %v1790 = vadd.f32 0.0, %v1789
    %v1791 = vpop.f32.mrb[0].mxu0
    %1792 = vmatprep.mubr.f32.mxu0 %v1587
    %1793 = vmatmul.mubr.f32.gmra.mrb[0].mxu0 %v1586
    %v1794 = vpop.f32.mrb[0].mxu0
    %v1795 = vadd.f32 0.0, %v1794
    %v1796 = vpop.f32.mrb[0].mxu0
    %1797 = vmatprep.mubr.f32.mxu0 %v1589
    %1798 = vmatmul.mubr.f32.gmra.mrb[0].mxu0 %v1588
    %v1799 = vpop.f32.mrb[0].mxu0
    %v1800 = vadd.f32 0.0, %v1799
    %v1801 = vpop.f32.mrb[0].mxu0
    %1802 = vmatprep.mubr.f32.mxu0 %v1591
    %1803 = vmatmul.mubr.f32.gmra.mrb[0].mxu0 %v1590
    %v1804 = vpop.f32.mrb[0].mxu0
    %v1805 = vadd.f32 0.0, %v1804
    %v1806 = vpop.f32.mrb[0].mxu0
    %1807 = vmatprep.mubr.f32.mxu0 %v1593
    %1808 = vmatmul.mubr.f32.gmra.mrb[0].mxu0 %v1592
    %v1809 = vpop.f32.mrb[0].mxu0
    %v1810 = vadd.f32 0.0, %v1809
    %v1811 = vpop.f32.mrb[0].mxu0
    %1812 = vmatprep.mubr.f32.mxu0 %v1595
    %1813 = vmatmul.mubr.f32.gmra.mrb[0].mxu0 %v1594
    %v1814 = vpop.f32.mrb[0].mxu0
    %v1815 = vadd.f32 0.0, %v1814
    %v1816 = vpop.f32.mrb[0].mxu0
    %1817 = vmatprep.mubr.f32.mxu0 %v1597
    %1818 = vmatmul.mubr.f32.gmra.mrb[0].mxu0 %v1596
    %v1819 = vpop.f32.mrb[0].mxu0
    %v1820 = vadd.f32 0.0, %v1819
    %v1821 = vpop.f32.mrb[0].mxu0
    %1822 = vdwg.mxu0
    %1827 = vrot.lane.b32.xlu0 %v1685, 8
    %v1828 = vpop.permute.xlu0 %1827
    %1829 = vrot.lane.b32.xlu0 %v1690, 8
    %v1830 = vpop.permute.xlu0 %1829
    %1831 = vrot.lane.b32.xlu0 %v1695, 8
    %v1832 = vpop.permute.xlu0 %1831
    %1833 = vrot.lane.b32.xlu0 %v1700, 8
    %v1834 = vpop.permute.xlu0 %1833
    %1843 = vrot.lane.b32.xlu0 %v1705, 16
    %v1844 = vpop.permute.xlu0 %1843
    %1845 = vrot.lane.b32.xlu0 %v1710, 16
    %v1846 = vpop.permute.xlu0 %1845
    %1847 = vrot.lane.b32.xlu0 %v1715, 16
    %v1848 = vpop.permute.xlu0 %1847
    %1849 = vrot.lane.b32.xlu0 %v1720, 16
    %v1850 = vpop.permute.xlu0 %1849
    %1859 = vrot.lane.b32.xlu0 %v1725, 24
    %v1860 = vpop.permute.xlu0 %1859
    %1861 = vrot.lane.b32.xlu0 %v1730, 24
    %v1862 = vpop.permute.xlu0 %1861
    %1863 = vrot.lane.b32.xlu0 %v1735, 24
    %v1864 = vpop.permute.xlu0 %1863
    %1865 = vrot.lane.b32.xlu0 %v1740, 24
    %v1866 = vpop.permute.xlu0 %1865
    %1875 = vrot.lane.b32.xlu0 %v1745, 32
    %v1876 = vpop.permute.xlu0 %1875
    %1877 = vrot.lane.b32.xlu0 %v1750, 32
    %v1878 = vpop.permute.xlu0 %1877
    %1879 = vrot.lane.b32.xlu0 %v1755, 32
    %v1880 = vpop.permute.xlu0 %1879
    %1881 = vrot.lane.b32.xlu0 %v1760, 32
    %v1882 = vpop.permute.xlu0 %1881
    %1891 = vrot.lane.b32.xlu0 %v1765, 40
    %v1892 = vpop.permute.xlu0 %1891
    %1893 = vrot.lane.b32.xlu0 %v1770, 40
    %v1894 = vpop.permute.xlu0 %1893
    %1895 = vrot.lane.b32.xlu0 %v1775, 40
    %v1896 = vpop.permute.xlu0 %1895
    %1897 = vrot.lane.b32.xlu0 %v1780, 40
    %v1898 = vpop.permute.xlu0 %1897
    %1907 = vrot.lane.b32.xlu0 %v1785, 48
    %v1908 = vpop.permute.xlu0 %1907
    %1909 = vrot.lane.b32.xlu0 %v1790, 48
    %v1910 = vpop.permute.xlu0 %1909
    %1911 = vrot.lane.b32.xlu0 %v1795, 48
    %v1912 = vpop.permute.xlu0 %1911
    %1913 = vrot.lane.b32.xlu0 %v1800, 48
    %v1914 = vpop.permute.xlu0 %1913
    %1923 = vrot.lane.b32.xlu0 %v1805, 56
    %v1924 = vpop.permute.xlu0 %1923
    %1925 = vrot.lane.b32.xlu0 %v1810, 56
    %v1926 = vpop.permute.xlu0 %1925
    %1927 = vrot.lane.b32.xlu0 %v1815, 56
    %v1928 = vpop.permute.xlu0 %1927
    %1929 = vrot.lane.b32.xlu0 %v1820, 56
    %v1930 = vpop.permute.xlu0 %1929
    %v1935 = vsel %vm732, %v1665, %v1828
    %v1936 = vsel %vm732, %v1670, %v1830
    %v1937 = vsel %vm732, %v1675, %v1832
    %v1938 = vsel %vm732, %v1680, %v1834
    %vm1939 = vcmask 130048
    %v1940 = vsel %vm1939, %v1935, %v1844
    %v1941 = vsel %vm1939, %v1936, %v1846
    %v1942 = vsel %vm1939, %v1937, %v1848
    %v1943 = vsel %vm1939, %v1938, %v1850
    %vm1944 = vcmask 195584
    %v1945 = vsel %vm1944, %v1940, %v1860
    %v1946 = vsel %vm1944, %v1941, %v1862
    %v1947 = vsel %vm1944, %v1942, %v1864
    %v1948 = vsel %vm1944, %v1943, %v1866
    %vm1949 = vcmask 261120
    %v1950 = vsel %vm1949, %v1945, %v1876
    %v1951 = vsel %vm1949, %v1946, %v1878
    %v1952 = vsel %vm1949, %v1947, %v1880
    %v1953 = vsel %vm1949, %v1948, %v1882
    %vm1954 = vcmask 326656
    %v1955 = vsel %vm1954, %v1950, %v1892
    %v1956 = vsel %vm1954, %v1951, %v1894
    %v1957 = vsel %vm1954, %v1952, %v1896
    %v1958 = vsel %vm1954, %v1953, %v1898
    %vm1959 = vcmask 392192
    %v1960 = vsel %vm1959, %v1955, %v1908
    %v1961 = vsel %vm1959, %v1956, %v1910
    %v1962 = vsel %vm1959, %v1957, %v1912
    %v1963 = vsel %vm1959, %v1958, %v1914
    %vm1964 = vcmask 457728
    %v1965 = vsel %vm1964, %v1960, %v1924
    %v1966 = vsel %vm1964, %v1961, %v1926
    %v1967 = vsel %vm1964, %v1962, %v1928
    %v1968 = vsel %vm1964, %v1963, %v1930
    %v1969 = vld [vmem:[#allocation8] sm:$0xff]
    %v1970 = vld [vmem:[#allocation8 + $0x8] sm:$0xff]
    %v1971 = vld [vmem:[#allocation8 + $0x10] sm:$0xff]
    %v1972 = vld [vmem:[#allocation8 + $0x18] sm:$0xff]
    %v1973 = vld [vmem:[#allocation8 + $0x20] sm:$0xff]
    %v1974 = vld [vmem:[#allocation8 + $0x28] sm:$0xff]
    %v1975 = vld [vmem:[#allocation8 + $0x30] sm:$0xff]
    %v1976 = vld [vmem:[#allocation8 + $0x38] sm:$0xff]
    %v1977 = vld [vmem:[%s10] sm:$0x1]
    %v1979 = vlaneseq
    %v1980 = vshrl.u32 %v1979, 7
    %v1981 = vsub.s32 0, %v1980
    %v1982 = vrot.slane %v1977, %v1981
    %v1985 = vsel %vm222, %v1965, 0
    %v1988 = vsel %vm222, %v1966, 0
    %v1991 = vsel %vm222, %v1967, 0
    %v1994 = vsel %vm222, %v1968, 0
    %1996 = vmatprep.subr.mxu0 0.0
    %1997 = vmatpush1.msra.mxu0 %v1969
    %1998 = vmatprep.subr.mxu0 0.0
    %1999 = vmatpush1.msra.mxu0 %v1970
    %2000 = vmatprep.subr.mxu0 0.0
    %2001 = vmatpush1.msra.mxu0 %v1971
    %2002 = vmatprep.subr.mxu0 0.0
    %2003 = vmatpush1.msra.mxu0 %v1972
    %2004 = vmatprep.subr.mxu0 0.0
    %2005 = vmatpush1.msra.mxu0 %v1973
    %2006 = vmatprep.subr.mxu0 0.0
    %2007 = vmatpush1.msra.mxu0 %v1974
    %2008 = vmatprep.subr.mxu0 0.0
    %2009 = vmatpush1.msra.mxu0 %v1975
    %2010 = vmatprep.subr.mxu0 0.0
    %2011 = vmatpush1.msra.mxu0 %v1976
    %2012 = vmatprep.subr.mxu0 0.0
    %2013 = vmatpush1.msra.mxu0 0.0
    %2014 = vmatprep.subr.mxu0 0.0
    %2015 = vmatpush1.msra.mxu0 0.0
    %2016 = vmatprep.subr.mxu0 0.0
    %2017 = vmatpush1.msra.mxu0 0.0
    %2018 = vmatprep.subr.mxu0 0.0
    %2019 = vmatpush1.msra.mxu0 0.0
    %2020 = vmatprep.subr.mxu0 0.0
    %2021 = vmatpush1.msra.mxu0 0.0
    %2022 = vmatprep.subr.mxu0 0.0
    %2023 = vmatpush1.msra.mxu0 0.0
    %2024 = vmatprep.subr.mxu0 0.0
    %2025 = vmatpush1.msra.mxu0 0.0
    %2026 = vmatprep.subr.mxu0 0.0
    %2027 = vmatpush1.msra.mxu0 0.0
    %2028 = vmatprep.subr.mxu0 0.0
    %2029 = vmatpush1.msra.mxu0 0.0
    %2030 = vmatprep.subr.mxu0 0.0
    %2031 = vmatpush1.msra.mxu0 0.0
    %2032 = vmatprep.subr.mxu0 0.0
    %2033 = vmatpush1.msra.mxu0 0.0
    %2034 = vmatprep.subr.mxu0 0.0
    %2035 = vmatpush1.msra.mxu0 0.0
    %2036 = vmatprep.subr.mxu0 0.0
    %2037 = vmatpush1.msra.mxu0 0.0
    %2038 = vmatprep.subr.mxu0 0.0
    %2039 = vmatpush1.msra.mxu0 0.0
    %2040 = vmatprep.subr.mxu0 0.0
    %2041 = vmatpush1.msra.mxu0 0.0
    %2042 = vmatprep.subr.mxu0 0.0
    %2043 = vmatpush1.msra.mxu0 0.0
    %2044 = vmatprep.subr.mxu0 0.0
    %2045 = vmatpush1.msra.mxu0 0.0
    %2046 = vmatprep.subr.mxu0 0.0
    %2047 = vmatpush1.msra.mxu0 0.0
    %2048 = vmatprep.subr.mxu0 0.0
    %2049 = vmatpush1.msra.mxu0 0.0
    %2050 = vmatprep.subr.mxu0 0.0
    %2051 = vmatpush1.msra.mxu0 0.0
    %2052 = vmatprep.subr.mxu0 0.0
    %2053 = vmatpush1.msra.mxu0 0.0
    %2054 = vmatprep.subr.mxu0 0.0
    %2055 = vmatpush1.msra.mxu0 0.0
    %2056 = vmatprep.subr.mxu0 0.0
    %2057 = vmatpush1.msra.mxu0 0.0
    %2058 = vmatprep.subr.mxu0 0.0
    %2059 = vmatpush1.msra.mxu0 0.0
    %2060 = vmatprep.mubr.f32.mxu0 0.0
    %2061 = vmatmul.mubr.f32.gmra.mrb[0].mxu0 %v1985
    %v2062 = vpop.f32.mrb[0].mxu0
    %v2063 = vadd.f32 %v1982, %v2062
    %v2064 = vpop.f32.mrb[0].mxu0
    %2065 = vmatprep.mubr.f32.mxu0 0.0
    %2066 = vmatmul.mubr.f32.gmra.mrb[0].mxu0 %v1988
    %v2067 = vpop.f32.mrb[0].mxu0
    %v2068 = vadd.f32 %v1982, %v2067
    %v2069 = vpop.f32.mrb[0].mxu0
    %2070 = vmatprep.mubr.f32.mxu0 0.0
    %2071 = vmatmul.mubr.f32.gmra.mrb[0].mxu0 %v1991
    %v2072 = vpop.f32.mrb[0].mxu0
    %v2073 = vadd.f32 %v1982, %v2072
    %v2074 = vpop.f32.mrb[0].mxu0
    %2075 = vmatprep.mubr.f32.mxu0 0.0
    %2076 = vmatmul.mubr.f32.gmra.mrb[0].mxu0 %v1994
    %v2077 = vpop.f32.mrb[0].mxu0
    %v2078 = vadd.f32 %v1982, %v2077
    %v2079 = vpop.f32.mrb[0].mxu0
    %2080 = vdwg.mxu0
    %v2081 = vadd.f32 %v139, %v2063
    %v2082 = vadd.f32 %v140, %v2068
    %v2083 = vadd.f32 %v141, %v2073
    %v2084 = vadd.f32 %v142, %v2078
    %v2085 = vld [vmem:[%s15] sm:$0x1]
    %v2086 = vld [vmem:[%s16] sm:$0x1]
    %v2087 = vsel %vm222, %v2081, 0.0
    %2088 = vadd.xlane.f32.xlu0 %v2087
    %v2089 = vpop.xlane.xlu0 %2088
    %v2090 = vsel %vm222, %v2082, 0.0
    %2091 = vadd.xlane.f32.xlu0 %v2090
    %v2092 = vpop.xlane.xlu0 %2091
    %v2093 = vsel %vm222, %v2083, 0.0
    %2094 = vadd.xlane.f32.xlu0 %v2093
    %v2095 = vpop.xlane.xlu0 %2094
    %v2096 = vsel %vm222, %v2084, 0.0
    %2097 = vadd.xlane.f32.xlu0 %v2096
    %v2098 = vpop.xlane.xlu0 %2097
    %v2099 = vrcp.pop 64.0
    %v2100 = vmul.f32 %v2089, %v2099
    %v2101 = vmul.f32 %v2092, %v2099
    %v2102 = vmul.f32 %v2095, %v2099
    %v2103 = vmul.f32 %v2098, %v2099
    %v2104 = vsub.f32 %v2081, %v2100
    %v2105 = vsub.f32 %v2082, %v2101
    %v2106 = vsub.f32 %v2083, %v2102
    %v2107 = vsub.f32 %v2084, %v2103
    %v2108 = vmul.f32 %v2104, %v2104
    %v2109 = vmul.f32 %v2105, %v2105
    %v2110 = vmul.f32 %v2106, %v2106
    %v2111 = vmul.f32 %v2107, %v2107
    %v2112 = vsel %vm222, %v2108, 0.0
    %2113 = vadd.xlane.f32.xlu0 %v2112
    %v2114 = vpop.xlane.xlu0 %2113
    %v2115 = vsel %vm222, %v2109, 0.0
    %2116 = vadd.xlane.f32.xlu0 %v2115
    %v2117 = vpop.xlane.xlu0 %2116
    %v2118 = vsel %vm222, %v2110, 0.0
    %2119 = vadd.xlane.f32.xlu0 %v2118
    %v2120 = vpop.xlane.xlu0 %2119
    %v2121 = vsel %vm222, %v2111, 0.0
    %2122 = vadd.xlane.f32.xlu0 %v2121
    %v2123 = vpop.xlane.xlu0 %2122
    %v2124 = vmul.f32 %v2114, %v2099
    %v2125 = vmul.f32 %v2117, %v2099
    %v2126 = vmul.f32 %v2120, %v2099
    %v2127 = vmul.f32 %v2123, %v2099
    %v2128 = vadd.f32 %v2124, 1e-05
    %v2129 = vadd.f32 %v2125, 1e-05
    %v2130 = vadd.f32 %v2126, 1e-05
    %v2131 = vadd.f32 %v2127, 1e-05
    %v2132 = vrsqrt.pop %v2128
    %v2133 = vrsqrt.pop %v2129
    %v2134 = vrsqrt.pop %v2130
    %v2135 = vrsqrt.pop %v2131
    %v2136 = vmul.f32 %v2104, %v2132
    %v2137 = vmul.f32 %v2105, %v2133
    %v2138 = vmul.f32 %v2106, %v2134
    %v2139 = vmul.f32 %v2107, %v2135
    %v2141 = vlaneseq
    %v2142 = vshrl.u32 %v2141, 7
    %v2143 = vsub.s32 0, %v2142
    %v2144 = vrot.slane %v2085, %v2143
    %v2146 = vmul.f32 %v2136, %v2144
    %v2147 = vmul.f32 %v2137, %v2144
    %v2148 = vmul.f32 %v2138, %v2144
    %v2149 = vmul.f32 %v2139, %v2144
    %v2151 = vlaneseq
    %v2152 = vshrl.u32 %v2151, 7
    %v2153 = vsub.s32 0, %v2152
    %v2154 = vrot.slane %v2086, %v2153
    %v2156 = vadd.f32 %v2146, %v2154
    %v2157 = vadd.f32 %v2147, %v2154
    %v2158 = vadd.f32 %v2148, %v2154
    %v2159 = vadd.f32 %v2149, %v2154
    %v2160 = vld [vmem:[#allocation10] sm:$0xff]
    %v2161 = vld [vmem:[#allocation10 + $0x8] sm:$0xff]
    %v2162 = vld [vmem:[#allocation10 + $0x10] sm:$0xff]
    %v2163 = vld [vmem:[#allocation10 + $0x18] sm:$0xff]
    %v2164 = vld [vmem:[#allocation10 + $0x20] sm:$0xff]
    %v2165 = vld [vmem:[#allocation10 + $0x28] sm:$0xff]
    %v2166 = vld [vmem:[#allocation10 + $0x30] sm:$0xff]
    %v2167 = vld [vmem:[#allocation10 + $0x38] sm:$0xff]
    %v2168 = vld [vmem:[%s12] sm:$0x1]
    %v2170 = vlaneseq
    %v2171 = vshrl.u32 %v2170, 7
    %v2172 = vsub.s32 0, %v2171
    %v2173 = vrot.slane %v2168, %v2172
    %v2176 = vsel %vm222, %v2156, 0
    %v2179 = vsel %vm222, %v2157, 0
    %v2182 = vsel %vm222, %v2158, 0
    %v2185 = vsel %vm222, %v2159, 0
    %2187 = vmatprep.subr.mxu0 0.0
    %2188 = vmatpush1.msra.mxu0 %v2160
    %2189 = vmatprep.subr.mxu0 0.0
    %2190 = vmatpush1.msra.mxu0 %v2161
    %2191 = vmatprep.subr.mxu0 0.0
    %2192 = vmatpush1.msra.mxu0 %v2162
    %2193 = vmatprep.subr.mxu0 0.0
    %2194 = vmatpush1.msra.mxu0 %v2163
    %2195 = vmatprep.subr.mxu0 0.0
    %2196 = vmatpush1.msra.mxu0 %v2164
    %2197 = vmatprep.subr.mxu0 0.0
    %2198 = vmatpush1.msra.mxu0 %v2165
    %2199 = vmatprep.subr.mxu0 0.0
    %2200 = vmatpush1.msra.mxu0 %v2166
    %2201 = vmatprep.subr.mxu0 0.0
    %2202 = vmatpush1.msra.mxu0 %v2167
    %2203 = vmatprep.subr.mxu0 0.0
    %2204 = vmatpush1.msra.mxu0 0.0
    %2205 = vmatprep.subr.mxu0 0.0
    %2206 = vmatpush1.msra.mxu0 0.0
    %2207 = vmatprep.subr.mxu0 0.0
    %2208 = vmatpush1.msra.mxu0 0.0
    %2209 = vmatprep.subr.mxu0 0.0
    %2210 = vmatpush1.msra.mxu0 0.0
    %2211 = vmatprep.subr.mxu0 0.0
    %2212 = vmatpush1.msra.mxu0 0.0
    %2213 = vmatprep.subr.mxu0 0.0
    %2214 = vmatpush1.msra.mxu0 0.0
    %2215 = vmatprep.subr.mxu0 0.0
    %2216 = vmatpush1.msra.mxu0 0.0
    %2217 = vmatprep.subr.mxu0 0.0
    %2218 = vmatpush1.msra.mxu0 0.0
    %2219 = vmatprep.subr.mxu0 0.0
    %2220 = vmatpush1.msra.mxu0 0.0
    %2221 = vmatprep.subr.mxu0 0.0
    %2222 = vmatpush1.msra.mxu0 0.0
    %2223 = vmatprep.subr.mxu0 0.0
    %2224 = vmatpush1.msra.mxu0 0.0
    %2225 = vmatprep.subr.mxu0 0.0
    %2226 = vmatpush1.msra.mxu0 0.0
    %2227 = vmatprep.subr.mxu0 0.0
    %2228 = vmatpush1.msra.mxu0 0.0
    %2229 = vmatprep.subr.mxu0 0.0
    %2230 = vmatpush1.msra.mxu0 0.0
    %2231 = vmatprep.subr.mxu0 0.0
    %2232 = vmatpush1.msra.mxu0 0.0
    %2233 = vmatprep.subr.mxu0 0.0
    %2234 = vmatpush1.msra.mxu0 0.0
    %2235 = vmatprep.subr.mxu0 0.0
    %2236 = vmatpush1.msra.mxu0 0.0
    %2237 = vmatprep.subr.mxu0 0.0
    %2238 = vmatpush1.msra.mxu0 0.0
    %2239 = vmatprep.subr.mxu0 0.0
    %2240 = vmatpush1.msra.mxu0 0.0
    %2241 = vmatprep.subr.mxu0 0.0
    %2242 = vmatpush1.msra.mxu0 0.0
    %2243 = vmatprep.subr.mxu0 0.0
    %2244 = vmatpush1.msra.mxu0 0.0
    %2245 = vmatprep.subr.mxu0 0.0
    %2246 = vmatpush1.msra.mxu0 0.0
    %2247 = vmatprep.subr.mxu0 0.0
    %2248 = vmatpush1.msra.mxu0 0.0
    %2249 = vmatprep.subr.mxu0 0.0
    %2250 = vmatpush1.msra.mxu0 0.0
    %2251 = vmatprep.mubr.f32.mxu0 0.0
    %2252 = vmatmul.mubr.f32.gmra.mrb[0].mxu0 %v2176
    %v2253 = vpop.f32.mrb[0].mxu0
    %v2254 = vadd.f32 %v2173, %v2253
    %v2255 = vpop.f32.mrb[0].mxu0
    %2256 = vmatprep.mubr.f32.mxu0 0.0
    %2257 = vmatmul.mubr.f32.gmra.mrb[0].mxu0 %v2179
    %v2258 = vpop.f32.mrb[0].mxu0
    %v2259 = vadd.f32 %v2173, %v2258
    %v2260 = vpop.f32.mrb[0].mxu0
    %2261 = vmatprep.mubr.f32.mxu0 0.0
    %2262 = vmatmul.mubr.f32.gmra.mrb[0].mxu0 %v2182
    %v2263 = vpop.f32.mrb[0].mxu0
    %v2264 = vadd.f32 %v2173, %v2263
    %v2265 = vpop.f32.mrb[0].mxu0
    %2266 = vmatprep.mubr.f32.mxu0 0.0
    %2267 = vmatmul.mubr.f32.gmra.mrb[0].mxu0 %v2185
    %v2268 = vpop.f32.mrb[0].mxu0
    %v2269 = vadd.f32 %v2173, %v2268
    %v2270 = vpop.f32.mrb[0].mxu0
    %2271 = vdwg.mxu0
    %v2272 = vmax.f32 %v2254, 0.0
    %v2273 = vmax.f32 %v2259, 0.0
    %v2274 = vmax.f32 %v2264, 0.0
    %v2275 = vmax.f32 %v2269, 0.0
    %v2276 = vld [vmem:[%s13] sm:$0xff]
    %v2277 = vld [vmem:[%s13 + $0x8] sm:$0xff]
    %v2278 = vld [vmem:[%s13 + $0x10] sm:$0xff]
    %v2279 = vld [vmem:[%s13 + $0x18] sm:$0xff]
    %v2280 = vld [vmem:[%s13 + $0x20] sm:$0xff]
    %v2281 = vld [vmem:[%s13 + $0x28] sm:$0xff]
    %v2282 = vld [vmem:[%s13 + $0x30] sm:$0xff]
    %v2283 = vld [vmem:[%s13 + $0x38] sm:$0xff]
    %v2284 = vld [vmem:[%s13 + $0x40] sm:$0xff]
    %v2285 = vld [vmem:[%s13 + $0x48] sm:$0xff]
    %v2286 = vld [vmem:[%s13 + $0x50] sm:$0xff]
    %v2287 = vld [vmem:[%s13 + $0x58] sm:$0xff]
    %v2288 = vld [vmem:[%s13 + $0x60] sm:$0xff]
    %v2289 = vld [vmem:[%s13 + $0x68] sm:$0xff]
    %v2290 = vld [vmem:[%s13 + $0x70] sm:$0xff]
    %v2291 = vld [vmem:[%s13 + $0x78] sm:$0xff]
    %v2292 = vld [vmem:[%s14] sm:$0x1]
    %v2294 = vlaneseq
    %v2295 = vshrl.u32 %v2294, 7
    %v2296 = vsub.s32 0, %v2295
    %v2297 = vrot.slane %v2292, %v2296
    %2299 = vmatprep.subr.mxu0 0.0
    %2300 = vmatpush1.msra.mxu0 %v2276
    %2301 = vmatprep.subr.mxu0 0.0
    %2302 = vmatpush1.msra.mxu0 %v2277
    %2303 = vmatprep.subr.mxu0 0.0
    %2304 = vmatpush1.msra.mxu0 %v2278
    %2305 = vmatprep.subr.mxu0 0.0
    %2306 = vmatpush1.msra.mxu0 %v2279
    %2307 = vmatprep.subr.mxu0 0.0
    %2308 = vmatpush1.msra.mxu0 %v2280
    %2309 = vmatprep.subr.mxu0 0.0
    %2310 = vmatpush1.msra.mxu0 %v2281
    %2311 = vmatprep.subr.mxu0 0.0
    %2312 = vmatpush1.msra.mxu0 %v2282
    %2313 = vmatprep.subr.mxu0 0.0
    %2314 = vmatpush1.msra.mxu0 %v2283
    %2315 = vmatprep.subr.mxu0 0.0
    %2316 = vmatpush1.msra.mxu0 %v2284
    %2317 = vmatprep.subr.mxu0 0.0
    %2318 = vmatpush1.msra.mxu0 %v2285
    %2319 = vmatprep.subr.mxu0 0.0
    %2320 = vmatpush1.msra.mxu0 %v2286
    %2321 = vmatprep.subr.mxu0 0.0
    %2322 = vmatpush1.msra.mxu0 %v2287
    %2323 = vmatprep.subr.mxu0 0.0
    %2324 = vmatpush1.msra.mxu0 %v2288
    %2325 = vmatprep.subr.mxu0 0.0
    %2326 = vmatpush1.msra.mxu0 %v2289
    %2327 = vmatprep.subr.mxu0 0.0
    %2328 = vmatpush1.msra.mxu0 %v2290
    %2329 = vmatprep.subr.mxu0 0.0
    %2330 = vmatpush1.msra.mxu0 %v2291
    %2331 = vmatprep.subr.mxu0 0.0
    %2332 = vmatpush1.msra.mxu0 0.0
    %2333 = vmatprep.subr.mxu0 0.0
    %2334 = vmatpush1.msra.mxu0 0.0
    %2335 = vmatprep.subr.mxu0 0.0
    %2336 = vmatpush1.msra.mxu0 0.0
    %2337 = vmatprep.subr.mxu0 0.0
    %2338 = vmatpush1.msra.mxu0 0.0
    %2339 = vmatprep.subr.mxu0 0.0
    %2340 = vmatpush1.msra.mxu0 0.0
    %2341 = vmatprep.subr.mxu0 0.0
    %2342 = vmatpush1.msra.mxu0 0.0
    %2343 = vmatprep.subr.mxu0 0.0
    %2344 = vmatpush1.msra.mxu0 0.0
    %2345 = vmatprep.subr.mxu0 0.0
    %2346 = vmatpush1.msra.mxu0 0.0
    %2347 = vmatprep.subr.mxu0 0.0
    %2348 = vmatpush1.msra.mxu0 0.0
    %2349 = vmatprep.subr.mxu0 0.0
    %2350 = vmatpush1.msra.mxu0 0.0
    %2351 = vmatprep.subr.mxu0 0.0
    %2352 = vmatpush1.msra.mxu0 0.0
    %2353 = vmatprep.subr.mxu0 0.0
    %2354 = vmatpush1.msra.mxu0 0.0
    %2355 = vmatprep.subr.mxu0 0.0
    %2356 = vmatpush1.msra.mxu0 0.0
    %2357 = vmatprep.subr.mxu0 0.0
    %2358 = vmatpush1.msra.mxu0 0.0
    %2359 = vmatprep.subr.mxu0 0.0
    %2360 = vmatpush1.msra.mxu0 0.0
    %2361 = vmatprep.subr.mxu0 0.0
    %2362 = vmatpush1.msra.mxu0 0.0
    %2363 = vmatprep.mubr.f32.mxu0 0.0
    %2364 = vmatmul.mubr.f32.gmra.mrb[0].mxu0 %v2272
    %v2365 = vpop.f32.mrb[0].mxu0
    %v2366 = vadd.f32 %v2297, %v2365
    %v2367 = vpop.f32.mrb[0].mxu0
    %2368 = vmatprep.mubr.f32.mxu0 0.0
    %2369 = vmatmul.mubr.f32.gmra.mrb[0].mxu0 %v2273
    %v2370 = vpop.f32.mrb[0].mxu0
    %v2371 = vadd.f32 %v2297, %v2370
    %v2372 = vpop.f32.mrb[0].mxu0
    %2373 = vmatprep.mubr.f32.mxu0 0.0
    %2374 = vmatmul.mubr.f32.gmra.mrb[0].mxu0 %v2274
    %v2375 = vpop.f32.mrb[0].mxu0
    %v2376 = vadd.f32 %v2297, %v2375
    %v2377 = vpop.f32.mrb[0].mxu0
    %2378 = vmatprep.mubr.f32.mxu0 0.0
    %2379 = vmatmul.mubr.f32.gmra.mrb[0].mxu0 %v2275
    %v2380 = vpop.f32.mrb[0].mxu0
    %v2381 = vadd.f32 %v2297, %v2380
    %v2382 = vpop.f32.mrb[0].mxu0
    %2383 = vdwg.mxu0
    %v2384 = vadd.f32 %v2156, %v2366
    %v2385 = vadd.f32 %v2157, %v2371
    %v2386 = vadd.f32 %v2158, %v2376
    %v2387 = vadd.f32 %v2159, %v2381
    %v2388 = vld [vmem:[%s17] sm:$0x1]
    %v2389 = vld [vmem:[%s18] sm:$0x1]
    %v2390 = vsel %vm222, %v2384, 0.0
    %2391 = vadd.xlane.f32.xlu0 %v2390
    %v2392 = vpop.xlane.xlu0 %2391
    %v2393 = vsel %vm222, %v2385, 0.0
    %2394 = vadd.xlane.f32.xlu0 %v2393
    %v2395 = vpop.xlane.xlu0 %2394
    %v2396 = vsel %vm222, %v2386, 0.0
    %2397 = vadd.xlane.f32.xlu0 %v2396
    %v2398 = vpop.xlane.xlu0 %2397
    %v2399 = vsel %vm222, %v2387, 0.0
    %2400 = vadd.xlane.f32.xlu0 %v2399
    %v2401 = vpop.xlane.xlu0 %2400
    %v2402 = vmul.f32 %v2392, %v2099
    %v2403 = vmul.f32 %v2395, %v2099
    %v2404 = vmul.f32 %v2398, %v2099
    %v2405 = vmul.f32 %v2401, %v2099
    %v2406 = vsub.f32 %v2384, %v2402
    %v2407 = vsub.f32 %v2385, %v2403
    %v2408 = vsub.f32 %v2386, %v2404
    %v2409 = vsub.f32 %v2387, %v2405
    %v2410 = vmul.f32 %v2406, %v2406
    %v2411 = vmul.f32 %v2407, %v2407
    %v2412 = vmul.f32 %v2408, %v2408
    %v2413 = vmul.f32 %v2409, %v2409
    %v2414 = vsel %vm222, %v2410, 0.0
    %2415 = vadd.xlane.f32.xlu0 %v2414
    %v2416 = vpop.xlane.xlu0 %2415
    %v2417 = vsel %vm222, %v2411, 0.0
    %2418 = vadd.xlane.f32.xlu0 %v2417
    %v2419 = vpop.xlane.xlu0 %2418
    %v2420 = vsel %vm222, %v2412, 0.0
    %2421 = vadd.xlane.f32.xlu0 %v2420
    %v2422 = vpop.xlane.xlu0 %2421
    %v2423 = vsel %vm222, %v2413, 0.0
    %2424 = vadd.xlane.f32.xlu0 %v2423
    %v2425 = vpop.xlane.xlu0 %2424
    %v2426 = vmul.f32 %v2416, %v2099
    %v2427 = vmul.f32 %v2419, %v2099
    %v2428 = vmul.f32 %v2422, %v2099
    %v2429 = vmul.f32 %v2425, %v2099
    %v2430 = vadd.f32 %v2426, 1e-05
    %v2431 = vadd.f32 %v2427, 1e-05
    %v2432 = vadd.f32 %v2428, 1e-05
    %v2433 = vadd.f32 %v2429, 1e-05
    %v2434 = vrsqrt.pop %v2430
    %v2435 = vrsqrt.pop %v2431
    %v2436 = vrsqrt.pop %v2432
    %v2437 = vrsqrt.pop %v2433
    %v2438 = vmul.f32 %v2406, %v2434
    %v2439 = vmul.f32 %v2407, %v2435
    %v2440 = vmul.f32 %v2408, %v2436
    %v2441 = vmul.f32 %v2409, %v2437
    %v2443 = vlaneseq
    %v2444 = vshrl.u32 %v2443, 7
    %v2445 = vsub.s32 0, %v2444
    %v2446 = vrot.slane %v2388, %v2445
    %v2448 = vmul.f32 %v2438, %v2446
    %v2449 = vmul.f32 %v2439, %v2446
    %v2450 = vmul.f32 %v2440, %v2446
    %v2451 = vmul.f32 %v2441, %v2446
    %v2453 = vlaneseq
    %v2454 = vshrl.u32 %v2453, 7
    %v2455 = vsub.s32 0, %v2454
    %v2456 = vrot.slane %v2389, %v2455
    %v2458 = vadd.f32 %v2448, %v2456
    %v2459 = vadd.f32 %v2449, %v2456
    %v2460 = vadd.f32 %v2450, %v2456
    %v2461 = vadd.f32 %v2451, %v2456
    %s2462 = scalar_lea.vmem %s3, 64
    %v2463 = vld [vmem:[%s2462] sm:$0xff]
    %v2464 = vld [vmem:[%s2462 + $0x8] sm:$0xff]
    %v2465 = vld [vmem:[%s2462 + $0x10] sm:$0xff]
    %v2466 = vld [vmem:[%s2462 + $0x18] sm:$0xff]
    %v2467 = vld [vmem:[%s2462 + $0x20] sm:$0xff]
    %v2468 = vld [vmem:[%s2462 + $0x28] sm:$0xff]
    %v2469 = vld [vmem:[%s2462 + $0x30] sm:$0xff]
    %v2470 = vld [vmem:[%s2462 + $0x38] sm:$0xff]
    %s2471 = scalar_lea.vmem %s4, 1
    %v2472 = vld [vmem:[%s2471] sm:$0x1]
    %v2474 = vlaneseq
    %v2475 = vshrl.u32 %v2474, 7
    %v2476 = vsub.s32 0, %v2475
    %v2477 = vrot.slane %v2472, %v2476
    %v2480 = vsel %vm222, %v2458, 0
    %v2483 = vsel %vm222, %v2459, 0
    %v2486 = vsel %vm222, %v2460, 0
    %v2489 = vsel %vm222, %v2461, 0
    %2491 = vmatprep.subr.mxu0 0.0
    %2492 = vmatpush1.msra.mxu0 %v2463
    %2493 = vmatprep.subr.mxu0 0.0
    %2494 = vmatpush1.msra.mxu0 %v2464
    %2495 = vmatprep.subr.mxu0 0.0
    %2496 = vmatpush1.msra.mxu0 %v2465
    %2497 = vmatprep.subr.mxu0 0.0
    %2498 = vmatpush1.msra.mxu0 %v2466
    %2499 = vmatprep.subr.mxu0 0.0
    %2500 = vmatpush1.msra.mxu0 %v2467
    %2501 = vmatprep.subr.mxu0 0.0
    %2502 = vmatpush1.msra.mxu0 %v2468
    %2503 = vmatprep.subr.mxu0 0.0
    %2504 = vmatpush1.msra.mxu0 %v2469
    %2505 = vmatprep.subr.mxu0 0.0
    %2506 = vmatpush1.msra.mxu0 %v2470
    %2507 = vmatprep.subr.mxu0 0.0
    %2508 = vmatpush1.msra.mxu0 0.0
    %2509 = vmatprep.subr.mxu0 0.0
    %2510 = vmatpush1.msra.mxu0 0.0
    %2511 = vmatprep.subr.mxu0 0.0
    %2512 = vmatpush1.msra.mxu0 0.0
    %2513 = vmatprep.subr.mxu0 0.0
    %2514 = vmatpush1.msra.mxu0 0.0
    %2515 = vmatprep.subr.mxu0 0.0
    %2516 = vmatpush1.msra.mxu0 0.0
    %2517 = vmatprep.subr.mxu0 0.0
    %2518 = vmatpush1.msra.mxu0 0.0
    %2519 = vmatprep.subr.mxu0 0.0
    %2520 = vmatpush1.msra.mxu0 0.0
    %2521 = vmatprep.subr.mxu0 0.0
    %2522 = vmatpush1.msra.mxu0 0.0
    %2523 = vmatprep.subr.mxu0 0.0
    %2524 = vmatpush1.msra.mxu0 0.0
    %2525 = vmatprep.subr.mxu0 0.0
    %2526 = vmatpush1.msra.mxu0 0.0
    %2527 = vmatprep.subr.mxu0 0.0
    %2528 = vmatpush1.msra.mxu0 0.0
    %2529 = vmatprep.subr.mxu0 0.0
    %2530 = vmatpush1.msra.mxu0 0.0
    %2531 = vmatprep.subr.mxu0 0.0
    %2532 = vmatpush1.msra.mxu0 0.0
    %2533 = vmatprep.subr.mxu0 0.0
    %2534 = vmatpush1.msra.mxu0 0.0
    %2535 = vmatprep.subr.mxu0 0.0
    %2536 = vmatpush1.msra.mxu0 0.0
    %2537 = vmatprep.subr.mxu0 0.0
    %2538 = vmatpush1.msra.mxu0 0.0
    %2539 = vmatprep.subr.mxu0 0.0
    %2540 = vmatpush1.msra.mxu0 0.0
    %2541 = vmatprep.subr.mxu0 0.0
    %2542 = vmatpush1.msra.mxu0 0.0
    %2543 = vmatprep.subr.mxu0 0.0
    %2544 = vmatpush1.msra.mxu0 0.0
    %2545 = vmatprep.subr.mxu0 0.0
    %2546 = vmatpush1.msra.mxu0 0.0
    %2547 = vmatprep.subr.mxu0 0.0
    %2548 = vmatpush1.msra.mxu0 0.0
    %2549 = vmatprep.subr.mxu0 0.0
    %2550 = vmatpush1.msra.mxu0 0.0
    %2551 = vmatprep.subr.mxu0 0.0
    %2552 = vmatpush1.msra.mxu0 0.0
    %2553 = vmatprep.subr.mxu0 0.0
    %2554 = vmatpush1.msra.mxu0 0.0
    %2555 = vmatprep.mubr.f32.mxu0 0.0
    %2556 = vmatmul.mubr.f32.gmra.mrb[0].mxu0 %v2480
    %v2557 = vpop.f32.mrb[0].mxu0
    %v2558 = vadd.f32 %v2477, %v2557
    %v2559 = vpop.f32.mrb[0].mxu0
    %2560 = vmatprep.mubr.f32.mxu0 0.0
    %2561 = vmatmul.mubr.f32.gmra.mrb[0].mxu0 %v2483
    %v2562 = vpop.f32.mrb[0].mxu0
    %v2563 = vadd.f32 %v2477, %v2562
    %v2564 = vpop.f32.mrb[0].mxu0
    %2565 = vmatprep.mubr.f32.mxu0 0.0
    %2566 = vmatmul.mubr.f32.gmra.mrb[0].mxu0 %v2486
    %v2567 = vpop.f32.mrb[0].mxu0
    %v2568 = vadd.f32 %v2477, %v2567
    %v2569 = vpop.f32.mrb[0].mxu0
    %2570 = vmatprep.mubr.f32.mxu0 0.0
    %2571 = vmatmul.mubr.f32.gmra.mrb[0].mxu0 %v2489
    %v2572 = vpop.f32.mrb[0].mxu0
    %v2573 = vadd.f32 %v2477, %v2572
    %v2574 = vpop.f32.mrb[0].mxu0
    %2575 = vdwg.mxu0
    %v2576 = vmul.f32 %v2558, 0.35355338
    %v2577 = vmul.f32 %v2563, 0.35355338
    %v2578 = vmul.f32 %v2568, 0.35355338
    %v2579 = vmul.f32 %v2573, 0.35355338
    %s2580 = scalar_lea.vmem %s5, 64
    %v2581 = vld [vmem:[%s2580] sm:$0xff]
    %v2582 = vld [vmem:[%s2580 + $0x8] sm:$0xff]
    %v2583 = vld [vmem:[%s2580 + $0x10] sm:$0xff]
    %v2584 = vld [vmem:[%s2580 + $0x18] sm:$0xff]
    %v2585 = vld [vmem:[%s2580 + $0x20] sm:$0xff]
    %v2586 = vld [vmem:[%s2580 + $0x28] sm:$0xff]
    %v2587 = vld [vmem:[%s2580 + $0x30] sm:$0xff]
    %v2588 = vld [vmem:[%s2580 + $0x38] sm:$0xff]
    %s2589 = scalar_lea.vmem %s6, 1
    %v2590 = vld [vmem:[%s2589] sm:$0x1]
    %v2592 = vlaneseq
    %v2593 = vshrl.u32 %v2592, 7
    %v2594 = vsub.s32 0, %v2593
    %v2595 = vrot.slane %v2590, %v2594
    %2597 = vmatprep.subr.mxu0 0.0
    %2598 = vmatpush1.msra.mxu0 %v2581
    %2599 = vmatprep.subr.mxu0 0.0
    %2600 = vmatpush1.msra.mxu0 %v2582
    %2601 = vmatprep.subr.mxu0 0.0
    %2602 = vmatpush1.msra.mxu0 %v2583
    %2603 = vmatprep.subr.mxu0 0.0
    %2604 = vmatpush1.msra.mxu0 %v2584
    %2605 = vmatprep.subr.mxu0 0.0
    %2606 = vmatpush1.msra.mxu0 %v2585
    %2607 = vmatprep.subr.mxu0 0.0
    %2608 = vmatpush1.msra.mxu0 %v2586
    %2609 = vmatprep.subr.mxu0 0.0
    %2610 = vmatpush1.msra.mxu0 %v2587
    %2611 = vmatprep.subr.mxu0 0.0
    %2612 = vmatpush1.msra.mxu0 %v2588
    %2613 = vmatprep.subr.mxu0 0.0
    %2614 = vmatpush1.msra.mxu0 0.0
    %2615 = vmatprep.subr.mxu0 0.0
    %2616 = vmatpush1.msra.mxu0 0.0
    %2617 = vmatprep.subr.mxu0 0.0
    %2618 = vmatpush1.msra.mxu0 0.0
    %2619 = vmatprep.subr.mxu0 0.0
    %2620 = vmatpush1.msra.mxu0 0.0
    %2621 = vmatprep.subr.mxu0 0.0
    %2622 = vmatpush1.msra.mxu0 0.0
    %2623 = vmatprep.subr.mxu0 0.0
    %2624 = vmatpush1.msra.mxu0 0.0
    %2625 = vmatprep.subr.mxu0 0.0
    %2626 = vmatpush1.msra.mxu0 0.0
    %2627 = vmatprep.subr.mxu0 0.0
    %2628 = vmatpush1.msra.mxu0 0.0
    %2629 = vmatprep.subr.mxu0 0.0
    %2630 = vmatpush1.msra.mxu0 0.0
    %2631 = vmatprep.subr.mxu0 0.0
    %2632 = vmatpush1.msra.mxu0 0.0
    %2633 = vmatprep.subr.mxu0 0.0
    %2634 = vmatpush1.msra.mxu0 0.0
    %2635 = vmatprep.subr.mxu0 0.0
    %2636 = vmatpush1.msra.mxu0 0.0
    %2637 = vmatprep.subr.mxu0 0.0
    %2638 = vmatpush1.msra.mxu0 0.0
    %2639 = vmatprep.subr.mxu0 0.0
    %2640 = vmatpush1.msra.mxu0 0.0
    %2641 = vmatprep.subr.mxu0 0.0
    %2642 = vmatpush1.msra.mxu0 0.0
    %2643 = vmatprep.subr.mxu0 0.0
    %2644 = vmatpush1.msra.mxu0 0.0
    %2645 = vmatprep.subr.mxu0 0.0
    %2646 = vmatpush1.msra.mxu0 0.0
    %2647 = vmatprep.subr.mxu0 0.0
    %2648 = vmatpush1.msra.mxu0 0.0
    %2649 = vmatprep.subr.mxu0 0.0
    %2650 = vmatpush1.msra.mxu0 0.0
    %2651 = vmatprep.subr.mxu0 0.0
    %2652 = vmatpush1.msra.mxu0 0.0
    %2653 = vmatprep.subr.mxu0 0.0
    %2654 = vmatpush1.msra.mxu0 0.0
    %2655 = vmatprep.subr.mxu0 0.0
    %2656 = vmatpush1.msra.mxu0 0.0
    %2657 = vmatprep.subr.mxu0 0.0
    %2658 = vmatpush1.msra.mxu0 0.0
    %2659 = vmatprep.subr.mxu0 0.0
    %2660 = vmatpush1.msra.mxu0 0.0
    %2661 = vmatprep.mubr.f32.mxu0 0.0
    %2662 = vmatmul.mubr.f32.gmra.mrb[0].mxu0 %v2480
    %v2663 = vpop.f32.mrb[0].mxu0
    %v2664 = vadd.f32 %v2595, %v2663
    %v2665 = vpop.f32.mrb[0].mxu0
    %2666 = vmatprep.mubr.f32.mxu0 0.0
    %2667 = vmatmul.mubr.f32.gmra.mrb[0].mxu0 %v2483
    %v2668 = vpop.f32.mrb[0].mxu0
    %v2669 = vadd.f32 %v2595, %v2668
    %v2670 = vpop.f32.mrb[0].mxu0
    %2671 = vmatprep.mubr.f32.mxu0 0.0
    %2672 = vmatmul.mubr.f32.gmra.mrb[0].mxu0 %v2486
    %v2673 = vpop.f32.mrb[0].mxu0
    %v2674 = vadd.f32 %v2595, %v2673
    %v2675 = vpop.f32.mrb[0].mxu0
    %2676 = vmatprep.mubr.f32.mxu0 0.0
    %2677 = vmatmul.mubr.f32.gmra.mrb[0].mxu0 %v2489
    %v2678 = vpop.f32.mrb[0].mxu0
    %v2679 = vadd.f32 %v2595, %v2678
    %v2680 = vpop.f32.mrb[0].mxu0
    %2681 = vdwg.mxu0
    %s2682 = scalar_lea.vmem %s7, 64
    %v2683 = vld [vmem:[%s2682] sm:$0xff]
    %v2684 = vld [vmem:[%s2682 + $0x8] sm:$0xff]
    %v2685 = vld [vmem:[%s2682 + $0x10] sm:$0xff]
    %v2686 = vld [vmem:[%s2682 + $0x18] sm:$0xff]
    %v2687 = vld [vmem:[%s2682 + $0x20] sm:$0xff]
    %v2688 = vld [vmem:[%s2682 + $0x28] sm:$0xff]
    %v2689 = vld [vmem:[%s2682 + $0x30] sm:$0xff]
    %v2690 = vld [vmem:[%s2682 + $0x38] sm:$0xff]
    %s2691 = scalar_lea.vmem %s8, 1
    %v2692 = vld [vmem:[%s2691] sm:$0x1]
    %v2694 = vlaneseq
    %v2695 = vshrl.u32 %v2694, 7
    %v2696 = vsub.s32 0, %v2695
    %v2697 = vrot.slane %v2692, %v2696
    %2699 = vmatprep.subr.mxu0 0.0
    %2700 = vmatpush1.msra.mxu0 %v2683
    %2701 = vmatprep.subr.mxu0 0.0
    %2702 = vmatpush1.msra.mxu0 %v2684
    %2703 = vmatprep.subr.mxu0 0.0
    %2704 = vmatpush1.msra.mxu0 %v2685
    %2705 = vmatprep.subr.mxu0 0.0
    %2706 = vmatpush1.msra.mxu0 %v2686
    %2707 = vmatprep.subr.mxu0 0.0
    %2708 = vmatpush1.msra.mxu0 %v2687
    %2709 = vmatprep.subr.mxu0 0.0
    %2710 = vmatpush1.msra.mxu0 %v2688
    %2711 = vmatprep.subr.mxu0 0.0
    %2712 = vmatpush1.msra.mxu0 %v2689
    %2713 = vmatprep.subr.mxu0 0.0
    %2714 = vmatpush1.msra.mxu0 %v2690
    %2715 = vmatprep.subr.mxu0 0.0
    %2716 = vmatpush1.msra.mxu0 0.0
    %2717 = vmatprep.subr.mxu0 0.0
    %2718 = vmatpush1.msra.mxu0 0.0
    %2719 = vmatprep.subr.mxu0 0.0
    %2720 = vmatpush1.msra.mxu0 0.0
    %2721 = vmatprep.subr.mxu0 0.0
    %2722 = vmatpush1.msra.mxu0 0.0
    %2723 = vmatprep.subr.mxu0 0.0
    %2724 = vmatpush1.msra.mxu0 0.0
    %2725 = vmatprep.subr.mxu0 0.0
    %2726 = vmatpush1.msra.mxu0 0.0
    %2727 = vmatprep.subr.mxu0 0.0
    %2728 = vmatpush1.msra.mxu0 0.0
    %2729 = vmatprep.subr.mxu0 0.0
    %2730 = vmatpush1.msra.mxu0 0.0
    %2731 = vmatprep.subr.mxu0 0.0
    %2732 = vmatpush1.msra.mxu0 0.0
    %2733 = vmatprep.subr.mxu0 0.0
    %2734 = vmatpush1.msra.mxu0 0.0
    %2735 = vmatprep.subr.mxu0 0.0
    %2736 = vmatpush1.msra.mxu0 0.0
    %2737 = vmatprep.subr.mxu0 0.0
    %2738 = vmatpush1.msra.mxu0 0.0
    %2739 = vmatprep.subr.mxu0 0.0
    %2740 = vmatpush1.msra.mxu0 0.0
    %2741 = vmatprep.subr.mxu0 0.0
    %2742 = vmatpush1.msra.mxu0 0.0
    %2743 = vmatprep.subr.mxu0 0.0
    %2744 = vmatpush1.msra.mxu0 0.0
    %2745 = vmatprep.subr.mxu0 0.0
    %2746 = vmatpush1.msra.mxu0 0.0
    %2747 = vmatprep.subr.mxu0 0.0
    %2748 = vmatpush1.msra.mxu0 0.0
    %2749 = vmatprep.subr.mxu0 0.0
    %2750 = vmatpush1.msra.mxu0 0.0
    %2751 = vmatprep.subr.mxu0 0.0
    %2752 = vmatpush1.msra.mxu0 0.0
    %2753 = vmatprep.subr.mxu0 0.0
    %2754 = vmatpush1.msra.mxu0 0.0
    %2755 = vmatprep.subr.mxu0 0.0
    %2756 = vmatpush1.msra.mxu0 0.0
    %2757 = vmatprep.subr.mxu0 0.0
    %2758 = vmatpush1.msra.mxu0 0.0
    %2759 = vmatprep.subr.mxu0 0.0
    %2760 = vmatpush1.msra.mxu0 0.0
    %2761 = vmatprep.subr.mxu0 0.0
    %2762 = vmatpush1.msra.mxu0 0.0
    %2763 = vmatprep.mubr.f32.mxu0 0.0
    %2764 = vmatmul.mubr.f32.gmra.mrb[0].mxu0 %v2480
    %v2765 = vpop.f32.mrb[0].mxu0
    %v2766 = vadd.f32 %v2697, %v2765
    %v2767 = vpop.f32.mrb[0].mxu0
    %2768 = vmatprep.mubr.f32.mxu0 0.0
    %2769 = vmatmul.mubr.f32.gmra.mrb[0].mxu0 %v2483
    %v2770 = vpop.f32.mrb[0].mxu0
    %v2771 = vadd.f32 %v2697, %v2770
    %v2772 = vpop.f32.mrb[0].mxu0
    %2773 = vmatprep.mubr.f32.mxu0 0.0
    %2774 = vmatmul.mubr.f32.gmra.mrb[0].mxu0 %v2486
    %v2775 = vpop.f32.mrb[0].mxu0
    %v2776 = vadd.f32 %v2697, %v2775
    %v2777 = vpop.f32.mrb[0].mxu0
    %2778 = vmatprep.mubr.f32.mxu0 0.0
    %2779 = vmatmul.mubr.f32.gmra.mrb[0].mxu0 %v2489
    %v2780 = vpop.f32.mrb[0].mxu0
    %v2781 = vadd.f32 %v2697, %v2780
    %v2782 = vpop.f32.mrb[0].mxu0
    %2783 = vdwg.mxu0
    %2788 = vrot.lane.b32.xlu0 %v2576, 120
    %v2789 = vpop.permute.xlu0 %2788
    %2790 = vrot.lane.b32.xlu0 %v2577, 120
    %v2791 = vpop.permute.xlu0 %2790
    %2792 = vrot.lane.b32.xlu0 %v2578, 120
    %v2793 = vpop.permute.xlu0 %2792
    %2794 = vrot.lane.b32.xlu0 %v2579, 120
    %v2795 = vpop.permute.xlu0 %2794
    %2796 = vrot.lane.b32.xlu0 %v2576, 112
    %v2797 = vpop.permute.xlu0 %2796
    %2798 = vrot.lane.b32.xlu0 %v2577, 112
    %v2799 = vpop.permute.xlu0 %2798
    %2800 = vrot.lane.b32.xlu0 %v2578, 112
    %v2801 = vpop.permute.xlu0 %2800
    %2802 = vrot.lane.b32.xlu0 %v2579, 112
    %v2803 = vpop.permute.xlu0 %2802
    %2804 = vrot.lane.b32.xlu0 %v2576, 104
    %v2805 = vpop.permute.xlu0 %2804
    %2806 = vrot.lane.b32.xlu0 %v2577, 104
    %v2807 = vpop.permute.xlu0 %2806
    %2808 = vrot.lane.b32.xlu0 %v2578, 104
    %v2809 = vpop.permute.xlu0 %2808
    %2810 = vrot.lane.b32.xlu0 %v2579, 104
    %v2811 = vpop.permute.xlu0 %2810
    %2812 = vrot.lane.b32.xlu0 %v2576, 96
    %v2813 = vpop.permute.xlu0 %2812
    %2814 = vrot.lane.b32.xlu0 %v2577, 96
    %v2815 = vpop.permute.xlu0 %2814
    %2816 = vrot.lane.b32.xlu0 %v2578, 96
    %v2817 = vpop.permute.xlu0 %2816
    %2818 = vrot.lane.b32.xlu0 %v2579, 96
    %v2819 = vpop.permute.xlu0 %2818
    %2820 = vrot.lane.b32.xlu0 %v2576, 88
    %v2821 = vpop.permute.xlu0 %2820
    %2822 = vrot.lane.b32.xlu0 %v2577, 88
    %v2823 = vpop.permute.xlu0 %2822
    %2824 = vrot.lane.b32.xlu0 %v2578, 88
    %v2825 = vpop.permute.xlu0 %2824
    %2826 = vrot.lane.b32.xlu0 %v2579, 88
    %v2827 = vpop.permute.xlu0 %2826
    %2828 = vrot.lane.b32.xlu0 %v2576, 80
    %v2829 = vpop.permute.xlu0 %2828
    %2830 = vrot.lane.b32.xlu0 %v2577, 80
    %v2831 = vpop.permute.xlu0 %2830
    %2832 = vrot.lane.b32.xlu0 %v2578, 80
    %v2833 = vpop.permute.xlu0 %2832
    %2834 = vrot.lane.b32.xlu0 %v2579, 80
    %v2835 = vpop.permute.xlu0 %2834
    %2836 = vrot.lane.b32.xlu0 %v2576, 72
    %v2837 = vpop.permute.xlu0 %2836
    %2838 = vrot.lane.b32.xlu0 %v2577, 72
    %v2839 = vpop.permute.xlu0 %2838
    %2840 = vrot.lane.b32.xlu0 %v2578, 72
    %v2841 = vpop.permute.xlu0 %2840
    %2842 = vrot.lane.b32.xlu0 %v2579, 72
    %v2843 = vpop.permute.xlu0 %2842
    %2848 = vrot.lane.b32.xlu0 %v2664, 120
    %v2849 = vpop.permute.xlu0 %2848
    %2850 = vrot.lane.b32.xlu0 %v2669, 120
    %v2851 = vpop.permute.xlu0 %2850
    %2852 = vrot.lane.b32.xlu0 %v2674, 120
    %v2853 = vpop.permute.xlu0 %2852
    %2854 = vrot.lane.b32.xlu0 %v2679, 120
    %v2855 = vpop.permute.xlu0 %2854
    %2856 = vrot.lane.b32.xlu0 %v2664, 112
    %v2857 = vpop.permute.xlu0 %2856
    %2858 = vrot.lane.b32.xlu0 %v2669, 112
    %v2859 = vpop.permute.xlu0 %2858
    %2860 = vrot.lane.b32.xlu0 %v2674, 112
    %v2861 = vpop.permute.xlu0 %2860
    %2862 = vrot.lane.b32.xlu0 %v2679, 112
    %v2863 = vpop.permute.xlu0 %2862
    %2864 = vrot.lane.b32.xlu0 %v2664, 104
    %v2865 = vpop.permute.xlu0 %2864
    %2866 = vrot.lane.b32.xlu0 %v2669, 104
    %v2867 = vpop.permute.xlu0 %2866
    %2868 = vrot.lane.b32.xlu0 %v2674, 104
    %v2869 = vpop.permute.xlu0 %2868
    %2870 = vrot.lane.b32.xlu0 %v2679, 104
    %v2871 = vpop.permute.xlu0 %2870
    %2872 = vrot.lane.b32.xlu0 %v2664, 96
    %v2873 = vpop.permute.xlu0 %2872
    %2874 = vrot.lane.b32.xlu0 %v2669, 96
    %v2875 = vpop.permute.xlu0 %2874
    %2876 = vrot.lane.b32.xlu0 %v2674, 96
    %v2877 = vpop.permute.xlu0 %2876
    %2878 = vrot.lane.b32.xlu0 %v2679, 96
    %v2879 = vpop.permute.xlu0 %2878
    %2880 = vrot.lane.b32.xlu0 %v2664, 88
    %v2881 = vpop.permute.xlu0 %2880
    %2882 = vrot.lane.b32.xlu0 %v2669, 88
    %v2883 = vpop.permute.xlu0 %2882
    %2884 = vrot.lane.b32.xlu0 %v2674, 88
    %v2885 = vpop.permute.xlu0 %2884
    %2886 = vrot.lane.b32.xlu0 %v2679, 88
    %v2887 = vpop.permute.xlu0 %2886
    %2888 = vrot.lane.b32.xlu0 %v2664, 80
    %v2889 = vpop.permute.xlu0 %2888
    %2890 = vrot.lane.b32.xlu0 %v2669, 80
    %v2891 = vpop.permute.xlu0 %2890
    %2892 = vrot.lane.b32.xlu0 %v2674, 80
    %v2893 = vpop.permute.xlu0 %2892
    %2894 = vrot.lane.b32.xlu0 %v2679, 80
    %v2895 = vpop.permute.xlu0 %2894
    %2896 = vrot.lane.b32.xlu0 %v2664, 72
    %v2897 = vpop.permute.xlu0 %2896
    %2898 = vrot.lane.b32.xlu0 %v2669, 72
    %v2899 = vpop.permute.xlu0 %2898
    %2900 = vrot.lane.b32.xlu0 %v2674, 72
    %v2901 = vpop.permute.xlu0 %2900
    %2902 = vrot.lane.b32.xlu0 %v2679, 72
    %v2903 = vpop.permute.xlu0 %2902
    %2908 = vrot.lane.b32.xlu0 %v2766, 120
    %v2909 = vpop.permute.xlu0 %2908
    %2910 = vrot.lane.b32.xlu0 %v2771, 120
    %v2911 = vpop.permute.xlu0 %2910
    %2912 = vrot.lane.b32.xlu0 %v2776, 120
    %v2913 = vpop.permute.xlu0 %2912
    %2914 = vrot.lane.b32.xlu0 %v2781, 120
    %v2915 = vpop.permute.xlu0 %2914
    %2920 = vrot.lane.b32.xlu0 %v2766, 112
    %v2921 = vpop.permute.xlu0 %2920
    %2922 = vrot.lane.b32.xlu0 %v2771, 112
    %v2923 = vpop.permute.xlu0 %2922
    %2924 = vrot.lane.b32.xlu0 %v2776, 112
    %v2925 = vpop.permute.xlu0 %2924
    %2926 = vrot.lane.b32.xlu0 %v2781, 112
    %v2927 = vpop.permute.xlu0 %2926
    %2932 = vrot.lane.b32.xlu0 %v2766, 104
    %v2933 = vpop.permute.xlu0 %2932
    %2934 = vrot.lane.b32.xlu0 %v2771, 104
    %v2935 = vpop.permute.xlu0 %2934
    %2936 = vrot.lane.b32.xlu0 %v2776, 104
    %v2937 = vpop.permute.xlu0 %2936
    %2938 = vrot.lane.b32.xlu0 %v2781, 104
    %v2939 = vpop.permute.xlu0 %2938
    %2944 = vrot.lane.b32.xlu0 %v2766, 96
    %v2945 = vpop.permute.xlu0 %2944
    %2946 = vrot.lane.b32.xlu0 %v2771, 96
    %v2947 = vpop.permute.xlu0 %2946
    %2948 = vrot.lane.b32.xlu0 %v2776, 96
    %v2949 = vpop.permute.xlu0 %2948
    %2950 = vrot.lane.b32.xlu0 %v2781, 96
    %v2951 = vpop.permute.xlu0 %2950
    %2956 = vrot.lane.b32.xlu0 %v2766, 88
    %v2957 = vpop.permute.xlu0 %2956
    %2958 = vrot.lane.b32.xlu0 %v2771, 88
    %v2959 = vpop.permute.xlu0 %2958
    %2960 = vrot.lane.b32.xlu0 %v2776, 88
    %v2961 = vpop.permute.xlu0 %2960
    %2962 = vrot.lane.b32.xlu0 %v2781, 88
    %v2963 = vpop.permute.xlu0 %2962
    %2968 = vrot.lane.b32.xlu0 %v2766, 80
    %v2969 = vpop.permute.xlu0 %2968
    %2970 = vrot.lane.b32.xlu0 %v2771, 80
    %v2971 = vpop.permute.xlu0 %2970
    %2972 = vrot.lane.b32.xlu0 %v2776, 80
    %v2973 = vpop.permute.xlu0 %2972
    %2974 = vrot.lane.b32.xlu0 %v2781, 80
    %v2975 = vpop.permute.xlu0 %2974
    %2980 = vrot.lane.b32.xlu0 %v2766, 72
    %v2981 = vpop.permute.xlu0 %2980
    %2982 = vrot.lane.b32.xlu0 %v2771, 72
    %v2983 = vpop.permute.xlu0 %2982
    %2984 = vrot.lane.b32.xlu0 %v2776, 72
    %v2985 = vpop.permute.xlu0 %2984
    %2986 = vrot.lane.b32.xlu0 %v2781, 72
    %v2987 = vpop.permute.xlu0 %2986
    %v2992 = vsel %vm732, %v2576, 0
    %v2994 = vsel %vm732, %v2577, 0
    %v2996 = vsel %vm732, %v2578, 0
    %v2998 = vsel %vm732, %v2579, 0
    %v3000 = vsel %vm732, %v2789, 0
    %v3002 = vsel %vm732, %v2791, 0
    %v3004 = vsel %vm732, %v2793, 0
    %v3006 = vsel %vm732, %v2795, 0
    %v3008 = vsel %vm732, %v2797, 0
    %v3010 = vsel %vm732, %v2799, 0
    %v3012 = vsel %vm732, %v2801, 0
    %v3014 = vsel %vm732, %v2803, 0
    %v3016 = vsel %vm732, %v2805, 0
    %v3018 = vsel %vm732, %v2807, 0
    %v3020 = vsel %vm732, %v2809, 0
    %v3022 = vsel %vm732, %v2811, 0
    %v3024 = vsel %vm732, %v2813, 0
    %v3026 = vsel %vm732, %v2815, 0
    %v3028 = vsel %vm732, %v2817, 0
    %v3030 = vsel %vm732, %v2819, 0
    %v3032 = vsel %vm732, %v2821, 0
    %v3034 = vsel %vm732, %v2823, 0
    %v3036 = vsel %vm732, %v2825, 0
    %v3038 = vsel %vm732, %v2827, 0
    %v3040 = vsel %vm732, %v2829, 0
    %v3042 = vsel %vm732, %v2831, 0
    %v3044 = vsel %vm732, %v2833, 0
    %v3046 = vsel %vm732, %v2835, 0
    %v3048 = vsel %vm732, %v2837, 0
    %v3050 = vsel %vm732, %v2839, 0
    %v3052 = vsel %vm732, %v2841, 0
    %v3054 = vsel %vm732, %v2843, 0
    %v3056 = vsel %vm732, %v2664, 0
    %v3058 = vsel %vm732, %v2669, 0
    %v3060 = vsel %vm732, %v2674, 0
    %v3062 = vsel %vm732, %v2679, 0
    %v3064 = vsel %vm732, %v2849, 0
    %v3066 = vsel %vm732, %v2851, 0
    %v3068 = vsel %vm732, %v2853, 0
    %v3070 = vsel %vm732, %v2855, 0
    %v3072 = vsel %vm732, %v2857, 0
    %v3074 = vsel %vm732, %v2859, 0
    %v3076 = vsel %vm732, %v2861, 0
    %v3078 = vsel %vm732, %v2863, 0
    %v3080 = vsel %vm732, %v2865, 0
    %v3082 = vsel %vm732, %v2867, 0
    %v3084 = vsel %vm732, %v2869, 0
    %v3086 = vsel %vm732, %v2871, 0
    %v3088 = vsel %vm732, %v2873, 0
    %v3090 = vsel %vm732, %v2875, 0
    %v3092 = vsel %vm732, %v2877, 0
    %v3094 = vsel %vm732, %v2879, 0
    %v3096 = vsel %vm732, %v2881, 0
    %v3098 = vsel %vm732, %v2883, 0
    %v3100 = vsel %vm732, %v2885, 0
    %v3102 = vsel %vm732, %v2887, 0
    %v3104 = vsel %vm732, %v2889, 0
    %v3106 = vsel %vm732, %v2891, 0
    %v3108 = vsel %vm732, %v2893, 0
    %v3110 = vsel %vm732, %v2895, 0
    %v3112 = vsel %vm732, %v2897, 0
    %v3114 = vsel %vm732, %v2899, 0
    %v3116 = vsel %vm732, %v2901, 0
    %v3118 = vsel %vm732, %v2903, 0
    %3120 = vmatprep.subr.mxu0 0.0
    %3121 = vmatpush1.xpose.msra.mxu0 %v3056
    %3122 = vmatprep.subr.mxu0 0.0
    %3123 = vmatpush1.xpose.msra.mxu0 %v3058
    %3124 = vmatprep.subr.mxu0 0.0
    %3125 = vmatpush1.xpose.msra.mxu0 %v3060
    %3126 = vmatprep.subr.mxu0 0.0
    %3127 = vmatpush1.xpose.msra.mxu0 %v3062
    %3128 = vmatprep.subr.mxu0 0.0
    %3129 = vmatpush1.xpose.msra.mxu0 %v3064
    %3130 = vmatprep.subr.mxu0 0.0
    %3131 = vmatpush1.xpose.msra.mxu0 %v3066
    %3132 = vmatprep.subr.mxu0 0.0
    %3133 = vmatpush1.xpose.msra.mxu0 %v3068
    %3134 = vmatprep.subr.mxu0 0.0
    %3135 = vmatpush1.xpose.msra.mxu0 %v3070
    %3136 = vmatprep.subr.mxu0 0.0
    %3137 = vmatpush1.xpose.msra.mxu0 %v3072
    %3138 = vmatprep.subr.mxu0 0.0
    %3139 = vmatpush1.xpose.msra.mxu0 %v3074
    %3140 = vmatprep.subr.mxu0 0.0
    %3141 = vmatpush1.xpose.msra.mxu0 %v3076
    %3142 = vmatprep.subr.mxu0 0.0
    %3143 = vmatpush1.xpose.msra.mxu0 %v3078
    %3144 = vmatprep.subr.mxu0 0.0
    %3145 = vmatpush1.xpose.msra.mxu0 %v3080
    %3146 = vmatprep.subr.mxu0 0.0
    %3147 = vmatpush1.xpose.msra.mxu0 %v3082
    %3148 = vmatprep.subr.mxu0 0.0
    %3149 = vmatpush1.xpose.msra.mxu0 %v3084
    %3150 = vmatprep.subr.mxu0 0.0
    %3151 = vmatpush1.xpose.msra.mxu0 %v3086
    %3152 = vmatprep.subr.mxu0 0.0
    %3153 = vmatpush1.xpose.msra.mxu0 %v3088
    %3154 = vmatprep.subr.mxu0 0.0
    %3155 = vmatpush1.xpose.msra.mxu0 %v3090
    %3156 = vmatprep.subr.mxu0 0.0
    %3157 = vmatpush1.xpose.msra.mxu0 %v3092
    %3158 = vmatprep.subr.mxu0 0.0
    %3159 = vmatpush1.xpose.msra.mxu0 %v3094
    %3160 = vmatprep.subr.mxu0 0.0
    %3161 = vmatpush1.xpose.msra.mxu0 %v3096
    %3162 = vmatprep.subr.mxu0 0.0
    %3163 = vmatpush1.xpose.msra.mxu0 %v3098
    %3164 = vmatprep.subr.mxu0 0.0
    %3165 = vmatpush1.xpose.msra.mxu0 %v3100
    %3166 = vmatprep.subr.mxu0 0.0
    %3167 = vmatpush1.xpose.msra.mxu0 %v3102
    %3168 = vmatprep.subr.mxu0 0.0
    %3169 = vmatpush1.xpose.msra.mxu0 %v3104
    %3170 = vmatprep.subr.mxu0 0.0
    %3171 = vmatpush1.xpose.msra.mxu0 %v3106
    %3172 = vmatprep.subr.mxu0 0.0
    %3173 = vmatpush1.xpose.msra.mxu0 %v3108
    %3174 = vmatprep.subr.mxu0 0.0
    %3175 = vmatpush1.xpose.msra.mxu0 %v3110
    %3176 = vmatprep.subr.mxu0 0.0
    %3177 = vmatpush1.xpose.msra.mxu0 %v3112
    %3178 = vmatprep.subr.mxu0 0.0
    %3179 = vmatpush1.xpose.msra.mxu0 %v3114
    %3180 = vmatprep.subr.mxu0 0.0
    %3181 = vmatpush1.xpose.msra.mxu0 %v3116
    %3182 = vmatprep.subr.mxu0 0.0
    %3183 = vmatpush1.xpose.msra.mxu0 %v3118
    %3184 = vmatprep.mubr.f32.mxu0 0.0
    %3185 = vmatmul.mubr.f32.gmra.mrb[0].mxu0 %v2992
    %v3186 = vpop.f32.mrb[0].mxu0
    %v3187 = vadd.f32 %v143, %v3186
    %v3188 = vpop.f32.mrb[0].mxu0
    %v3189 = vadd.f32 %v144, %v3188
    %3190 = vmatprep.mubr.f32.mxu0 0.0
    %3191 = vmatmul.mubr.f32.gmra.mrb[0].mxu0 %v2994
    %v3192 = vpop.f32.mrb[0].mxu0
    %v3193 = vadd.f32 %v145, %v3192
    %v3194 = vpop.f32.mrb[0].mxu0
    %v3195 = vadd.f32 %v146, %v3194
    %3196 = vmatprep.mubr.f32.mxu0 0.0
    %3197 = vmatmul.mubr.f32.gmra.mrb[0].mxu0 %v2996
    %v3198 = vpop.f32.mrb[0].mxu0
    %v3199 = vadd.f32 %v147, %v3198
    %v3200 = vpop.f32.mrb[0].mxu0
    %v3201 = vadd.f32 %v148, %v3200
    %3202 = vmatprep.mubr.f32.mxu0 0.0
    %3203 = vmatmul.mubr.f32.gmra.mrb[0].mxu0 %v2998
    %v3204 = vpop.f32.mrb[0].mxu0
    %v3205 = vadd.f32 %v149, %v3204
    %v3206 = vpop.f32.mrb[0].mxu0
    %v3207 = vadd.f32 %v150, %v3206
    %3208 = vmatprep.mubr.f32.mxu0 0.0
    %3209 = vmatmul.mubr.f32.gmra.mrb[0].mxu0 %v3000
    %v3210 = vpop.f32.mrb[0].mxu0
    %v3211 = vadd.f32 %v151, %v3210
    %v3212 = vpop.f32.mrb[0].mxu0
    %v3213 = vadd.f32 %v152, %v3212
    %3214 = vmatprep.mubr.f32.mxu0 0.0
    %3215 = vmatmul.mubr.f32.gmra.mrb[0].mxu0 %v3002
    %v3216 = vpop.f32.mrb[0].mxu0
    %v3217 = vadd.f32 %v153, %v3216
    %v3218 = vpop.f32.mrb[0].mxu0
    %v3219 = vadd.f32 %v154, %v3218
    %3220 = vmatprep.mubr.f32.mxu0 0.0
    %3221 = vmatmul.mubr.f32.gmra.mrb[0].mxu0 %v3004
    %v3222 = vpop.f32.mrb[0].mxu0
    %v3223 = vadd.f32 %v155, %v3222
    %v3224 = vpop.f32.mrb[0].mxu0
    %v3225 = vadd.f32 %v156, %v3224
    %3226 = vmatprep.mubr.f32.mxu0 0.0
    %3227 = vmatmul.mubr.f32.gmra.mrb[0].mxu0 %v3006
    %v3228 = vpop.f32.mrb[0].mxu0
    %v3229 = vadd.f32 %v157, %v3228
    %v3230 = vpop.f32.mrb[0].mxu0
    %v3231 = vadd.f32 %v158, %v3230
    %3232 = vmatprep.mubr.f32.mxu0 0.0
    %3233 = vmatmul.mubr.f32.gmra.mrb[0].mxu0 %v3008
    %v3234 = vpop.f32.mrb[0].mxu0
    %v3235 = vadd.f32 %v159, %v3234
    %v3236 = vpop.f32.mrb[0].mxu0
    %v3237 = vadd.f32 %v160, %v3236
    %3238 = vmatprep.mubr.f32.mxu0 0.0
    %3239 = vmatmul.mubr.f32.gmra.mrb[0].mxu0 %v3010
    %v3240 = vpop.f32.mrb[0].mxu0
    %v3241 = vadd.f32 %v161, %v3240
    %v3242 = vpop.f32.mrb[0].mxu0
    %v3243 = vadd.f32 %v162, %v3242
    %3244 = vmatprep.mubr.f32.mxu0 0.0
    %3245 = vmatmul.mubr.f32.gmra.mrb[0].mxu0 %v3012
    %v3246 = vpop.f32.mrb[0].mxu0
    %v3247 = vadd.f32 %v163, %v3246
    %v3248 = vpop.f32.mrb[0].mxu0
    %v3249 = vadd.f32 %v164, %v3248
    %3250 = vmatprep.mubr.f32.mxu0 0.0
    %3251 = vmatmul.mubr.f32.gmra.mrb[0].mxu0 %v3014
    %v3252 = vpop.f32.mrb[0].mxu0
    %v3253 = vadd.f32 %v165, %v3252
    %v3254 = vpop.f32.mrb[0].mxu0
    %v3255 = vadd.f32 %v166, %v3254
    %3256 = vmatprep.mubr.f32.mxu0 0.0
    %3257 = vmatmul.mubr.f32.gmra.mrb[0].mxu0 %v3016
    %v3258 = vpop.f32.mrb[0].mxu0
    %v3259 = vadd.f32 %v167, %v3258
    %v3260 = vpop.f32.mrb[0].mxu0
    %v3261 = vadd.f32 %v168, %v3260
    %3262 = vmatprep.mubr.f32.mxu0 0.0
    %3263 = vmatmul.mubr.f32.gmra.mrb[0].mxu0 %v3018
    %v3264 = vpop.f32.mrb[0].mxu0
    %v3265 = vadd.f32 %v169, %v3264
    %v3266 = vpop.f32.mrb[0].mxu0
    %v3267 = vadd.f32 %v170, %v3266
    %3268 = vmatprep.mubr.f32.mxu0 0.0
    %3269 = vmatmul.mubr.f32.gmra.mrb[0].mxu0 %v3020
    %v3270 = vpop.f32.mrb[0].mxu0
    %v3271 = vadd.f32 %v171, %v3270
    %v3272 = vpop.f32.mrb[0].mxu0
    %v3273 = vadd.f32 %v172, %v3272
    %3274 = vmatprep.mubr.f32.mxu0 0.0
    %3275 = vmatmul.mubr.f32.gmra.mrb[0].mxu0 %v3022
    %v3276 = vpop.f32.mrb[0].mxu0
    %v3277 = vadd.f32 %v173, %v3276
    %v3278 = vpop.f32.mrb[0].mxu0
    %v3279 = vadd.f32 %v174, %v3278
    %3280 = vmatprep.mubr.f32.mxu0 0.0
    %3281 = vmatmul.mubr.f32.gmra.mrb[0].mxu0 %v3024
    %v3282 = vpop.f32.mrb[0].mxu0
    %v3283 = vadd.f32 %v175, %v3282
    %v3284 = vpop.f32.mrb[0].mxu0
    %v3285 = vadd.f32 %v176, %v3284
    %3286 = vmatprep.mubr.f32.mxu0 0.0
    %3287 = vmatmul.mubr.f32.gmra.mrb[0].mxu0 %v3026
    %v3288 = vpop.f32.mrb[0].mxu0
    %v3289 = vadd.f32 %v177, %v3288
    %v3290 = vpop.f32.mrb[0].mxu0
    %v3291 = vadd.f32 %v178, %v3290
    %3292 = vmatprep.mubr.f32.mxu0 0.0
    %3293 = vmatmul.mubr.f32.gmra.mrb[0].mxu0 %v3028
    %v3294 = vpop.f32.mrb[0].mxu0
    %v3295 = vadd.f32 %v179, %v3294
    %v3296 = vpop.f32.mrb[0].mxu0
    %v3297 = vadd.f32 %v180, %v3296
    %3298 = vmatprep.mubr.f32.mxu0 0.0
    %3299 = vmatmul.mubr.f32.gmra.mrb[0].mxu0 %v3030
    %v3300 = vpop.f32.mrb[0].mxu0
    %v3301 = vadd.f32 %v181, %v3300
    %v3302 = vpop.f32.mrb[0].mxu0
    %v3303 = vadd.f32 %v182, %v3302
    %3304 = vmatprep.mubr.f32.mxu0 0.0
    %3305 = vmatmul.mubr.f32.gmra.mrb[0].mxu0 %v3032
    %v3306 = vpop.f32.mrb[0].mxu0
    %v3307 = vadd.f32 %v183, %v3306
    %v3308 = vpop.f32.mrb[0].mxu0
    %v3309 = vadd.f32 %v184, %v3308
    %3310 = vmatprep.mubr.f32.mxu0 0.0
    %3311 = vmatmul.mubr.f32.gmra.mrb[0].mxu0 %v3034
    %v3312 = vpop.f32.mrb[0].mxu0
    %v3313 = vadd.f32 %v185, %v3312
    %v3314 = vpop.f32.mrb[0].mxu0
    %v3315 = vadd.f32 %v186, %v3314
    %3316 = vmatprep.mubr.f32.mxu0 0.0
    %3317 = vmatmul.mubr.f32.gmra.mrb[0].mxu0 %v3036
    %v3318 = vpop.f32.mrb[0].mxu0
    %v3319 = vadd.f32 %v187, %v3318
    %v3320 = vpop.f32.mrb[0].mxu0
    %v3321 = vadd.f32 %v188, %v3320
    %3322 = vmatprep.mubr.f32.mxu0 0.0
    %3323 = vmatmul.mubr.f32.gmra.mrb[0].mxu0 %v3038
    %v3324 = vpop.f32.mrb[0].mxu0
    %v3325 = vadd.f32 %v189, %v3324
    %v3326 = vpop.f32.mrb[0].mxu0
    %v3327 = vadd.f32 %v190, %v3326
    %3328 = vmatprep.mubr.f32.mxu0 0.0
    %3329 = vmatmul.mubr.f32.gmra.mrb[0].mxu0 %v3040
    %v3330 = vpop.f32.mrb[0].mxu0
    %v3331 = vadd.f32 %v191, %v3330
    %v3332 = vpop.f32.mrb[0].mxu0
    %v3333 = vadd.f32 %v192, %v3332
    %3334 = vmatprep.mubr.f32.mxu0 0.0
    %3335 = vmatmul.mubr.f32.gmra.mrb[0].mxu0 %v3042
    %v3336 = vpop.f32.mrb[0].mxu0
    %v3337 = vadd.f32 %v193, %v3336
    %v3338 = vpop.f32.mrb[0].mxu0
    %v3339 = vadd.f32 %v194, %v3338
    %3340 = vmatprep.mubr.f32.mxu0 0.0
    %3341 = vmatmul.mubr.f32.gmra.mrb[0].mxu0 %v3044
    %v3342 = vpop.f32.mrb[0].mxu0
    %v3343 = vadd.f32 %v195, %v3342
    %v3344 = vpop.f32.mrb[0].mxu0
    %v3345 = vadd.f32 %v196, %v3344
    %3346 = vmatprep.mubr.f32.mxu0 0.0
    %3347 = vmatmul.mubr.f32.gmra.mrb[0].mxu0 %v3046
    %v3348 = vpop.f32.mrb[0].mxu0
    %v3349 = vadd.f32 %v197, %v3348
    %v3350 = vpop.f32.mrb[0].mxu0
    %v3351 = vadd.f32 %v198, %v3350
    %3352 = vmatprep.mubr.f32.mxu0 0.0
    %3353 = vmatmul.mubr.f32.gmra.mrb[0].mxu0 %v3048
    %v3354 = vpop.f32.mrb[0].mxu0
    %v3355 = vadd.f32 %v199, %v3354
    %v3356 = vpop.f32.mrb[0].mxu0
    %v3357 = vadd.f32 %v200, %v3356
    %3358 = vmatprep.mubr.f32.mxu0 0.0
    %3359 = vmatmul.mubr.f32.gmra.mrb[0].mxu0 %v3050
    %v3360 = vpop.f32.mrb[0].mxu0
    %v3361 = vadd.f32 %v201, %v3360
    %v3362 = vpop.f32.mrb[0].mxu0
    %v3363 = vadd.f32 %v202, %v3362
    %3364 = vmatprep.mubr.f32.mxu0 0.0
    %3365 = vmatmul.mubr.f32.gmra.mrb[0].mxu0 %v3052
    %v3366 = vpop.f32.mrb[0].mxu0
    %v3367 = vadd.f32 %v203, %v3366
    %v3368 = vpop.f32.mrb[0].mxu0
    %v3369 = vadd.f32 %v204, %v3368
    %3370 = vmatprep.mubr.f32.mxu0 0.0
    %3371 = vmatmul.mubr.f32.gmra.mrb[0].mxu0 %v3054
    %v3372 = vpop.f32.mrb[0].mxu0
    %v3373 = vadd.f32 %v205, %v3372
    %v3374 = vpop.f32.mrb[0].mxu0
    %v3375 = vadd.f32 %v206, %v3374
    %3376 = vdwg.mxu0
    %v3377 = vmax.f32 %v3187, %v3189
    %3378 = vmax.xlane.f32.xlu0 %v3377
    %v3379 = vpop.xlane.xlu0 %3378
    %v3380 = vmax.f32 %v3193, %v3195
    %3381 = vmax.xlane.f32.xlu0 %v3380
    %v3382 = vpop.xlane.xlu0 %3381
    %v3383 = vmax.f32 %v3199, %v3201
    %3384 = vmax.xlane.f32.xlu0 %v3383
    %v3385 = vpop.xlane.xlu0 %3384
    %v3386 = vmax.f32 %v3205, %v3207
    %3387 = vmax.xlane.f32.xlu0 %v3386
    %v3388 = vpop.xlane.xlu0 %3387
    %v3389 = vmax.f32 %v3211, %v3213
    %3390 = vmax.xlane.f32.xlu0 %v3389
    %v3391 = vpop.xlane.xlu0 %3390
    %v3392 = vmax.f32 %v3217, %v3219
    %3393 = vmax.xlane.f32.xlu0 %v3392
    %v3394 = vpop.xlane.xlu0 %3393
    %v3395 = vmax.f32 %v3223, %v3225
    %3396 = vmax.xlane.f32.xlu0 %v3395
    %v3397 = vpop.xlane.xlu0 %3396
    %v3398 = vmax.f32 %v3229, %v3231
    %3399 = vmax.xlane.f32.xlu0 %v3398
    %v3400 = vpop.xlane.xlu0 %3399
    %v3401 = vmax.f32 %v3235, %v3237
    %3402 = vmax.xlane.f32.xlu0 %v3401
    %v3403 = vpop.xlane.xlu0 %3402
    %v3404 = vmax.f32 %v3241, %v3243
    %3405 = vmax.xlane.f32.xlu0 %v3404
    %v3406 = vpop.xlane.xlu0 %3405
    %v3407 = vmax.f32 %v3247, %v3249
    %3408 = vmax.xlane.f32.xlu0 %v3407
    %v3409 = vpop.xlane.xlu0 %3408
    %v3410 = vmax.f32 %v3253, %v3255
    %3411 = vmax.xlane.f32.xlu0 %v3410
    %v3412 = vpop.xlane.xlu0 %3411
    %v3413 = vmax.f32 %v3259, %v3261
    %3414 = vmax.xlane.f32.xlu0 %v3413
    %v3415 = vpop.xlane.xlu0 %3414
    %v3416 = vmax.f32 %v3265, %v3267
    %3417 = vmax.xlane.f32.xlu0 %v3416
    %v3418 = vpop.xlane.xlu0 %3417
    %v3419 = vmax.f32 %v3271, %v3273
    %3420 = vmax.xlane.f32.xlu0 %v3419
    %v3421 = vpop.xlane.xlu0 %3420
    %v3422 = vmax.f32 %v3277, %v3279
    %3423 = vmax.xlane.f32.xlu0 %v3422
    %v3424 = vpop.xlane.xlu0 %3423
    %v3425 = vmax.f32 %v3283, %v3285
    %3426 = vmax.xlane.f32.xlu0 %v3425
    %v3427 = vpop.xlane.xlu0 %3426
    %v3428 = vmax.f32 %v3289, %v3291
    %3429 = vmax.xlane.f32.xlu0 %v3428
    %v3430 = vpop.xlane.xlu0 %3429
    %v3431 = vmax.f32 %v3295, %v3297
    %3432 = vmax.xlane.f32.xlu0 %v3431
    %v3433 = vpop.xlane.xlu0 %3432
    %v3434 = vmax.f32 %v3301, %v3303
    %3435 = vmax.xlane.f32.xlu0 %v3434
    %v3436 = vpop.xlane.xlu0 %3435
    %v3437 = vmax.f32 %v3307, %v3309
    %3438 = vmax.xlane.f32.xlu0 %v3437
    %v3439 = vpop.xlane.xlu0 %3438
    %v3440 = vmax.f32 %v3313, %v3315
    %3441 = vmax.xlane.f32.xlu0 %v3440
    %v3442 = vpop.xlane.xlu0 %3441
    %v3443 = vmax.f32 %v3319, %v3321
    %3444 = vmax.xlane.f32.xlu0 %v3443
    %v3445 = vpop.xlane.xlu0 %3444
    %v3446 = vmax.f32 %v3325, %v3327
    %3447 = vmax.xlane.f32.xlu0 %v3446
    %v3448 = vpop.xlane.xlu0 %3447
    %v3449 = vmax.f32 %v3331, %v3333
    %3450 = vmax.xlane.f32.xlu0 %v3449
    %v3451 = vpop.xlane.xlu0 %3450
    %v3452 = vmax.f32 %v3337, %v3339
    %3453 = vmax.xlane.f32.xlu0 %v3452
    %v3454 = vpop.xlane.xlu0 %3453
    %v3455 = vmax.f32 %v3343, %v3345
    %3456 = vmax.xlane.f32.xlu0 %v3455
    %v3457 = vpop.xlane.xlu0 %3456
    %v3458 = vmax.f32 %v3349, %v3351
    %3459 = vmax.xlane.f32.xlu0 %v3458
    %v3460 = vpop.xlane.xlu0 %3459
    %v3461 = vmax.f32 %v3355, %v3357
    %3462 = vmax.xlane.f32.xlu0 %v3461
    %v3463 = vpop.xlane.xlu0 %3462
    %v3464 = vmax.f32 %v3361, %v3363
    %3465 = vmax.xlane.f32.xlu0 %v3464
    %v3466 = vpop.xlane.xlu0 %3465
    %v3467 = vmax.f32 %v3367, %v3369
    %3468 = vmax.xlane.f32.xlu0 %v3467
    %v3469 = vpop.xlane.xlu0 %3468
    %v3470 = vmax.f32 %v3373, %v3375
    %3471 = vmax.xlane.f32.xlu0 %v3470
    %v3472 = vpop.xlane.xlu0 %3471
    %v3473 = vsub.f32 %v3187, %v3379
    %v3474 = vsub.f32 %v3189, %v3379
    %v3475 = vsub.f32 %v3193, %v3382
    %v3476 = vsub.f32 %v3195, %v3382
    %v3477 = vsub.f32 %v3199, %v3385
    %v3478 = vsub.f32 %v3201, %v3385
    %v3479 = vsub.f32 %v3205, %v3388
    %v3480 = vsub.f32 %v3207, %v3388
    %v3481 = vsub.f32 %v3211, %v3391
    %v3482 = vsub.f32 %v3213, %v3391
    %v3483 = vsub.f32 %v3217, %v3394
    %v3484 = vsub.f32 %v3219, %v3394
    %v3485 = vsub.f32 %v3223, %v3397
    %v3486 = vsub.f32 %v3225, %v3397
    %v3487 = vsub.f32 %v3229, %v3400
    %v3488 = vsub.f32 %v3231, %v3400
    %v3489 = vsub.f32 %v3235, %v3403
    %v3490 = vsub.f32 %v3237, %v3403
    %v3491 = vsub.f32 %v3241, %v3406
    %v3492 = vsub.f32 %v3243, %v3406
    %v3493 = vsub.f32 %v3247, %v3409
    %v3494 = vsub.f32 %v3249, %v3409
    %v3495 = vsub.f32 %v3253, %v3412
    %v3496 = vsub.f32 %v3255, %v3412
    %v3497 = vsub.f32 %v3259, %v3415
    %v3498 = vsub.f32 %v3261, %v3415
    %v3499 = vsub.f32 %v3265, %v3418
    %v3500 = vsub.f32 %v3267, %v3418
    %v3501 = vsub.f32 %v3271, %v3421
    %v3502 = vsub.f32 %v3273, %v3421
    %v3503 = vsub.f32 %v3277, %v3424
    %v3504 = vsub.f32 %v3279, %v3424
    %v3505 = vsub.f32 %v3283, %v3427
    %v3506 = vsub.f32 %v3285, %v3427
    %v3507 = vsub.f32 %v3289, %v3430
    %v3508 = vsub.f32 %v3291, %v3430
    %v3509 = vsub.f32 %v3295, %v3433
    %v3510 = vsub.f32 %v3297, %v3433
    %v3511 = vsub.f32 %v3301, %v3436
    %v3512 = vsub.f32 %v3303, %v3436
    %v3513 = vsub.f32 %v3307, %v3439
    %v3514 = vsub.f32 %v3309, %v3439
    %v3515 = vsub.f32 %v3313, %v3442
    %v3516 = vsub.f32 %v3315, %v3442
    %v3517 = vsub.f32 %v3319, %v3445
    %v3518 = vsub.f32 %v3321, %v3445
    %v3519 = vsub.f32 %v3325, %v3448
    %v3520 = vsub.f32 %v3327, %v3448
    %v3521 = vsub.f32 %v3331, %v3451
    %v3522 = vsub.f32 %v3333, %v3451
    %v3523 = vsub.f32 %v3337, %v3454
    %v3524 = vsub.f32 %v3339, %v3454
    %v3525 = vsub.f32 %v3343, %v3457
    %v3526 = vsub.f32 %v3345, %v3457
    %v3527 = vsub.f32 %v3349, %v3460
    %v3528 = vsub.f32 %v3351, %v3460
    %v3529 = vsub.f32 %v3355, %v3463
    %v3530 = vsub.f32 %v3357, %v3463
    %v3531 = vsub.f32 %v3361, %v3466
    %v3532 = vsub.f32 %v3363, %v3466
    %v3533 = vsub.f32 %v3367, %v3469
    %v3534 = vsub.f32 %v3369, %v3469
    %v3535 = vsub.f32 %v3373, %v3472
    %v3536 = vsub.f32 %v3375, %v3472
    %v3537 = vmul.f32 %v3473, 1.442695
    %v3538 = vpow.pop %v3537
    %v3539 = vmul.f32 %v3474, 1.442695
    %v3540 = vpow.pop %v3539
    %v3541 = vmul.f32 %v3475, 1.442695
    %v3542 = vpow.pop %v3541
    %v3543 = vmul.f32 %v3476, 1.442695
    %v3544 = vpow.pop %v3543
    %v3545 = vmul.f32 %v3477, 1.442695
    %v3546 = vpow.pop %v3545
    %v3547 = vmul.f32 %v3478, 1.442695
    %v3548 = vpow.pop %v3547
    %v3549 = vmul.f32 %v3479, 1.442695
    %v3550 = vpow.pop %v3549
    %v3551 = vmul.f32 %v3480, 1.442695
    %v3552 = vpow.pop %v3551
    %v3553 = vmul.f32 %v3481, 1.442695
    %v3554 = vpow.pop %v3553
    %v3555 = vmul.f32 %v3482, 1.442695
    %v3556 = vpow.pop %v3555
    %v3557 = vmul.f32 %v3483, 1.442695
    %v3558 = vpow.pop %v3557
    %v3559 = vmul.f32 %v3484, 1.442695
    %v3560 = vpow.pop %v3559
    %v3561 = vmul.f32 %v3485, 1.442695
    %v3562 = vpow.pop %v3561
    %v3563 = vmul.f32 %v3486, 1.442695
    %v3564 = vpow.pop %v3563
    %v3565 = vmul.f32 %v3487, 1.442695
    %v3566 = vpow.pop %v3565
    %v3567 = vmul.f32 %v3488, 1.442695
    %v3568 = vpow.pop %v3567
    %v3569 = vmul.f32 %v3489, 1.442695
    %v3570 = vpow.pop %v3569
    %v3571 = vmul.f32 %v3490, 1.442695
    %v3572 = vpow.pop %v3571
    %v3573 = vmul.f32 %v3491, 1.442695
    %v3574 = vpow.pop %v3573
    %v3575 = vmul.f32 %v3492, 1.442695
    %v3576 = vpow.pop %v3575
    %v3577 = vmul.f32 %v3493, 1.442695
    %v3578 = vpow.pop %v3577
    %v3579 = vmul.f32 %v3494, 1.442695
    %v3580 = vpow.pop %v3579
    %v3581 = vmul.f32 %v3495, 1.442695
    %v3582 = vpow.pop %v3581
    %v3583 = vmul.f32 %v3496, 1.442695
    %v3584 = vpow.pop %v3583
    %v3585 = vmul.f32 %v3497, 1.442695
    %v3586 = vpow.pop %v3585
    %v3587 = vmul.f32 %v3498, 1.442695
    %v3588 = vpow.pop %v3587
    %v3589 = vmul.f32 %v3499, 1.442695
    %v3590 = vpow.pop %v3589
    %v3591 = vmul.f32 %v3500, 1.442695
    %v3592 = vpow.pop %v3591
    %v3593 = vmul.f32 %v3501, 1.442695
    %v3594 = vpow.pop %v3593
    %v3595 = vmul.f32 %v3502, 1.442695
    %v3596 = vpow.pop %v3595
    %v3597 = vmul.f32 %v3503, 1.442695
    %v3598 = vpow.pop %v3597
    %v3599 = vmul.f32 %v3504, 1.442695
    %v3600 = vpow.pop %v3599
    %v3601 = vmul.f32 %v3505, 1.442695
    %v3602 = vpow.pop %v3601
    %v3603 = vmul.f32 %v3506, 1.442695
    %v3604 = vpow.pop %v3603
    %v3605 = vmul.f32 %v3507, 1.442695
    %v3606 = vpow.pop %v3605
    %v3607 = vmul.f32 %v3508, 1.442695
    %v3608 = vpow.pop %v3607
    %v3609 = vmul.f32 %v3509, 1.442695
    %v3610 = vpow.pop %v3609
    %v3611 = vmul.f32 %v3510, 1.442695
    %v3612 = vpow.pop %v3611
    %v3613 = vmul.f32 %v3511, 1.442695
    %v3614 = vpow.pop %v3613
    %v3615 = vmul.f32 %v3512, 1.442695
    %v3616 = vpow.pop %v3615
    %v3617 = vmul.f32 %v3513, 1.442695
    %v3618 = vpow.pop %v3617
    %v3619 = vmul.f32 %v3514, 1.442695
    %v3620 = vpow.pop %v3619
    %v3621 = vmul.f32 %v3515, 1.442695
    %v3622 = vpow.pop %v3621
    %v3623 = vmul.f32 %v3516, 1.442695
    %v3624 = vpow.pop %v3623
    %v3625 = vmul.f32 %v3517, 1.442695
    %v3626 = vpow.pop %v3625
    %v3627 = vmul.f32 %v3518, 1.442695
    %v3628 = vpow.pop %v3627
    %v3629 = vmul.f32 %v3519, 1.442695
    %v3630 = vpow.pop %v3629
    %v3631 = vmul.f32 %v3520, 1.442695
    %v3632 = vpow.pop %v3631
    %v3633 = vmul.f32 %v3521, 1.442695
    %v3634 = vpow.pop %v3633
    %v3635 = vmul.f32 %v3522, 1.442695
    %v3636 = vpow.pop %v3635
    %v3637 = vmul.f32 %v3523, 1.442695
    %v3638 = vpow.pop %v3637
    %v3639 = vmul.f32 %v3524, 1.442695
    %v3640 = vpow.pop %v3639
    %v3641 = vmul.f32 %v3525, 1.442695
    %v3642 = vpow.pop %v3641
    %v3643 = vmul.f32 %v3526, 1.442695
    %v3644 = vpow.pop %v3643
    %v3645 = vmul.f32 %v3527, 1.442695
    %v3646 = vpow.pop %v3645
    %v3647 = vmul.f32 %v3528, 1.442695
    %v3648 = vpow.pop %v3647
    %v3649 = vmul.f32 %v3529, 1.442695
    %v3650 = vpow.pop %v3649
    %v3651 = vmul.f32 %v3530, 1.442695
    %v3652 = vpow.pop %v3651
    %v3653 = vmul.f32 %v3531, 1.442695
    %v3654 = vpow.pop %v3653
    %v3655 = vmul.f32 %v3532, 1.442695
    %v3656 = vpow.pop %v3655
    %v3657 = vmul.f32 %v3533, 1.442695
    %v3658 = vpow.pop %v3657
    %v3659 = vmul.f32 %v3534, 1.442695
    %v3660 = vpow.pop %v3659
    %v3661 = vmul.f32 %v3535, 1.442695
    %v3662 = vpow.pop %v3661
    %v3663 = vmul.f32 %v3536, 1.442695
    %v3664 = vpow.pop %v3663
    %v3665 = vadd.f32 %v3538, %v3540
    %3666 = vadd.xlane.f32.xlu0 %v3665
    %v3667 = vpop.xlane.xlu0 %3666
    %v3668 = vadd.f32 %v3542, %v3544
    %3669 = vadd.xlane.f32.xlu0 %v3668
    %v3670 = vpop.xlane.xlu0 %3669
    %v3671 = vadd.f32 %v3546, %v3548
    %3672 = vadd.xlane.f32.xlu0 %v3671
    %v3673 = vpop.xlane.xlu0 %3672
    %v3674 = vadd.f32 %v3550, %v3552
    %3675 = vadd.xlane.f32.xlu0 %v3674
    %v3676 = vpop.xlane.xlu0 %3675
    %v3677 = vadd.f32 %v3554, %v3556
    %3678 = vadd.xlane.f32.xlu0 %v3677
    %v3679 = vpop.xlane.xlu0 %3678
    %v3680 = vadd.f32 %v3558, %v3560
    %3681 = vadd.xlane.f32.xlu0 %v3680
    %v3682 = vpop.xlane.xlu0 %3681
    %v3683 = vadd.f32 %v3562, %v3564
    %3684 = vadd.xlane.f32.xlu0 %v3683
    %v3685 = vpop.xlane.xlu0 %3684
    %v3686 = vadd.f32 %v3566, %v3568
    %3687 = vadd.xlane.f32.xlu0 %v3686
    %v3688 = vpop.xlane.xlu0 %3687
    %v3689 = vadd.f32 %v3570, %v3572
    %3690 = vadd.xlane.f32.xlu0 %v3689
    %v3691 = vpop.xlane.xlu0 %3690
    %v3692 = vadd.f32 %v3574, %v3576
    %3693 = vadd.xlane.f32.xlu0 %v3692
    %v3694 = vpop.xlane.xlu0 %3693
    %v3695 = vadd.f32 %v3578, %v3580
    %3696 = vadd.xlane.f32.xlu0 %v3695
    %v3697 = vpop.xlane.xlu0 %3696
    %v3698 = vadd.f32 %v3582, %v3584
    %3699 = vadd.xlane.f32.xlu0 %v3698
    %v3700 = vpop.xlane.xlu0 %3699
    %v3701 = vadd.f32 %v3586, %v3588
    %3702 = vadd.xlane.f32.xlu0 %v3701
    %v3703 = vpop.xlane.xlu0 %3702
    %v3704 = vadd.f32 %v3590, %v3592
    %3705 = vadd.xlane.f32.xlu0 %v3704
    %v3706 = vpop.xlane.xlu0 %3705
    %v3707 = vadd.f32 %v3594, %v3596
    %3708 = vadd.xlane.f32.xlu0 %v3707
    %v3709 = vpop.xlane.xlu0 %3708
    %v3710 = vadd.f32 %v3598, %v3600
    %3711 = vadd.xlane.f32.xlu0 %v3710
    %v3712 = vpop.xlane.xlu0 %3711
    %v3713 = vadd.f32 %v3602, %v3604
    %3714 = vadd.xlane.f32.xlu0 %v3713
    %v3715 = vpop.xlane.xlu0 %3714
    %v3716 = vadd.f32 %v3606, %v3608
    %3717 = vadd.xlane.f32.xlu0 %v3716
    %v3718 = vpop.xlane.xlu0 %3717
    %v3719 = vadd.f32 %v3610, %v3612
    %3720 = vadd.xlane.f32.xlu0 %v3719
    %v3721 = vpop.xlane.xlu0 %3720
    %v3722 = vadd.f32 %v3614, %v3616
    %3723 = vadd.xlane.f32.xlu0 %v3722
    %v3724 = vpop.xlane.xlu0 %3723
    %v3725 = vadd.f32 %v3618, %v3620
    %3726 = vadd.xlane.f32.xlu0 %v3725
    %v3727 = vpop.xlane.xlu0 %3726
    %v3728 = vadd.f32 %v3622, %v3624
    %3729 = vadd.xlane.f32.xlu0 %v3728
    %v3730 = vpop.xlane.xlu0 %3729
    %v3731 = vadd.f32 %v3626, %v3628
    %3732 = vadd.xlane.f32.xlu0 %v3731
    %v3733 = vpop.xlane.xlu0 %3732
    %v3734 = vadd.f32 %v3630, %v3632
    %3735 = vadd.xlane.f32.xlu0 %v3734
    %v3736 = vpop.xlane.xlu0 %3735
    %v3737 = vadd.f32 %v3634, %v3636
    %3738 = vadd.xlane.f32.xlu0 %v3737
    %v3739 = vpop.xlane.xlu0 %3738
    %v3740 = vadd.f32 %v3638, %v3640
    %3741 = vadd.xlane.f32.xlu0 %v3740
    %v3742 = vpop.xlane.xlu0 %3741
    %v3743 = vadd.f32 %v3642, %v3644
    %3744 = vadd.xlane.f32.xlu0 %v3743
    %v3745 = vpop.xlane.xlu0 %3744
    %v3746 = vadd.f32 %v3646, %v3648
    %3747 = vadd.xlane.f32.xlu0 %v3746
    %v3748 = vpop.xlane.xlu0 %3747
    %v3749 = vadd.f32 %v3650, %v3652
    %3750 = vadd.xlane.f32.xlu0 %v3749
    %v3751 = vpop.xlane.xlu0 %3750
    %v3752 = vadd.f32 %v3654, %v3656
    %3753 = vadd.xlane.f32.xlu0 %v3752
    %v3754 = vpop.xlane.xlu0 %3753
    %v3755 = vadd.f32 %v3658, %v3660
    %3756 = vadd.xlane.f32.xlu0 %v3755
    %v3757 = vpop.xlane.xlu0 %3756
    %v3758 = vadd.f32 %v3662, %v3664
    %3759 = vadd.xlane.f32.xlu0 %v3758
    %v3760 = vpop.xlane.xlu0 %3759
    %v3761 = vrcp.pop %v3667
    %v3762 = vrcp.pop %v3670
    %v3763 = vrcp.pop %v3673
    %v3764 = vrcp.pop %v3676
    %v3765 = vrcp.pop %v3679
    %v3766 = vrcp.pop %v3682
    %v3767 = vrcp.pop %v3685
    %v3768 = vrcp.pop %v3688
    %v3769 = vrcp.pop %v3691
    %v3770 = vrcp.pop %v3694
    %v3771 = vrcp.pop %v3697
    %v3772 = vrcp.pop %v3700
    %v3773 = vrcp.pop %v3703
    %v3774 = vrcp.pop %v3706
    %v3775 = vrcp.pop %v3709
    %v3776 = vrcp.pop %v3712
    %v3777 = vrcp.pop %v3715
    %v3778 = vrcp.pop %v3718
    %v3779 = vrcp.pop %v3721
    %v3780 = vrcp.pop %v3724
    %v3781 = vrcp.pop %v3727
    %v3782 = vrcp.pop %v3730
    %v3783 = vrcp.pop %v3733
    %v3784 = vrcp.pop %v3736
    %v3785 = vrcp.pop %v3739
    %v3786 = vrcp.pop %v3742
    %v3787 = vrcp.pop %v3745
    %v3788 = vrcp.pop %v3748
    %v3789 = vrcp.pop %v3751
    %v3790 = vrcp.pop %v3754
    %v3791 = vrcp.pop %v3757
    %v3792 = vrcp.pop %v3760
    %v3793 = vmul.f32 %v3538, %v3761
    %v3794 = vmul.f32 %v3540, %v3761
    %v3795 = vmul.f32 %v3542, %v3762
    %v3796 = vmul.f32 %v3544, %v3762
    %v3797 = vmul.f32 %v3546, %v3763
    %v3798 = vmul.f32 %v3548, %v3763
    %v3799 = vmul.f32 %v3550, %v3764
    %v3800 = vmul.f32 %v3552, %v3764
    %v3801 = vmul.f32 %v3554, %v3765
    %v3802 = vmul.f32 %v3556, %v3765
    %v3803 = vmul.f32 %v3558, %v3766
    %v3804 = vmul.f32 %v3560, %v3766
    %v3805 = vmul.f32 %v3562, %v3767
    %v3806 = vmul.f32 %v3564, %v3767
    %v3807 = vmul.f32 %v3566, %v3768
    %v3808 = vmul.f32 %v3568, %v3768
    %v3809 = vmul.f32 %v3570, %v3769
    %v3810 = vmul.f32 %v3572, %v3769
    %v3811 = vmul.f32 %v3574, %v3770
    %v3812 = vmul.f32 %v3576, %v3770
    %v3813 = vmul.f32 %v3578, %v3771
    %v3814 = vmul.f32 %v3580, %v3771
    %v3815 = vmul.f32 %v3582, %v3772
    %v3816 = vmul.f32 %v3584, %v3772
    %v3817 = vmul.f32 %v3586, %v3773
    %v3818 = vmul.f32 %v3588, %v3773
    %v3819 = vmul.f32 %v3590, %v3774
    %v3820 = vmul.f32 %v3592, %v3774
    %v3821 = vmul.f32 %v3594, %v3775
    %v3822 = vmul.f32 %v3596, %v3775
    %v3823 = vmul.f32 %v3598, %v3776
    %v3824 = vmul.f32 %v3600, %v3776
    %v3825 = vmul.f32 %v3602, %v3777
    %v3826 = vmul.f32 %v3604, %v3777
    %v3827 = vmul.f32 %v3606, %v3778
    %v3828 = vmul.f32 %v3608, %v3778
    %v3829 = vmul.f32 %v3610, %v3779
    %v3830 = vmul.f32 %v3612, %v3779
    %v3831 = vmul.f32 %v3614, %v3780
    %v3832 = vmul.f32 %v3616, %v3780
    %v3833 = vmul.f32 %v3618, %v3781
    %v3834 = vmul.f32 %v3620, %v3781
    %v3835 = vmul.f32 %v3622, %v3782
    %v3836 = vmul.f32 %v3624, %v3782
    %v3837 = vmul.f32 %v3626, %v3783
    %v3838 = vmul.f32 %v3628, %v3783
    %v3839 = vmul.f32 %v3630, %v3784
    %v3840 = vmul.f32 %v3632, %v3784
    %v3841 = vmul.f32 %v3634, %v3785
    %v3842 = vmul.f32 %v3636, %v3785
    %v3843 = vmul.f32 %v3638, %v3786
    %v3844 = vmul.f32 %v3640, %v3786
    %v3845 = vmul.f32 %v3642, %v3787
    %v3846 = vmul.f32 %v3644, %v3787
    %v3847 = vmul.f32 %v3646, %v3788
    %v3848 = vmul.f32 %v3648, %v3788
    %v3849 = vmul.f32 %v3650, %v3789
    %v3850 = vmul.f32 %v3652, %v3789
    %v3851 = vmul.f32 %v3654, %v3790
    %v3852 = vmul.f32 %v3656, %v3790
    %v3853 = vmul.f32 %v3658, %v3791
    %v3854 = vmul.f32 %v3660, %v3791
    %v3855 = vmul.f32 %v3662, %v3792
    %v3856 = vmul.f32 %v3664, %v3792
    %3857 = vmatprep.subr.mxu0 0.0
    %3858 = vmatpush1.msra.mxu0 %v2766
    %3859 = vmatprep.subr.mxu0 0.0
    %3860 = vmatpush1.msra.mxu0 %v2771
    %3861 = vmatprep.subr.mxu0 0.0
    %3862 = vmatpush1.msra.mxu0 %v2776
    %3863 = vmatprep.subr.mxu0 0.0
    %3864 = vmatpush1.msra.mxu0 %v2781
    %3865 = vmatprep.subr.mxu0 0.0
    %3866 = vmatpush1.msra.mxu0 %v2909
    %3867 = vmatprep.subr.mxu0 0.0
    %3868 = vmatpush1.msra.mxu0 %v2911
    %3869 = vmatprep.subr.mxu0 0.0
    %3870 = vmatpush1.msra.mxu0 %v2913
    %3871 = vmatprep.subr.mxu0 0.0
    %3872 = vmatpush1.msra.mxu0 %v2915
    %3873 = vmatprep.subr.mxu0 0.0
    %3874 = vmatpush1.msra.mxu0 %v2921
    %3875 = vmatprep.subr.mxu0 0.0
    %3876 = vmatpush1.msra.mxu0 %v2923
    %3877 = vmatprep.subr.mxu0 0.0
    %3878 = vmatpush1.msra.mxu0 %v2925
    %3879 = vmatprep.subr.mxu0 0.0
    %3880 = vmatpush1.msra.mxu0 %v2927
    %3881 = vmatprep.subr.mxu0 0.0
    %3882 = vmatpush1.msra.mxu0 %v2933
    %3883 = vmatprep.subr.mxu0 0.0
    %3884 = vmatpush1.msra.mxu0 %v2935
    %3885 = vmatprep.subr.mxu0 0.0
    %3886 = vmatpush1.msra.mxu0 %v2937
    %3887 = vmatprep.subr.mxu0 0.0
    %3888 = vmatpush1.msra.mxu0 %v2939
    %3889 = vmatprep.subr.mxu0 0.0
    %3890 = vmatpush1.msra.mxu0 %v2945
    %3891 = vmatprep.subr.mxu0 0.0
    %3892 = vmatpush1.msra.mxu0 %v2947
    %3893 = vmatprep.subr.mxu0 0.0
    %3894 = vmatpush1.msra.mxu0 %v2949
    %3895 = vmatprep.subr.mxu0 0.0
    %3896 = vmatpush1.msra.mxu0 %v2951
    %3897 = vmatprep.subr.mxu0 0.0
    %3898 = vmatpush1.msra.mxu0 %v2957
    %3899 = vmatprep.subr.mxu0 0.0
    %3900 = vmatpush1.msra.mxu0 %v2959
    %3901 = vmatprep.subr.mxu0 0.0
    %3902 = vmatpush1.msra.mxu0 %v2961
    %3903 = vmatprep.subr.mxu0 0.0
    %3904 = vmatpush1.msra.mxu0 %v2963
    %3905 = vmatprep.subr.mxu0 0.0
    %3906 = vmatpush1.msra.mxu0 %v2969
    %3907 = vmatprep.subr.mxu0 0.0
    %3908 = vmatpush1.msra.mxu0 %v2971
    %3909 = vmatprep.subr.mxu0 0.0
    %3910 = vmatpush1.msra.mxu0 %v2973
    %3911 = vmatprep.subr.mxu0 0.0
    %3912 = vmatpush1.msra.mxu0 %v2975
    %3913 = vmatprep.subr.mxu0 0.0
    %3914 = vmatpush1.msra.mxu0 %v2981
    %3915 = vmatprep.subr.mxu0 0.0
    %3916 = vmatpush1.msra.mxu0 %v2983
    %3917 = vmatprep.subr.mxu0 0.0
    %3918 = vmatpush1.msra.mxu0 %v2985
    %3919 = vmatprep.subr.mxu0 0.0
    %3920 = vmatpush1.msra.mxu0 %v2987
    %3921 = vmatprep.mubr.f32.mxu0 %v3794
    %3922 = vmatmul.mubr.f32.gmra.mrb[0].mxu0 %v3793
    %v3923 = vpop.f32.mrb[0].mxu0
    %v3924 = vadd.f32 0.0, %v3923
    %v3925 = vpop.f32.mrb[0].mxu0
    %3926 = vmatprep.mubr.f32.mxu0 %v3796
    %3927 = vmatmul.mubr.f32.gmra.mrb[0].mxu0 %v3795
    %v3928 = vpop.f32.mrb[0].mxu0
    %v3929 = vadd.f32 0.0, %v3928
    %v3930 = vpop.f32.mrb[0].mxu0
    %3931 = vmatprep.mubr.f32.mxu0 %v3798
    %3932 = vmatmul.mubr.f32.gmra.mrb[0].mxu0 %v3797
    %v3933 = vpop.f32.mrb[0].mxu0
    %v3934 = vadd.f32 0.0, %v3933
    %v3935 = vpop.f32.mrb[0].mxu0
    %3936 = vmatprep.mubr.f32.mxu0 %v3800
    %3937 = vmatmul.mubr.f32.gmra.mrb[0].mxu0 %v3799
    %v3938 = vpop.f32.mrb[0].mxu0
    %v3939 = vadd.f32 0.0, %v3938
    %v3940 = vpop.f32.mrb[0].mxu0
    %3941 = vmatprep.mubr.f32.mxu0 %v3802
    %3942 = vmatmul.mubr.f32.gmra.mrb[0].mxu0 %v3801
    %v3943 = vpop.f32.mrb[0].mxu0
    %v3944 = vadd.f32 0.0, %v3943
    %v3945 = vpop.f32.mrb[0].mxu0
    %3946 = vmatprep.mubr.f32.mxu0 %v3804
    %3947 = vmatmul.mubr.f32.gmra.mrb[0].mxu0 %v3803
    %v3948 = vpop.f32.mrb[0].mxu0
    %v3949 = vadd.f32 0.0, %v3948
    %v3950 = vpop.f32.mrb[0].mxu0
    %3951 = vmatprep.mubr.f32.mxu0 %v3806
    %3952 = vmatmul.mubr.f32.gmra.mrb[0].mxu0 %v3805
    %v3953 = vpop.f32.mrb[0].mxu0
    %v3954 = vadd.f32 0.0, %v3953
    %v3955 = vpop.f32.mrb[0].mxu0
    %3956 = vmatprep.mubr.f32.mxu0 %v3808
    %3957 = vmatmul.mubr.f32.gmra.mrb[0].mxu0 %v3807
    %v3958 = vpop.f32.mrb[0].mxu0
    %v3959 = vadd.f32 0.0, %v3958
    %v3960 = vpop.f32.mrb[0].mxu0
    %3961 = vmatprep.mubr.f32.mxu0 %v3810
    %3962 = vmatmul.mubr.f32.gmra.mrb[0].mxu0 %v3809
    %v3963 = vpop.f32.mrb[0].mxu0
    %v3964 = vadd.f32 0.0, %v3963
    %v3965 = vpop.f32.mrb[0].mxu0
    %3966 = vmatprep.mubr.f32.mxu0 %v3812
    %3967 = vmatmul.mubr.f32.gmra.mrb[0].mxu0 %v3811
    %v3968 = vpop.f32.mrb[0].mxu0
    %v3969 = vadd.f32 0.0, %v3968
    %v3970 = vpop.f32.mrb[0].mxu0
    %3971 = vmatprep.mubr.f32.mxu0 %v3814
    %3972 = vmatmul.mubr.f32.gmra.mrb[0].mxu0 %v3813
    %v3973 = vpop.f32.mrb[0].mxu0
    %v3974 = vadd.f32 0.0, %v3973
    %v3975 = vpop.f32.mrb[0].mxu0
    %3976 = vmatprep.mubr.f32.mxu0 %v3816
    %3977 = vmatmul.mubr.f32.gmra.mrb[0].mxu0 %v3815
    %v3978 = vpop.f32.mrb[0].mxu0
    %v3979 = vadd.f32 0.0, %v3978
    %v3980 = vpop.f32.mrb[0].mxu0
    %3981 = vmatprep.mubr.f32.mxu0 %v3818
    %3982 = vmatmul.mubr.f32.gmra.mrb[0].mxu0 %v3817
    %v3983 = vpop.f32.mrb[0].mxu0
    %v3984 = vadd.f32 0.0, %v3983
    %v3985 = vpop.f32.mrb[0].mxu0
    %3986 = vmatprep.mubr.f32.mxu0 %v3820
    %3987 = vmatmul.mubr.f32.gmra.mrb[0].mxu0 %v3819
    %v3988 = vpop.f32.mrb[0].mxu0
    %v3989 = vadd.f32 0.0, %v3988
    %v3990 = vpop.f32.mrb[0].mxu0
    %3991 = vmatprep.mubr.f32.mxu0 %v3822
    %3992 = vmatmul.mubr.f32.gmra.mrb[0].mxu0 %v3821
    %v3993 = vpop.f32.mrb[0].mxu0
    %v3994 = vadd.f32 0.0, %v3993
    %v3995 = vpop.f32.mrb[0].mxu0
    %3996 = vmatprep.mubr.f32.mxu0 %v3824
    %3997 = vmatmul.mubr.f32.gmra.mrb[0].mxu0 %v3823
    %v3998 = vpop.f32.mrb[0].mxu0
    %v3999 = vadd.f32 0.0, %v3998
    %v4000 = vpop.f32.mrb[0].mxu0
    %4001 = vmatprep.mubr.f32.mxu0 %v3826
    %4002 = vmatmul.mubr.f32.gmra.mrb[0].mxu0 %v3825
    %v4003 = vpop.f32.mrb[0].mxu0
    %v4004 = vadd.f32 0.0, %v4003
    %v4005 = vpop.f32.mrb[0].mxu0
    %4006 = vmatprep.mubr.f32.mxu0 %v3828
    %4007 = vmatmul.mubr.f32.gmra.mrb[0].mxu0 %v3827
    %v4008 = vpop.f32.mrb[0].mxu0
    %v4009 = vadd.f32 0.0, %v4008
    %v4010 = vpop.f32.mrb[0].mxu0
    %4011 = vmatprep.mubr.f32.mxu0 %v3830
    %4012 = vmatmul.mubr.f32.gmra.mrb[0].mxu0 %v3829
    %v4013 = vpop.f32.mrb[0].mxu0
    %v4014 = vadd.f32 0.0, %v4013
    %v4015 = vpop.f32.mrb[0].mxu0
    %4016 = vmatprep.mubr.f32.mxu0 %v3832
    %4017 = vmatmul.mubr.f32.gmra.mrb[0].mxu0 %v3831
    %v4018 = vpop.f32.mrb[0].mxu0
    %v4019 = vadd.f32 0.0, %v4018
    %v4020 = vpop.f32.mrb[0].mxu0
    %4021 = vmatprep.mubr.f32.mxu0 %v3834
    %4022 = vmatmul.mubr.f32.gmra.mrb[0].mxu0 %v3833
    %v4023 = vpop.f32.mrb[0].mxu0
    %v4024 = vadd.f32 0.0, %v4023
    %v4025 = vpop.f32.mrb[0].mxu0
    %4026 = vmatprep.mubr.f32.mxu0 %v3836
    %4027 = vmatmul.mubr.f32.gmra.mrb[0].mxu0 %v3835
    %v4028 = vpop.f32.mrb[0].mxu0
    %v4029 = vadd.f32 0.0, %v4028
    %v4030 = vpop.f32.mrb[0].mxu0
    %4031 = vmatprep.mubr.f32.mxu0 %v3838
    %4032 = vmatmul.mubr.f32.gmra.mrb[0].mxu0 %v3837
    %v4033 = vpop.f32.mrb[0].mxu0
    %v4034 = vadd.f32 0.0, %v4033
    %v4035 = vpop.f32.mrb[0].mxu0
    %4036 = vmatprep.mubr.f32.mxu0 %v3840
    %4037 = vmatmul.mubr.f32.gmra.mrb[0].mxu0 %v3839
    %v4038 = vpop.f32.mrb[0].mxu0
    %v4039 = vadd.f32 0.0, %v4038
    %v4040 = vpop.f32.mrb[0].mxu0
    %4041 = vmatprep.mubr.f32.mxu0 %v3842
    %4042 = vmatmul.mubr.f32.gmra.mrb[0].mxu0 %v3841
    %v4043 = vpop.f32.mrb[0].mxu0
    %v4044 = vadd.f32 0.0, %v4043
    %v4045 = vpop.f32.mrb[0].mxu0
    %4046 = vmatprep.mubr.f32.mxu0 %v3844
    %4047 = vmatmul.mubr.f32.gmra.mrb[0].mxu0 %v3843
    %v4048 = vpop.f32.mrb[0].mxu0
    %v4049 = vadd.f32 0.0, %v4048
    %v4050 = vpop.f32.mrb[0].mxu0
    %4051 = vmatprep.mubr.f32.mxu0 %v3846
    %4052 = vmatmul.mubr.f32.gmra.mrb[0].mxu0 %v3845
    %v4053 = vpop.f32.mrb[0].mxu0
    %v4054 = vadd.f32 0.0, %v4053
    %v4055 = vpop.f32.mrb[0].mxu0
    %4056 = vmatprep.mubr.f32.mxu0 %v3848
    %4057 = vmatmul.mubr.f32.gmra.mrb[0].mxu0 %v3847
    %v4058 = vpop.f32.mrb[0].mxu0
    %v4059 = vadd.f32 0.0, %v4058
    %v4060 = vpop.f32.mrb[0].mxu0
    %4061 = vmatprep.mubr.f32.mxu0 %v3850
    %4062 = vmatmul.mubr.f32.gmra.mrb[0].mxu0 %v3849
    %v4063 = vpop.f32.mrb[0].mxu0
    %v4064 = vadd.f32 0.0, %v4063
    %v4065 = vpop.f32.mrb[0].mxu0
    %4066 = vmatprep.mubr.f32.mxu0 %v3852
    %4067 = vmatmul.mubr.f32.gmra.mrb[0].mxu0 %v3851
    %v4068 = vpop.f32.mrb[0].mxu0
    %v4069 = vadd.f32 0.0, %v4068
    %v4070 = vpop.f32.mrb[0].mxu0
    %4071 = vmatprep.mubr.f32.mxu0 %v3854
    %4072 = vmatmul.mubr.f32.gmra.mrb[0].mxu0 %v3853
    %v4073 = vpop.f32.mrb[0].mxu0
    %v4074 = vadd.f32 0.0, %v4073
    %v4075 = vpop.f32.mrb[0].mxu0
    %4076 = vmatprep.mubr.f32.mxu0 %v3856
    %4077 = vmatmul.mubr.f32.gmra.mrb[0].mxu0 %v3855
    %v4078 = vpop.f32.mrb[0].mxu0
    %v4079 = vadd.f32 0.0, %v4078
    %v4080 = vpop.f32.mrb[0].mxu0
    %4081 = vdwg.mxu0
    %4086 = vrot.lane.b32.xlu0 %v3944, 8
    %v4087 = vpop.permute.xlu0 %4086
    %4088 = vrot.lane.b32.xlu0 %v3949, 8
    %v4089 = vpop.permute.xlu0 %4088
    %4090 = vrot.lane.b32.xlu0 %v3954, 8
    %v4091 = vpop.permute.xlu0 %4090
    %4092 = vrot.lane.b32.xlu0 %v3959, 8
    %v4093 = vpop.permute.xlu0 %4092
    %4102 = vrot.lane.b32.xlu0 %v3964, 16
    %v4103 = vpop.permute.xlu0 %4102
    %4104 = vrot.lane.b32.xlu0 %v3969, 16
    %v4105 = vpop.permute.xlu0 %4104
    %4106 = vrot.lane.b32.xlu0 %v3974, 16
    %v4107 = vpop.permute.xlu0 %4106
    %4108 = vrot.lane.b32.xlu0 %v3979, 16
    %v4109 = vpop.permute.xlu0 %4108
    %4118 = vrot.lane.b32.xlu0 %v3984, 24
    %v4119 = vpop.permute.xlu0 %4118
    %4120 = vrot.lane.b32.xlu0 %v3989, 24
    %v4121 = vpop.permute.xlu0 %4120
    %4122 = vrot.lane.b32.xlu0 %v3994, 24
    %v4123 = vpop.permute.xlu0 %4122
    %4124 = vrot.lane.b32.xlu0 %v3999, 24
    %v4125 = vpop.permute.xlu0 %4124
    %4134 = vrot.lane.b32.xlu0 %v4004, 32
    %v4135 = vpop.permute.xlu0 %4134
    %4136 = vrot.lane.b32.xlu0 %v4009, 32
    %v4137 = vpop.permute.xlu0 %4136
    %4138 = vrot.lane.b32.xlu0 %v4014, 32
    %v4139 = vpop.permute.xlu0 %4138
    %4140 = vrot.lane.b32.xlu0 %v4019, 32
    %v4141 = vpop.permute.xlu0 %4140
    %4150 = vrot.lane.b32.xlu0 %v4024, 40
    %v4151 = vpop.permute.xlu0 %4150
    %4152 = vrot.lane.b32.xlu0 %v4029, 40
    %v4153 = vpop.permute.xlu0 %4152
    %4154 = vrot.lane.b32.xlu0 %v4034, 40
    %v4155 = vpop.permute.xlu0 %4154
    %4156 = vrot.lane.b32.xlu0 %v4039, 40
    %v4157 = vpop.permute.xlu0 %4156
    %4166 = vrot.lane.b32.xlu0 %v4044, 48
    %v4167 = vpop.permute.xlu0 %4166
    %4168 = vrot.lane.b32.xlu0 %v4049, 48
    %v4169 = vpop.permute.xlu0 %4168
    %4170 = vrot.lane.b32.xlu0 %v4054, 48
    %v4171 = vpop.permute.xlu0 %4170
    %4172 = vrot.lane.b32.xlu0 %v4059, 48
    %v4173 = vpop.permute.xlu0 %4172
    %4182 = vrot.lane.b32.xlu0 %v4064, 56
    %v4183 = vpop.permute.xlu0 %4182
    %4184 = vrot.lane.b32.xlu0 %v4069, 56
    %v4185 = vpop.permute.xlu0 %4184
    %4186 = vrot.lane.b32.xlu0 %v4074, 56
    %v4187 = vpop.permute.xlu0 %4186
    %4188 = vrot.lane.b32.xlu0 %v4079, 56
    %v4189 = vpop.permute.xlu0 %4188
    %v4194 = vsel %vm732, %v3924, %v4087
    %v4195 = vsel %vm732, %v3929, %v4089
    %v4196 = vsel %vm732, %v3934, %v4091
    %v4197 = vsel %vm732, %v3939, %v4093
    %v4198 = vsel %vm1939, %v4194, %v4103
    %v4199 = vsel %vm1939, %v4195, %v4105
    %v4200 = vsel %vm1939, %v4196, %v4107
    %v4201 = vsel %vm1939, %v4197, %v4109
    %v4202 = vsel %vm1944, %v4198, %v4119
    %v4203 = vsel %vm1944, %v4199, %v4121
    %v4204 = vsel %vm1944, %v4200, %v4123
    %v4205 = vsel %vm1944, %v4201, %v4125
    %v4206 = vsel %vm1949, %v4202, %v4135
    %v4207 = vsel %vm1949, %v4203, %v4137
    %v4208 = vsel %vm1949, %v4204, %v4139
    %v4209 = vsel %vm1949, %v4205, %v4141
    %v4210 = vsel %vm1954, %v4206, %v4151
    %v4211 = vsel %vm1954, %v4207, %v4153
    %v4212 = vsel %vm1954, %v4208, %v4155
    %v4213 = vsel %vm1954, %v4209, %v4157
    %v4214 = vsel %vm1959, %v4210, %v4167
    %v4215 = vsel %vm1959, %v4211, %v4169
    %v4216 = vsel %vm1959, %v4212, %v4171
    %v4217 = vsel %vm1959, %v4213, %v4173
    %v4218 = vsel %vm1964, %v4214, %v4183
    %v4219 = vsel %vm1964, %v4215, %v4185
    %v4220 = vsel %vm1964, %v4216, %v4187
    %v4221 = vsel %vm1964, %v4217, %v4189
    %s4222 = scalar_lea.vmem [#allocation8], 64
    %v4223 = vld [vmem:[%s4222] sm:$0xff]
    %v4224 = vld [vmem:[%s4222 + $0x8] sm:$0xff]
    %v4225 = vld [vmem:[%s4222 + $0x10] sm:$0xff]
    %v4226 = vld [vmem:[%s4222 + $0x18] sm:$0xff]
    %v4227 = vld [vmem:[%s4222 + $0x20] sm:$0xff]
    %v4228 = vld [vmem:[%s4222 + $0x28] sm:$0xff]
    %v4229 = vld [vmem:[%s4222 + $0x30] sm:$0xff]
    %v4230 = vld [vmem:[%s4222 + $0x38] sm:$0xff]
    %s4231 = scalar_lea.vmem %s10, 1
    %v4232 = vld [vmem:[%s4231] sm:$0x1]
    %v4234 = vlaneseq
    %v4235 = vshrl.u32 %v4234, 7
    %v4236 = vsub.s32 0, %v4235
    %v4237 = vrot.slane %v4232, %v4236
    %v4240 = vsel %vm222, %v4218, 0
    %v4243 = vsel %vm222, %v4219, 0
    %v4246 = vsel %vm222, %v4220, 0
    %v4249 = vsel %vm222, %v4221, 0
    %4251 = vmatprep.subr.mxu0 0.0
    %4252 = vmatpush1.msra.mxu0 %v4223
    %4253 = vmatprep.subr.mxu0 0.0
    %4254 = vmatpush1.msra.mxu0 %v4224
    %4255 = vmatprep.subr.mxu0 0.0
    %4256 = vmatpush1.msra.mxu0 %v4225
    %4257 = vmatprep.subr.mxu0 0.0
    %4258 = vmatpush1.msra.mxu0 %v4226
    %4259 = vmatprep.subr.mxu0 0.0
    %4260 = vmatpush1.msra.mxu0 %v4227
    %4261 = vmatprep.subr.mxu0 0.0
    %4262 = vmatpush1.msra.mxu0 %v4228
    %4263 = vmatprep.subr.mxu0 0.0
    %4264 = vmatpush1.msra.mxu0 %v4229
    %4265 = vmatprep.subr.mxu0 0.0
    %4266 = vmatpush1.msra.mxu0 %v4230
    %4267 = vmatprep.subr.mxu0 0.0
    %4268 = vmatpush1.msra.mxu0 0.0
    %4269 = vmatprep.subr.mxu0 0.0
    %4270 = vmatpush1.msra.mxu0 0.0
    %4271 = vmatprep.subr.mxu0 0.0
    %4272 = vmatpush1.msra.mxu0 0.0
    %4273 = vmatprep.subr.mxu0 0.0
    %4274 = vmatpush1.msra.mxu0 0.0
    %4275 = vmatprep.subr.mxu0 0.0
    %4276 = vmatpush1.msra.mxu0 0.0
    %4277 = vmatprep.subr.mxu0 0.0
    %4278 = vmatpush1.msra.mxu0 0.0
    %4279 = vmatprep.subr.mxu0 0.0
    %4280 = vmatpush1.msra.mxu0 0.0
    %4281 = vmatprep.subr.mxu0 0.0
    %4282 = vmatpush1.msra.mxu0 0.0
    %4283 = vmatprep.subr.mxu0 0.0
    %4284 = vmatpush1.msra.mxu0 0.0
    %4285 = vmatprep.subr.mxu0 0.0
    %4286 = vmatpush1.msra.mxu0 0.0
    %4287 = vmatprep.subr.mxu0 0.0
    %4288 = vmatpush1.msra.mxu0 0.0
    %4289 = vmatprep.subr.mxu0 0.0
    %4290 = vmatpush1.msra.mxu0 0.0
    %4291 = vmatprep.subr.mxu0 0.0
    %4292 = vmatpush1.msra.mxu0 0.0
    %4293 = vmatprep.subr.mxu0 0.0
    %4294 = vmatpush1.msra.mxu0 0.0
    %4295 = vmatprep.subr.mxu0 0.0
    %4296 = vmatpush1.msra.mxu0 0.0
    %4297 = vmatprep.subr.mxu0 0.0
    %4298 = vmatpush1.msra.mxu0 0.0
    %4299 = vmatprep.subr.mxu0 0.0
    %4300 = vmatpush1.msra.mxu0 0.0
    %4301 = vmatprep.subr.mxu0 0.0
    %4302 = vmatpush1.msra.mxu0 0.0
    %4303 = vmatprep.subr.mxu0 0.0
    %4304 = vmatpush1.msra.mxu0 0.0
    %4305 = vmatprep.subr.mxu0 0.0
    %4306 = vmatpush1.msra.mxu0 0.0
    %4307 = vmatprep.subr.mxu0 0.0
    %4308 = vmatpush1.msra.mxu0 0.0
    %4309 = vmatprep.subr.mxu0 0.0
    %4310 = vmatpush1.msra.mxu0 0.0
    %4311 = vmatprep.subr.mxu0 0.0
    %4312 = vmatpush1.msra.mxu0 0.0
    %4313 = vmatprep.subr.mxu0 0.0
    %4314 = vmatpush1.msra.mxu0 0.0
    %4315 = vmatprep.mubr.f32.mxu0 0.0
    %4316 = vmatmul.mubr.f32.gmra.mrb[0].mxu0 %v4240
    %v4317 = vpop.f32.mrb[0].mxu0
    %v4318 = vadd.f32 %v4237, %v4317
    %v4319 = vpop.f32.mrb[0].mxu0
    %4320 = vmatprep.mubr.f32.mxu0 0.0
    %4321 = vmatmul.mubr.f32.gmra.mrb[0].mxu0 %v4243
    %v4322 = vpop.f32.mrb[0].mxu0
    %v4323 = vadd.f32 %v4237, %v4322
    %v4324 = vpop.f32.mrb[0].mxu0
    %4325 = vmatprep.mubr.f32.mxu0 0.0
    %4326 = vmatmul.mubr.f32.gmra.mrb[0].mxu0 %v4246
    %v4327 = vpop.f32.mrb[0].mxu0
    %v4328 = vadd.f32 %v4237, %v4327
    %v4329 = vpop.f32.mrb[0].mxu0
    %4330 = vmatprep.mubr.f32.mxu0 0.0
    %4331 = vmatmul.mubr.f32.gmra.mrb[0].mxu0 %v4249
    %v4332 = vpop.f32.mrb[0].mxu0
    %v4333 = vadd.f32 %v4237, %v4332
    %v4334 = vpop.f32.mrb[0].mxu0
    %4335 = vdwg.mxu0
    %v4336 = vadd.f32 %v2458, %v4318
    %v4337 = vadd.f32 %v2459, %v4323
    %v4338 = vadd.f32 %v2460, %v4328
    %v4339 = vadd.f32 %v2461, %v4333
    %s4340 = scalar_lea.vmem %s15, 1
    %v4341 = vld [vmem:[%s4340] sm:$0x1]
    %s4342 = scalar_lea.vmem %s16, 1
    %v4343 = vld [vmem:[%s4342] sm:$0x1]
    %v4344 = vsel %vm222, %v4336, 0.0
    %4345 = vadd.xlane.f32.xlu0 %v4344
    %v4346 = vpop.xlane.xlu0 %4345
    %v4347 = vsel %vm222, %v4337, 0.0
    %4348 = vadd.xlane.f32.xlu0 %v4347
    %v4349 = vpop.xlane.xlu0 %4348
    %v4350 = vsel %vm222, %v4338, 0.0
    %4351 = vadd.xlane.f32.xlu0 %v4350
    %v4352 = vpop.xlane.xlu0 %4351
    %v4353 = vsel %vm222, %v4339, 0.0
    %4354 = vadd.xlane.f32.xlu0 %v4353
    %v4355 = vpop.xlane.xlu0 %4354
    %v4356 = vmul.f32 %v4346, %v2099
    %v4357 = vmul.f32 %v4349, %v2099
    %v4358 = vmul.f32 %v4352, %v2099
    %v4359 = vmul.f32 %v4355, %v2099
    %v4360 = vsub.f32 %v4336, %v4356
    %v4361 = vsub.f32 %v4337, %v4357
    %v4362 = vsub.f32 %v4338, %v4358
    %v4363 = vsub.f32 %v4339, %v4359
    %v4364 = vmul.f32 %v4360, %v4360
    %v4365 = vmul.f32 %v4361, %v4361
    %v4366 = vmul.f32 %v4362, %v4362
    %v4367 = vmul.f32 %v4363, %v4363
    %v4368 = vsel %vm222, %v4364, 0.0
    %4369 = vadd.xlane.f32.xlu0 %v4368
    %v4370 = vpop.xlane.xlu0 %4369
    %v4371 = vsel %vm222, %v4365, 0.0
    %4372 = vadd.xlane.f32.xlu0 %v4371
    %v4373 = vpop.xlane.xlu0 %4372
    %v4374 = vsel %vm222, %v4366, 0.0
    %4375 = vadd.xlane.f32.xlu0 %v4374
    %v4376 = vpop.xlane.xlu0 %4375
    %v4377 = vsel %vm222, %v4367, 0.0
    %4378 = vadd.xlane.f32.xlu0 %v4377
    %v4379 = vpop.xlane.xlu0 %4378
    %v4380 = vmul.f32 %v4370, %v2099
    %v4381 = vmul.f32 %v4373, %v2099
    %v4382 = vmul.f32 %v4376, %v2099
    %v4383 = vmul.f32 %v4379, %v2099
    %v4384 = vadd.f32 %v4380, 1e-05
    %v4385 = vadd.f32 %v4381, 1e-05
    %v4386 = vadd.f32 %v4382, 1e-05
    %v4387 = vadd.f32 %v4383, 1e-05
    %v4388 = vrsqrt.pop %v4384
    %v4389 = vrsqrt.pop %v4385
    %v4390 = vrsqrt.pop %v4386
    %v4391 = vrsqrt.pop %v4387
    %v4392 = vmul.f32 %v4360, %v4388
    %v4393 = vmul.f32 %v4361, %v4389
    %v4394 = vmul.f32 %v4362, %v4390
    %v4395 = vmul.f32 %v4363, %v4391
    %v4397 = vlaneseq
    %v4398 = vshrl.u32 %v4397, 7
    %v4399 = vsub.s32 0, %v4398
    %v4400 = vrot.slane %v4341, %v4399
    %v4402 = vmul.f32 %v4392, %v4400
    %v4403 = vmul.f32 %v4393, %v4400
    %v4404 = vmul.f32 %v4394, %v4400
    %v4405 = vmul.f32 %v4395, %v4400
    %v4407 = vlaneseq
    %v4408 = vshrl.u32 %v4407, 7
    %v4409 = vsub.s32 0, %v4408
    %v4410 = vrot.slane %v4343, %v4409
    %v4412 = vadd.f32 %v4402, %v4410
    %v4413 = vadd.f32 %v4403, %v4410
    %v4414 = vadd.f32 %v4404, %v4410
    %v4415 = vadd.f32 %v4405, %v4410
    %s4416 = scalar_lea.vmem [#allocation10], 64
    %v4417 = vld [vmem:[%s4416] sm:$0xff]
    %v4418 = vld [vmem:[%s4416 + $0x8] sm:$0xff]
    %v4419 = vld [vmem:[%s4416 + $0x10] sm:$0xff]
    %v4420 = vld [vmem:[%s4416 + $0x18] sm:$0xff]
    %v4421 = vld [vmem:[%s4416 + $0x20] sm:$0xff]
    %v4422 = vld [vmem:[%s4416 + $0x28] sm:$0xff]
    %v4423 = vld [vmem:[%s4416 + $0x30] sm:$0xff]
    %v4424 = vld [vmem:[%s4416 + $0x38] sm:$0xff]
    %s4425 = scalar_lea.vmem %s12, 1
    %v4426 = vld [vmem:[%s4425] sm:$0x1]
    %v4428 = vlaneseq
    %v4429 = vshrl.u32 %v4428, 7
    %v4430 = vsub.s32 0, %v4429
    %v4431 = vrot.slane %v4426, %v4430
    %v4434 = vsel %vm222, %v4412, 0
    %v4437 = vsel %vm222, %v4413, 0
    %v4440 = vsel %vm222, %v4414, 0
    %v4443 = vsel %vm222, %v4415, 0
    %4445 = vmatprep.subr.mxu0 0.0
    %4446 = vmatpush1.msra.mxu0 %v4417
    %4447 = vmatprep.subr.mxu0 0.0
    %4448 = vmatpush1.msra.mxu0 %v4418
    %4449 = vmatprep.subr.mxu0 0.0
    %4450 = vmatpush1.msra.mxu0 %v4419
    %4451 = vmatprep.subr.mxu0 0.0
    %4452 = vmatpush1.msra.mxu0 %v4420
    %4453 = vmatprep.subr.mxu0 0.0
    %4454 = vmatpush1.msra.mxu0 %v4421
    %4455 = vmatprep.subr.mxu0 0.0
    %4456 = vmatpush1.msra.mxu0 %v4422
    %4457 = vmatprep.subr.mxu0 0.0
    %4458 = vmatpush1.msra.mxu0 %v4423
    %4459 = vmatprep.subr.mxu0 0.0
    %4460 = vmatpush1.msra.mxu0 %v4424
    %4461 = vmatprep.subr.mxu0 0.0
    %4462 = vmatpush1.msra.mxu0 0.0
    %4463 = vmatprep.subr.mxu0 0.0
    %4464 = vmatpush1.msra.mxu0 0.0
    %4465 = vmatprep.subr.mxu0 0.0
    %4466 = vmatpush1.msra.mxu0 0.0
    %4467 = vmatprep.subr.mxu0 0.0
    %4468 = vmatpush1.msra.mxu0 0.0
    %4469 = vmatprep.subr.mxu0 0.0
    %4470 = vmatpush1.msra.mxu0 0.0
    %4471 = vmatprep.subr.mxu0 0.0
    %4472 = vmatpush1.msra.mxu0 0.0
    %4473 = vmatprep.subr.mxu0 0.0
    %4474 = vmatpush1.msra.mxu0 0.0
    %4475 = vmatprep.subr.mxu0 0.0
    %4476 = vmatpush1.msra.mxu0 0.0
    %4477 = vmatprep.subr.mxu0 0.0
    %4478 = vmatpush1.msra.mxu0 0.0
    %4479 = vmatprep.subr.mxu0 0.0
    %4480 = vmatpush1.msra.mxu0 0.0
    %4481 = vmatprep.subr.mxu0 0.0
    %4482 = vmatpush1.msra.mxu0 0.0
    %4483 = vmatprep.subr.mxu0 0.0
    %4484 = vmatpush1.msra.mxu0 0.0
    %4485 = vmatprep.subr.mxu0 0.0
    %4486 = vmatpush1.msra.mxu0 0.0
    %4487 = vmatprep.subr.mxu0 0.0
    %4488 = vmatpush1.msra.mxu0 0.0
    %4489 = vmatprep.subr.mxu0 0.0
    %4490 = vmatpush1.msra.mxu0 0.0
    %4491 = vmatprep.subr.mxu0 0.0
    %4492 = vmatpush1.msra.mxu0 0.0
    %4493 = vmatprep.subr.mxu0 0.0
    %4494 = vmatpush1.msra.mxu0 0.0
    %4495 = vmatprep.subr.mxu0 0.0
    %4496 = vmatpush1.msra.mxu0 0.0
    %4497 = vmatprep.subr.mxu0 0.0
    %4498 = vmatpush1.msra.mxu0 0.0
    %4499 = vmatprep.subr.mxu0 0.0
    %4500 = vmatpush1.msra.mxu0 0.0
    %4501 = vmatprep.subr.mxu0 0.0
    %4502 = vmatpush1.msra.mxu0 0.0
    %4503 = vmatprep.subr.mxu0 0.0
    %4504 = vmatpush1.msra.mxu0 0.0
    %4505 = vmatprep.subr.mxu0 0.0
    %4506 = vmatpush1.msra.mxu0 0.0
    %4507 = vmatprep.subr.mxu0 0.0
    %4508 = vmatpush1.msra.mxu0 0.0
    %4509 = vmatprep.mubr.f32.mxu0 0.0
    %4510 = vmatmul.mubr.f32.gmra.mrb[0].mxu0 %v4434
    %v4511 = vpop.f32.mrb[0].mxu0
    %v4512 = vadd.f32 %v4431, %v4511
    %v4513 = vpop.f32.mrb[0].mxu0
    %4514 = vmatprep.mubr.f32.mxu0 0.0
    %4515 = vmatmul.mubr.f32.gmra.mrb[0].mxu0 %v4437
    %v4516 = vpop.f32.mrb[0].mxu0
    %v4517 = vadd.f32 %v4431, %v4516
    %v4518 = vpop.f32.mrb[0].mxu0
    %4519 = vmatprep.mubr.f32.mxu0 0.0
    %4520 = vmatmul.mubr.f32.gmra.mrb[0].mxu0 %v4440
    %v4521 = vpop.f32.mrb[0].mxu0
    %v4522 = vadd.f32 %v4431, %v4521
    %v4523 = vpop.f32.mrb[0].mxu0
    %4524 = vmatprep.mubr.f32.mxu0 0.0
    %4525 = vmatmul.mubr.f32.gmra.mrb[0].mxu0 %v4443
    %v4526 = vpop.f32.mrb[0].mxu0
    %v4527 = vadd.f32 %v4431, %v4526
    %v4528 = vpop.f32.mrb[0].mxu0
    %4529 = vdwg.mxu0
    %v4530 = vmax.f32 %v4512, 0.0
    %v4531 = vmax.f32 %v4517, 0.0
    %v4532 = vmax.f32 %v4522, 0.0
    %v4533 = vmax.f32 %v4527, 0.0
    %s4534 = scalar_lea.vmem %s13, 128
    %v4535 = vld [vmem:[%s4534] sm:$0xff]
    %v4536 = vld [vmem:[%s4534 + $0x8] sm:$0xff]
    %v4537 = vld [vmem:[%s4534 + $0x10] sm:$0xff]
    %v4538 = vld [vmem:[%s4534 + $0x18] sm:$0xff]
    %v4539 = vld [vmem:[%s4534 + $0x20] sm:$0xff]
    %v4540 = vld [vmem:[%s4534 + $0x28] sm:$0xff]
    %v4541 = vld [vmem:[%s4534 + $0x30] sm:$0xff]
    %v4542 = vld [vmem:[%s4534 + $0x38] sm:$0xff]
    %v4543 = vld [vmem:[%s4534 + $0x40] sm:$0xff]
    %v4544 = vld [vmem:[%s4534 + $0x48] sm:$0xff]
    %v4545 = vld [vmem:[%s4534 + $0x50] sm:$0xff]
    %v4546 = vld [vmem:[%s4534 + $0x58] sm:$0xff]
    %v4547 = vld [vmem:[%s4534 + $0x60] sm:$0xff]
    %v4548 = vld [vmem:[%s4534 + $0x68] sm:$0xff]
    %v4549 = vld [vmem:[%s4534 + $0x70] sm:$0xff]
    %v4550 = vld [vmem:[%s4534 + $0x78] sm:$0xff]
    %s4551 = scalar_lea.vmem %s14, 1
    %v4552 = vld [vmem:[%s4551] sm:$0x1]
    %v4554 = vlaneseq
    %v4555 = vshrl.u32 %v4554, 7
    %v4556 = vsub.s32 0, %v4555
    %v4557 = vrot.slane %v4552, %v4556
    %4559 = vmatprep.subr.mxu0 0.0
    %4560 = vmatpush1.msra.mxu0 %v4535
    %4561 = vmatprep.subr.mxu0 0.0
    %4562 = vmatpush1.msra.mxu0 %v4536
    %4563 = vmatprep.subr.mxu0 0.0
    %4564 = vmatpush1.msra.mxu0 %v4537
    %4565 = vmatprep.subr.mxu0 0.0
    %4566 = vmatpush1.msra.mxu0 %v4538
    %4567 = vmatprep.subr.mxu0 0.0
    %4568 = vmatpush1.msra.mxu0 %v4539
    %4569 = vmatprep.subr.mxu0 0.0
    %4570 = vmatpush1.msra.mxu0 %v4540
    %4571 = vmatprep.subr.mxu0 0.0
    %4572 = vmatpush1.msra.mxu0 %v4541
    %4573 = vmatprep.subr.mxu0 0.0
    %4574 = vmatpush1.msra.mxu0 %v4542
    %4575 = vmatprep.subr.mxu0 0.0
    %4576 = vmatpush1.msra.mxu0 %v4543
    %4577 = vmatprep.subr.mxu0 0.0
    %4578 = vmatpush1.msra.mxu0 %v4544
    %4579 = vmatprep.subr.mxu0 0.0
    %4580 = vmatpush1.msra.mxu0 %v4545
    %4581 = vmatprep.subr.mxu0 0.0
    %4582 = vmatpush1.msra.mxu0 %v4546
    %4583 = vmatprep.subr.mxu0 0.0
    %4584 = vmatpush1.msra.mxu0 %v4547
    %4585 = vmatprep.subr.mxu0 0.0
    %4586 = vmatpush1.msra.mxu0 %v4548
    %4587 = vmatprep.subr.mxu0 0.0
    %4588 = vmatpush1.msra.mxu0 %v4549
    %4589 = vmatprep.subr.mxu0 0.0
    %4590 = vmatpush1.msra.mxu0 %v4550
    %4591 = vmatprep.subr.mxu0 0.0
    %4592 = vmatpush1.msra.mxu0 0.0
    %4593 = vmatprep.subr.mxu0 0.0
    %4594 = vmatpush1.msra.mxu0 0.0
    %4595 = vmatprep.subr.mxu0 0.0
    %4596 = vmatpush1.msra.mxu0 0.0
    %4597 = vmatprep.subr.mxu0 0.0
    %4598 = vmatpush1.msra.mxu0 0.0
    %4599 = vmatprep.subr.mxu0 0.0
    %4600 = vmatpush1.msra.mxu0 0.0
    %4601 = vmatprep.subr.mxu0 0.0
    %4602 = vmatpush1.msra.mxu0 0.0
    %4603 = vmatprep.subr.mxu0 0.0
    %4604 = vmatpush1.msra.mxu0 0.0
    %4605 = vmatprep.subr.mxu0 0.0
    %4606 = vmatpush1.msra.mxu0 0.0
    %4607 = vmatprep.subr.mxu0 0.0
    %4608 = vmatpush1.msra.mxu0 0.0
    %4609 = vmatprep.subr.mxu0 0.0
    %4610 = vmatpush1.msra.mxu0 0.0
    %4611 = vmatprep.subr.mxu0 0.0
    %4612 = vmatpush1.msra.mxu0 0.0
    %4613 = vmatprep.subr.mxu0 0.0
    %4614 = vmatpush1.msra.mxu0 0.0
    %4615 = vmatprep.subr.mxu0 0.0
    %4616 = vmatpush1.msra.mxu0 0.0
    %4617 = vmatprep.subr.mxu0 0.0
    %4618 = vmatpush1.msra.mxu0 0.0
    %4619 = vmatprep.subr.mxu0 0.0
    %4620 = vmatpush1.msra.mxu0 0.0
    %4621 = vmatprep.subr.mxu0 0.0
    %4622 = vmatpush1.msra.mxu0 0.0
    %4623 = vmatprep.mubr.f32.mxu0 0.0
    %4624 = vmatmul.mubr.f32.gmra.mrb[0].mxu0 %v4530
    %v4625 = vpop.f32.mrb[0].mxu0
    %v4626 = vadd.f32 %v4557, %v4625
    %v4627 = vpop.f32.mrb[0].mxu0
    %4628 = vmatprep.mubr.f32.mxu0 0.0
    %4629 = vmatmul.mubr.f32.gmra.mrb[0].mxu0 %v4531
    %v4630 = vpop.f32.mrb[0].mxu0
    %v4631 = vadd.f32 %v4557, %v4630
    %v4632 = vpop.f32.mrb[0].mxu0
    %4633 = vmatprep.mubr.f32.mxu0 0.0
    %4634 = vmatmul.mubr.f32.gmra.mrb[0].mxu0 %v4532
    %v4635 = vpop.f32.mrb[0].mxu0
    %v4636 = vadd.f32 %v4557, %v4635
    %v4637 = vpop.f32.mrb[0].mxu0
    %4638 = vmatprep.mubr.f32.mxu0 0.0
    %4639 = vmatmul.mubr.f32.gmra.mrb[0].mxu0 %v4533
    %v4640 = vpop.f32.mrb[0].mxu0
    %v4641 = vadd.f32 %v4557, %v4640
    %v4642 = vpop.f32.mrb[0].mxu0
    %4643 = vdwg.mxu0
    %v4644 = vadd.f32 %v4412, %v4626
    %v4645 = vadd.f32 %v4413, %v4631
    %v4646 = vadd.f32 %v4414, %v4636
    %v4647 = vadd.f32 %v4415, %v4641
    %s4648 = scalar_lea.vmem %s17, 1
    %v4649 = vld [vmem:[%s4648] sm:$0x1]
    %s4650 = scalar_lea.vmem %s18, 1
    %v4651 = vld [vmem:[%s4650] sm:$0x1]
    %v4652 = vsel %vm222, %v4644, 0.0
    %4653 = vadd.xlane.f32.xlu0 %v4652
    %v4654 = vpop.xlane.xlu0 %4653
    %v4655 = vsel %vm222, %v4645, 0.0
    %4656 = vadd.xlane.f32.xlu0 %v4655
    %v4657 = vpop.xlane.xlu0 %4656
    %v4658 = vsel %vm222, %v4646, 0.0
    %4659 = vadd.xlane.f32.xlu0 %v4658
    %v4660 = vpop.xlane.xlu0 %4659
    %v4661 = vsel %vm222, %v4647, 0.0
    %4662 = vadd.xlane.f32.xlu0 %v4661
    %v4663 = vpop.xlane.xlu0 %4662
    %v4664 = vmul.f32 %v4654, %v2099
    %v4665 = vmul.f32 %v4657, %v2099
    %v4666 = vmul.f32 %v4660, %v2099
    %v4667 = vmul.f32 %v4663, %v2099
    %v4668 = vsub.f32 %v4644, %v4664
    %v4669 = vsub.f32 %v4645, %v4665
    %v4670 = vsub.f32 %v4646, %v4666
    %v4671 = vsub.f32 %v4647, %v4667
    %v4672 = vmul.f32 %v4668, %v4668
    %v4673 = vmul.f32 %v4669, %v4669
    %v4674 = vmul.f32 %v4670, %v4670
    %v4675 = vmul.f32 %v4671, %v4671
    %v4676 = vsel %vm222, %v4672, 0.0
    %4677 = vadd.xlane.f32.xlu0 %v4676
    %v4678 = vpop.xlane.xlu0 %4677
    %v4679 = vsel %vm222, %v4673, 0.0
    %4680 = vadd.xlane.f32.xlu0 %v4679
    %v4681 = vpop.xlane.xlu0 %4680
    %v4682 = vsel %vm222, %v4674, 0.0
    %4683 = vadd.xlane.f32.xlu0 %v4682
    %v4684 = vpop.xlane.xlu0 %4683
    %v4685 = vsel %vm222, %v4675, 0.0
    %4686 = vadd.xlane.f32.xlu0 %v4685
    %v4687 = vpop.xlane.xlu0 %4686
    %v4688 = vmul.f32 %v4678, %v2099
    %v4689 = vmul.f32 %v4681, %v2099
    %v4690 = vmul.f32 %v4684, %v2099
    %v4691 = vmul.f32 %v4687, %v2099
    %v4692 = vadd.f32 %v4688, 1e-05
    %v4693 = vadd.f32 %v4689, 1e-05
    %v4694 = vadd.f32 %v4690, 1e-05
    %v4695 = vadd.f32 %v4691, 1e-05
    %v4696 = vrsqrt.pop %v4692
    %v4697 = vrsqrt.pop %v4693
    %v4698 = vrsqrt.pop %v4694
    %v4699 = vrsqrt.pop %v4695
    %v4700 = vmul.f32 %v4668, %v4696
    %v4701 = vmul.f32 %v4669, %v4697
    %v4702 = vmul.f32 %v4670, %v4698
    %v4703 = vmul.f32 %v4671, %v4699
    %v4705 = vlaneseq
    %v4706 = vshrl.u32 %v4705, 7
    %v4707 = vsub.s32 0, %v4706
    %v4708 = vrot.slane %v4649, %v4707
    %v4710 = vmul.f32 %v4700, %v4708
    %v4711 = vmul.f32 %v4701, %v4708
    %v4712 = vmul.f32 %v4702, %v4708
    %v4713 = vmul.f32 %v4703, %v4708
    %v4715 = vlaneseq
    %v4716 = vshrl.u32 %v4715, 7
    %v4717 = vsub.s32 0, %v4716
    %v4718 = vrot.slane %v4651, %v4717
    %v4720 = vadd.f32 %v4710, %v4718
    %v4721 = vadd.f32 %v4711, %v4718
    %v4722 = vadd.f32 %v4712, %v4718
    %v4723 = vadd.f32 %v4713, %v4718
    %4726 = vrot.lane.b32.xlu0 %v4722, 64
    %v4727 = vpop.permute.xlu0 %4726
    %4728 = vrot.lane.b32.xlu0 %v4723, 64
    %v4729 = vpop.permute.xlu0 %4728
    %v4732 = vsel %vm222, %v4720, %v4727
    %v4733 = vsel %vm222, %v4721, %v4729
    %4734 = vst [vmem:[#allocation11] sm:$0xff] %v4732
    %4735 = vst [vmem:[#allocation11 + $0x8] sm:$0xff] %v4733
    // Predicated region
    $region98: #{tpu_custom_call.1} parent=1 // pred_check
      _
    $region99: #{tpu_custom_call.1} parent=1 // pred_check_branch
      %4737 = sbr.rel (0) target = $region101
    $region100: #{tpu_custom_call.1} parent=1 // pred_region
      %s4739 = ssub.s32 256, 256
      %4740 = vsyncadd [#allocation4], %s4739
      %s4741 = sshll.u32 [#allocation11], 4
      %s4742 = int_to_ptr.vmem [resolvable:$true] %s4741
      %4747 = dma.vmem_to_hbm [thread:$0]  %s4742, 256, %s19, [#allocation4], 128, 128, 8
    $region101: #{tpu_custom_call.1} parent=1 // pred_fallthru
      _
    // Predicated region
    $region102: #{tpu_custom_call.1} parent=1 // pred_check
      _
    $region103: #{tpu_custom_call.1} parent=1 // pred_check_branch
      %4749 = sbr.rel (0) target = $region105
    $region104: #{tpu_custom_call.1} parent=1 // pred_region
      %4750 = dma.done [#allocation4], 256
    $region105: #{tpu_custom_call.1} parent=1 // pred_fallthru
      _
    %4751 = vsyncpa [#allocation3], 1
    %4752 = vsyncpa [#allocation6], 1
    %4753 = vsyncpa [#allocation9], 1
    %4754 = vsyncpa [#allocation4], 1

</llo_original>
